<compile_context>
chip_gen: v7x
topology: tpu7x:2x2x1
jax: 0.10.0
libtpu: 0.0.40
codegen_flags: <defaults>
</compile_context>

<pallas_src>
import numpy as np
import jax
import jax.numpy as jnp
from jax.experimental import pallas as pl
from jax.experimental.pallas import tpu as pltpu


def _moving_avg_matrix(L, K):
    """[L, L] matrix A with (A @ series) == moving_avg(series) under replicate padding.

    Row l reproduces AvgPool2d([1, K], stride=1) applied to the series padded with
    (K-1)//2 copies of its first / last element (exactly the PyTorch moving_avg block).
    """
    pad = (K - 1) // 2
    A = np.zeros((L, L), np.float32)
    for l in range(L):
        for j in range(K):
            m = min(max(l + j - pad, 0), L - 1)
            A[l, m] += 1.0 / K
    return jnp.asarray(A)


def decoder_layer_kernel(x_ref, cross_ref, a_ref, w1_ref, w2_ref, wp_ref,
                         x_out_ref, trend_out_ref, roll_buf):
    bb, N, L, D = x_ref.shape          # bb = batch rows handled in this grid step
    S = cross_ref.shape[2]
    NN = bb * N                        # fold the batch block into the "node" batch axis

    x = x_ref[...].reshape(NN, L, D)   # [NN, L, D] f32
    cr = cross_ref[...].reshape(NN, S, D)

    # Broadcast the [L, L] averaging matrix over the batch axis once (hoisted; reused by
    # all three decomps).  No N-broadcast ever hits HBM.
    a_b = jnp.broadcast_to(a_ref[...], (NN, L, L))
    scale = 1.0 / (D ** 0.5)

    def sdpa(q, kv):
        # TODO(synk): stand-in single-head SDPA for the injected AutoCorrelation
        # self/cross attention modules (Q/K/V = inputs, no projections, no mask).
        s = jnp.einsum('nld,nmd->nlm', q * scale, kv,      # scale folded into q
                       preferred_element_type=jnp.float32)
        s = s - jnp.max(s, axis=-1, keepdims=True)
        p = jnp.exp(s)
        p = p * pl.reciprocal(jnp.sum(p, axis=-1, keepdims=True))   # exact (EUP)
        return jnp.einsum('nlm,nmd->nld', p, kv,
                          preferred_element_type=jnp.float32)

    def moving_mean(z):  # series_decomp trend = banded-matrix matmul over L (MXU)
        return jnp.einsum('nlm,nmd->nld', a_b, z,
                          preferred_element_type=jnp.float32)

    # x = x + dropout(self_attention(x, x, x));  x, trend1 = decomp1(x)
    z1 = x + sdpa(x, x)
    mean1 = moving_mean(z1)
    r1 = z1 - mean1

    # x = x + dropout(cross_attention(x, cross, cross));  x, trend2 = decomp2(x)
    z2 = r1 + sdpa(r1, cr)
    mean2 = moving_mean(z2)
    r2 = z2 - mean2

    # y = conv2(relu(conv1(x)))  — 1x1 convs over D as flattened 2-D MXU matmuls
    r2f = r2.reshape(NN * L, D)
    h = jnp.maximum(
        jnp.dot(r2f, w1_ref[...], preferred_element_type=jnp.float32), 0.0)
    y = jnp.dot(h, w2_ref[...],
                preferred_element_type=jnp.float32).reshape(NN, L, D)

    # x, trend3 = decomp3(x + y)
    z3 = r2 + y
    mean3 = moving_mean(z3)
    x_out_ref[...] = (z3 - mean3).reshape(bb, N, L, D).astype(x_out_ref.dtype)

    # residual_trend = projection(trend1 + trend2 + trend3)
    # 3-tap circular conv along L mixing D.  The +/-1 circular shifts of trend_sum are
    # wrap-around window reads from a 2L-long scratch (no extra banded matmuls, no MXU):
    #   window at offset s gives out[l] = trend[(l + s) % L].
    trend_sum = mean1 + mean2 + mean3
    roll_buf[:, :L, :] = trend_sum
    roll_buf[:, L:, :] = trend_sum
    t_prev = roll_buf[:, pl.ds(L - 1, L), :]   # tap 0: trend[(l - 1) % L]
    t_next = roll_buf[:, pl.ds(1, L), :]       # tap 2: trend[(l + 1) % L]

    proj = (jnp.dot(t_prev.reshape(NN * L, D), wp_ref[0],
                    preferred_element_type=jnp.float32)
            + jnp.dot(trend_sum.reshape(NN * L, D), wp_ref[1],
                      preferred_element_type=jnp.float32)
            + jnp.dot(t_next.reshape(NN * L, D), wp_ref[2],
                      preferred_element_type=jnp.float32))
    trend_out_ref[...] = proj.reshape(bb, N, L, D).astype(trend_out_ref.dtype)


def _pick_batch_block(B):
    """Whole batch in one step on single-TC chips (v5e/v6e); per-batch parallel grid
    elsewhere (v7x has 2 TensorCores and wants >= 2 parallel steps)."""
    try:
        kind = jax.devices()[0].device_kind.lower()
    except Exception:
        return 1
    single_tc = any(t in kind for t in
                    ("v5e", "v5 lite", "v5lite", "v6e", "v6 lite", "v6lite"))
    return B if single_tc else 1


def decoder_layer(x, cross, w1, w2, wp, *, ma_kernel=25, batch_block=None):
    """x: [B,L,N,D], cross: [B,S,N,D], w1: [D,F], w2: [F,D], wp: [3,D,D] (d_in,d_out per tap)."""
    B, L, N, D = x.shape
    S = cross.shape[1]
    F = w1.shape[1]

    # Layout plumbing on the XLA side: the kernel works per batch row in [N, L, D]
    # (keeps every in-kernel contraction a canonical batch-leading matmul, zero
    # in-kernel transposes).  At real sizes this layout would be produced upstream.
    xn = jnp.transpose(x, (0, 2, 1, 3))        # [B, N, L, D]
    cn = jnp.transpose(cross, (0, 2, 1, 3))    # [B, N, S, D]

    A = _moving_avg_matrix(L, ma_kernel)       # [L, L]  (no N-broadcast!)

    bb = batch_block if batch_block is not None else _pick_batch_block(B)
    if B % bb != 0:
        bb = 1
    grid = (B // bb,)
    NN = bb * N

    x_out, trend_out = pl.pallas_call(
        decoder_layer_kernel,
        out_shape=(jax.ShapeDtypeStruct((B, N, L, D), x.dtype),
                   jax.ShapeDtypeStruct((B, N, L, D), x.dtype)),
        grid_spec=pltpu.PrefetchScalarGridSpec(
            num_scalar_prefetch=0,
            grid=grid,
            in_specs=[
                pl.BlockSpec((bb, N, L, D), lambda i: (i, 0, 0, 0)),   # x
                pl.BlockSpec((bb, N, S, D), lambda i: (i, 0, 0, 0)),   # cross
                pl.BlockSpec((L, L), lambda i: (0, 0)),                # avg matrix (resident)
                pl.BlockSpec((D, F), lambda i: (0, 0)),                # w1 (resident)
                pl.BlockSpec((F, D), lambda i: (0, 0)),                # w2 (resident)
                pl.BlockSpec((3, D, D), lambda i: (0, 0, 0)),          # wp (resident)
            ],
            out_specs=[
                pl.BlockSpec((bb, N, L, D), lambda i: (i, 0, 0, 0)),   # x out
                pl.BlockSpec((bb, N, L, D), lambda i: (i, 0, 0, 0)),   # residual_trend
            ],
            scratch_shapes=[
                pltpu.VMEM((NN, 2 * L, D), jnp.float32),   # wrap-around window for taps
            ],
        ),
        compiler_params=pltpu.CompilerParams(
            dimension_semantics=("parallel",)),            # v7x: both TCs split the grid
    )(xn, cn, A, w1, w2, wp)

    return (jnp.transpose(x_out, (0, 2, 1, 3)),
            jnp.transpose(trend_out, (0, 2, 1, 3)))


# ---------------- pure-JAX reference (independent formulation) ----------------
def _moving_mean_ref(x, K):            # x: [B, L, N, D], average along L
    pad = (K - 1) // 2
    front = jnp.repeat(x[:, :1], pad, axis=1)
    end = jnp.repeat(x[:, -1:], pad, axis=1)
    xp = jnp.concatenate([front, x, end], axis=1)
    return sum(xp[:, k:k + x.shape[1]] for k in range(K)) / K


def decoder_layer_ref(x, cross, w1, w2, wp, *, ma_kernel=25):
    D = x.shape[-1]
    scale = 1.0 / (D ** 0.5)

    def sdpa(q, kv):                   # q: [B,Lq,N,D], kv: [B,Lk,N,D]
        s = jnp.einsum('blnd,bmnd->bnlm', q, kv) * scale
        p = jax.nn.softmax(s, axis=-1)
        return jnp.einsum('bnlm,bmnd->blnd', p, kv)

    z1 = x + sdpa(x, x)
    t1 = _moving_mean_ref(z1, ma_kernel); r1 = z1 - t1
    z2 = r1 + sdpa(r1, cross)
    t2 = _moving_mean_ref(z2, ma_kernel); r2 = z2 - t2
    h = jnp.maximum(jnp.einsum('blnd,df->blnf', r2, w1), 0.0)
    y = jnp.einsum('blnf,fd->blnd', h, w2)
    z3 = r2 + y
    t3 = _moving_mean_ref(z3, ma_kernel); r3 = z3 - t3
    trend = t1 + t2 + t3
    proj = sum(jnp.einsum('blnd,de->blne', jnp.roll(trend, 1 - k, axis=1), wp[k])
               for k in range(3))
    return r3, proj


if __name__ == "__main__":
    B, L, S, N, D = 2, 16, 16, 4, 16   # batch, dec len, enc len, nodes, d_model
    F = 4 * D                          # d_ff (module default 4 * d_model)
    MA = 25                            # moving_avg kernel size (module default)

    key = jax.random.PRNGKey(0)
    kx, kc, k1, k2, kp = jax.random.split(key, 5)
    x = jax.random.normal(kx, (B, L, N, D), dtype=jnp.float32)
    cross = jax.random.normal(kc, (B, S, N, D), dtype=jnp.float32)
    w1 = jax.random.normal(k1, (D, F), dtype=jnp.float32) / jnp.sqrt(jnp.float32(D))
    w2 = jax.random.normal(k2, (F, D), dtype=jnp.float32) / jnp.sqrt(jnp.float32(F))
    wp = jax.random.normal(kp, (3, D, D), dtype=jnp.float32) / jnp.sqrt(jnp.float32(3 * D))

    x_out, trend_out = decoder_layer(x, cross, w1, w2, wp, ma_kernel=MA)
    x_out = jax.block_until_ready(x_out)
    trend_out = jax.block_until_ready(trend_out)

    x_ref, trend_ref = decoder_layer_ref(x, cross, w1, w2, wp, ma_kernel=MA)
    x_ref = jax.block_until_ready(x_ref)
    trend_ref = jax.block_until_ready(trend_ref)

    assert x_out.shape == (B, L, N, D) and trend_out.shape == (B, L, N, D)
    err_x = jnp.max(jnp.abs(x_out - x_ref))
    err_t = jnp.max(jnp.abs(trend_out - trend_ref))
    assert jnp.allclose(x_out, x_ref, rtol=2e-3, atol=2e-3), f"x max err {err_x}"
    assert jnp.allclose(trend_out, trend_ref, rtol=2e-3, atol=2e-3), f"trend max err {err_t}"
    print("KERNEL_OK")
</pallas_src>

<mosaic_0001>
module attributes {stable_mosaic.version = 11 : i64} {
  func.func @decoder_layer_kernel(%arg0: i32, %arg1: memref<1x4x16x16xf32, #tpu.memory_space<vmem>>, %arg2: memref<1x4x16x16xf32, #tpu.memory_space<vmem>>, %arg3: memref<16x16xf32, #tpu.memory_space<vmem>>, %arg4: memref<16x64xf32, #tpu.memory_space<vmem>>, %arg5: memref<64x16xf32, #tpu.memory_space<vmem>>, %arg6: memref<3x16x16xf32, #tpu.memory_space<vmem>>, %arg7: memref<1x4x16x16xf32, #tpu.memory_space<vmem>>, %arg8: memref<1x4x16x16xf32, #tpu.memory_space<vmem>>, %arg9: memref<4x32x16xf32, #tpu.memory_space<vmem>>) attributes {dimension_semantics = [#tpu.dimension_semantics<parallel>], iteration_bounds = array<i64: 2>, scalar_prefetch = 0 : i64, scratch_operands = 1 : i64, tpu.core_type = #tpu.core_type<tc>, window_params = [{transform_indices = @transform_0, window_bounds = array<i64: 1, 4, 16, 16>}, {transform_indices = @transform_1, window_bounds = array<i64: 1, 4, 16, 16>}, {pipeline_mode = #tpu.pipeline_mode<synchronous>, transform_indices = @transform_2, window_bounds = array<i64: 16, 16>}, {pipeline_mode = #tpu.pipeline_mode<synchronous>, transform_indices = @transform_3, window_bounds = array<i64: 16, 64>}, {pipeline_mode = #tpu.pipeline_mode<synchronous>, transform_indices = @transform_4, window_bounds = array<i64: 64, 16>}, {pipeline_mode = #tpu.pipeline_mode<synchronous>, transform_indices = @transform_5, window_bounds = array<i64: 3, 16, 16>}, {transform_indices = @transform_6, window_bounds = array<i64: 1, 4, 16, 16>}, {transform_indices = @transform_7, window_bounds = array<i64: 1, 4, 16, 16>}]} {
    %c0 = arith.constant 0 : index
    %c0_0 = arith.constant 0 : index
    %c0_1 = arith.constant 0 : index
    %c0_2 = arith.constant 0 : index
    %0 = vector.load %arg1[%c0, %c0_0, %c0_1, %c0_2] : memref<1x4x16x16xf32, #tpu.memory_space<vmem>>, vector<1x4x16x16xf32>
    %1 = vector.shape_cast %0 : vector<1x4x16x16xf32> to vector<4x16x16xf32>
    %c0_3 = arith.constant 0 : index
    %c0_4 = arith.constant 0 : index
    %c0_5 = arith.constant 0 : index
    %c0_6 = arith.constant 0 : index
    %2 = vector.load %arg2[%c0_3, %c0_4, %c0_5, %c0_6] : memref<1x4x16x16xf32, #tpu.memory_space<vmem>>, vector<1x4x16x16xf32>
    %3 = vector.shape_cast %2 : vector<1x4x16x16xf32> to vector<4x16x16xf32>
    %c0_7 = arith.constant 0 : index
    %c0_8 = arith.constant 0 : index
    %4 = vector.load %arg3[%c0_7, %c0_8] : memref<16x16xf32, #tpu.memory_space<vmem>>, vector<16x16xf32>
    %5 = vector.shape_cast %4 : vector<16x16xf32> to vector<1x16x16xf32>
    %6 = vector.broadcast %5 : vector<1x16x16xf32> to vector<4x16x16xf32>
    %cst = arith.constant 2.500000e-01 : f32
    %7 = vector.broadcast %cst : f32 to vector<4x16x16xf32>
    %8 = arith.mulf %1, %7 : vector<4x16x16xf32>
    "tpu.trace_start"() <{level = 10 : i32, message = "nld,nmd->nlm"}> : () -> ()
    %cst_9 = arith.constant dense<0.000000e+00> : vector<4x16x16xf32>
    %9 = tpu.matmul %8, %1, %cst_9 {dimension_numbers = #tpu.dot_dimension_numbers<[2], [2], [1], [1], [0, 0, 0, 1, 1, 1], [0], [0]>} : vector<4x16x16xf32>, vector<4x16x16xf32>, vector<4x16x16xf32> -> vector<4x16x16xf32>
    "tpu.trace_stop"() : () -> ()
    %cst_10 = arith.constant dense<0xFF800000> : vector<4x16xf32>
    %10 = vector.multi_reduction <maximumf>, %9, %cst_10 [2] : vector<4x16x16xf32> to vector<4x16xf32>
    %11 = vector.shape_cast %10 : vector<4x16xf32> to vector<4x16x1xf32>
    %12 = vector.broadcast %11 : vector<4x16x1xf32> to vector<4x16x16xf32>
    %13 = arith.subf %9, %12 : vector<4x16x16xf32>
    %14 = math.exp %13 : vector<4x16x16xf32>
    %cst_11 = arith.constant dense<0.000000e+00> : vector<4x16xf32>
    %15 = vector.multi_reduction <add>, %14, %cst_11 [2] : vector<4x16x16xf32> to vector<4x16xf32>
    %16 = vector.shape_cast %15 : vector<4x16xf32> to vector<4x16x1xf32>
    %17 = tpu.reciprocal %16 : vector<4x16x1xf32> -> vector<4x16x1xf32>
    %18 = vector.broadcast %17 : vector<4x16x1xf32> to vector<4x16x16xf32>
    %19 = arith.mulf %14, %18 : vector<4x16x16xf32>
    "tpu.trace_start"() <{level = 10 : i32, message = "nlm,nmd->nld"}> : () -> ()
    %cst_12 = arith.constant dense<0.000000e+00> : vector<4x16x16xf32>
    %20 = tpu.matmul %19, %1, %cst_12 {dimension_numbers = #tpu.dot_dimension_numbers<[2], [1], [1], [2], [0, 0, 0, 1, 1, 2], [0], [0]>} : vector<4x16x16xf32>, vector<4x16x16xf32>, vector<4x16x16xf32> -> vector<4x16x16xf32>
    "tpu.trace_stop"() : () -> ()
    %21 = arith.addf %1, %20 : vector<4x16x16xf32>
    "tpu.trace_start"() <{level = 10 : i32, message = "nlm,nmd->nld"}> : () -> ()
    %cst_13 = arith.constant dense<0.000000e+00> : vector<4x16x16xf32>
    %22 = tpu.matmul %6, %21, %cst_13 {dimension_numbers = #tpu.dot_dimension_numbers<[2], [1], [1], [2], [0, 0, 0, 1, 1, 2], [0], [0]>} : vector<4x16x16xf32>, vector<4x16x16xf32>, vector<4x16x16xf32> -> vector<4x16x16xf32>
    "tpu.trace_stop"() : () -> ()
    %23 = arith.subf %21, %22 : vector<4x16x16xf32>
    %cst_14 = arith.constant 2.500000e-01 : f32
    %24 = vector.broadcast %cst_14 : f32 to vector<4x16x16xf32>
    %25 = arith.mulf %23, %24 : vector<4x16x16xf32>
    "tpu.trace_start"() <{level = 10 : i32, message = "nld,nmd->nlm"}> : () -> ()
    %cst_15 = arith.constant dense<0.000000e+00> : vector<4x16x16xf32>
    %26 = tpu.matmul %25, %3, %cst_15 {dimension_numbers = #tpu.dot_dimension_numbers<[2], [2], [1], [1], [0, 0, 0, 1, 1, 1], [0], [0]>} : vector<4x16x16xf32>, vector<4x16x16xf32>, vector<4x16x16xf32> -> vector<4x16x16xf32>
    "tpu.trace_stop"() : () -> ()
    %cst_16 = arith.constant dense<0xFF800000> : vector<4x16xf32>
    %27 = vector.multi_reduction <maximumf>, %26, %cst_16 [2] : vector<4x16x16xf32> to vector<4x16xf32>
    %28 = vector.shape_cast %27 : vector<4x16xf32> to vector<4x16x1xf32>
    %29 = vector.broadcast %28 : vector<4x16x1xf32> to vector<4x16x16xf32>
    %30 = arith.subf %26, %29 : vector<4x16x16xf32>
    %31 = math.exp %30 : vector<4x16x16xf32>
    %cst_17 = arith.constant dense<0.000000e+00> : vector<4x16xf32>
    %32 = vector.multi_reduction <add>, %31, %cst_17 [2] : vector<4x16x16xf32> to vector<4x16xf32>
    %33 = vector.shape_cast %32 : vector<4x16xf32> to vector<4x16x1xf32>
    %34 = tpu.reciprocal %33 : vector<4x16x1xf32> -> vector<4x16x1xf32>
    %35 = vector.broadcast %34 : vector<4x16x1xf32> to vector<4x16x16xf32>
    %36 = arith.mulf %31, %35 : vector<4x16x16xf32>
    "tpu.trace_start"() <{level = 10 : i32, message = "nlm,nmd->nld"}> : () -> ()
    %cst_18 = arith.constant dense<0.000000e+00> : vector<4x16x16xf32>
    %37 = tpu.matmul %36, %3, %cst_18 {dimension_numbers = #tpu.dot_dimension_numbers<[2], [1], [1], [2], [0, 0, 0, 1, 1, 2], [0], [0]>} : vector<4x16x16xf32>, vector<4x16x16xf32>, vector<4x16x16xf32> -> vector<4x16x16xf32>
    "tpu.trace_stop"() : () -> ()
    %38 = arith.addf %23, %37 : vector<4x16x16xf32>
    "tpu.trace_start"() <{level = 10 : i32, message = "nlm,nmd->nld"}> : () -> ()
    %cst_19 = arith.constant dense<0.000000e+00> : vector<4x16x16xf32>
    %39 = tpu.matmul %6, %38, %cst_19 {dimension_numbers = #tpu.dot_dimension_numbers<[2], [1], [1], [2], [0, 0, 0, 1, 1, 2], [0], [0]>} : vector<4x16x16xf32>, vector<4x16x16xf32>, vector<4x16x16xf32> -> vector<4x16x16xf32>
    "tpu.trace_stop"() : () -> ()
    %40 = arith.subf %38, %39 : vector<4x16x16xf32>
    %41 = vector.shape_cast %40 : vector<4x16x16xf32> to vector<64x16xf32>
    %c0_20 = arith.constant 0 : index
    %c0_21 = arith.constant 0 : index
    %42 = vector.load %arg4[%c0_20, %c0_21] : memref<16x64xf32, #tpu.memory_space<vmem>>, vector<16x64xf32>
    %cst_22 = arith.constant dense<0.000000e+00> : vector<64x64xf32>
    %43 = tpu.matmul %41, %42, %cst_22 {dimension_numbers = #tpu.dot_dimension_numbers<[1], [0], [0], [1], [0, 0, 1, 1], [], []>} : vector<64x16xf32>, vector<16x64xf32>, vector<64x64xf32> -> vector<64x64xf32>
    %cst_23 = arith.constant 0.000000e+00 : f32
    %44 = vector.broadcast %cst_23 : f32 to vector<64x64xf32>
    %45 = arith.maximumf %43, %44 : vector<64x64xf32>
    %c0_24 = arith.constant 0 : index
    %c0_25 = arith.constant 0 : index
    %46 = vector.load %arg5[%c0_24, %c0_25] : memref<64x16xf32, #tpu.memory_space<vmem>>, vector<64x16xf32>
    %cst_26 = arith.constant dense<0.000000e+00> : vector<64x16xf32>
    %47 = tpu.matmul %45, %46, %cst_26 {dimension_numbers = #tpu.dot_dimension_numbers<[1], [0], [0], [1], [0, 0, 1, 1], [], []>} : vector<64x64xf32>, vector<64x16xf32>, vector<64x16xf32> -> vector<64x16xf32>
    %48 = vector.shape_cast %47 : vector<64x16xf32> to vector<4x16x16xf32>
    %49 = arith.addf %40, %48 : vector<4x16x16xf32>
    "tpu.trace_start"() <{level = 10 : i32, message = "nlm,nmd->nld"}> : () -> ()
    %cst_27 = arith.constant dense<0.000000e+00> : vector<4x16x16xf32>
    %50 = tpu.matmul %6, %49, %cst_27 {dimension_numbers = #tpu.dot_dimension_numbers<[2], [1], [1], [2], [0, 0, 0, 1, 1, 2], [0], [0]>} : vector<4x16x16xf32>, vector<4x16x16xf32>, vector<4x16x16xf32> -> vector<4x16x16xf32>
    "tpu.trace_stop"() : () -> ()
    %51 = arith.subf %49, %50 : vector<4x16x16xf32>
    %52 = vector.shape_cast %51 : vector<4x16x16xf32> to vector<1x4x16x16xf32>
    %c0_28 = arith.constant 0 : index
    %c0_29 = arith.constant 0 : index
    %c0_30 = arith.constant 0 : index
    %c0_31 = arith.constant 0 : index
    %53 = vector.load %arg7[%c0_28, %c0_29, %c0_30, %c0_31] : memref<1x4x16x16xf32, #tpu.memory_space<vmem>>, vector<1x4x16x16xf32>
    tpu.vector_store %arg7[%c0_28, %c0_29, %c0_30, %c0_31], %52 {strides = array<i32>} : memref<1x4x16x16xf32, #tpu.memory_space<vmem>>, vector<1x4x16x16xf32>,
    %54 = arith.addf %22, %39 : vector<4x16x16xf32>
    %55 = arith.addf %54, %50 : vector<4x16x16xf32>
    %c0_32 = arith.constant 0 : index
    %c0_33 = arith.constant 0 : index
    %c0_34 = arith.constant 0 : index
    %56 = vector.load %arg9[%c0_32, %c0_33, %c0_34] : memref<4x32x16xf32, #tpu.memory_space<vmem>>, vector<4x16x16xf32>
    tpu.vector_store %arg9[%c0_32, %c0_33, %c0_34], %55 {strides = array<i32>} : memref<4x32x16xf32, #tpu.memory_space<vmem>>, vector<4x16x16xf32>,
    %c0_35 = arith.constant 0 : index
    %c16 = arith.constant 16 : index
    %c0_36 = arith.constant 0 : index
    %57 = vector.load %arg9[%c0_35, %c16, %c0_36] : memref<4x32x16xf32, #tpu.memory_space<vmem>>, vector<4x16x16xf32>
    tpu.vector_store %arg9[%c0_35, %c16, %c0_36], %55 {strides = array<i32>} : memref<4x32x16xf32, #tpu.memory_space<vmem>>, vector<4x16x16xf32>,
    %c0_37 = arith.constant 0 : index
    %c15 = arith.constant 15 : index
    %c0_38 = arith.constant 0 : index
    %58 = vector.load %arg9[%c0_37, %c15, %c0_38] : memref<4x32x16xf32, #tpu.memory_space<vmem>>, vector<4x16x16xf32>
    %c0_39 = arith.constant 0 : index
    %c1 = arith.constant 1 : index
    %c0_40 = arith.constant 0 : index
    %59 = vector.load %arg9[%c0_39, %c1, %c0_40] : memref<4x32x16xf32, #tpu.memory_space<vmem>>, vector<4x16x16xf32>
    %60 = vector.shape_cast %58 : vector<4x16x16xf32> to vector<64x16xf32>
    %c0_41 = arith.constant 0 : index
    %c0_42 = arith.constant 0 : index
    %c0_43 = arith.constant 0 : index
    %61 = vector.load %arg6[%c0_41, %c0_42, %c0_43] : memref<3x16x16xf32, #tpu.memory_space<vmem>>, vector<1x16x16xf32>
    %62 = vector.shape_cast %61 : vector<1x16x16xf32> to vector<16x16xf32>
    %cst_44 = arith.constant dense<0.000000e+00> : vector<64x16xf32>
    %63 = tpu.matmul %60, %62, %cst_44 {dimension_numbers = #tpu.dot_dimension_numbers<[1], [0], [0], [1], [0, 0, 1, 1], [], []>} : vector<64x16xf32>, vector<16x16xf32>, vector<64x16xf32> -> vector<64x16xf32>
    %64 = vector.shape_cast %55 : vector<4x16x16xf32> to vector<64x16xf32>
    %c1_45 = arith.constant 1 : index
    %c0_46 = arith.constant 0 : index
    %c0_47 = arith.constant 0 : index
    %65 = vector.load %arg6[%c1_45, %c0_46, %c0_47] : memref<3x16x16xf32, #tpu.memory_space<vmem>>, vector<1x16x16xf32>
    %66 = vector.shape_cast %65 : vector<1x16x16xf32> to vector<16x16xf32>
    %cst_48 = arith.constant dense<0.000000e+00> : vector<64x16xf32>
    %67 = tpu.matmul %64, %66, %cst_48 {dimension_numbers = #tpu.dot_dimension_numbers<[1], [0], [0], [1], [0, 0, 1, 1], [], []>} : vector<64x16xf32>, vector<16x16xf32>, vector<64x16xf32> -> vector<64x16xf32>
    %68 = arith.addf %63, %67 : vector<64x16xf32>
    %69 = vector.shape_cast %59 : vector<4x16x16xf32> to vector<64x16xf32>
    %c2 = arith.constant 2 : index
    %c0_49 = arith.constant 0 : index
    %c0_50 = arith.constant 0 : index
    %70 = vector.load %arg6[%c2, %c0_49, %c0_50] : memref<3x16x16xf32, #tpu.memory_space<vmem>>, vector<1x16x16xf32>
    %71 = vector.shape_cast %70 : vector<1x16x16xf32> to vector<16x16xf32>
    %cst_51 = arith.constant dense<0.000000e+00> : vector<64x16xf32>
    %72 = tpu.matmul %69, %71, %cst_51 {dimension_numbers = #tpu.dot_dimension_numbers<[1], [0], [0], [1], [0, 0, 1, 1], [], []>} : vector<64x16xf32>, vector<16x16xf32>, vector<64x16xf32> -> vector<64x16xf32>
    %73 = arith.addf %68, %72 : vector<64x16xf32>
    %74 = vector.shape_cast %73 : vector<64x16xf32> to vector<1x4x16x16xf32>
    %c0_52 = arith.constant 0 : index
    %c0_53 = arith.constant 0 : index
    %c0_54 = arith.constant 0 : index
    %c0_55 = arith.constant 0 : index
    %75 = vector.load %arg8[%c0_52, %c0_53, %c0_54, %c0_55] : memref<1x4x16x16xf32, #tpu.memory_space<vmem>>, vector<1x4x16x16xf32>
    tpu.vector_store %arg8[%c0_52, %c0_53, %c0_54, %c0_55], %74 {strides = array<i32>} : memref<1x4x16x16xf32, #tpu.memory_space<vmem>>, vector<1x4x16x16xf32>,
    return
  }
  func.func @transform_0(%arg0: i32) -> (i32, i32, i32, i32) {
    %c0_i32 = arith.constant 0 : i32
    %c0_i32_0 = arith.constant 0 : i32
    %c0_i32_1 = arith.constant 0 : i32
    %c0_i32_2 = arith.constant 0 : i32
    return %arg0, %c0_i32, %c0_i32_0, %c0_i32_1 : i32, i32, i32, i32
  }
  func.func @transform_1(%arg0: i32) -> (i32, i32, i32, i32) {
    %c0_i32 = arith.constant 0 : i32
    %c0_i32_0 = arith.constant 0 : i32
    %c0_i32_1 = arith.constant 0 : i32
    %c0_i32_2 = arith.constant 0 : i32
    return %arg0, %c0_i32, %c0_i32_0, %c0_i32_1 : i32, i32, i32, i32
  }
  func.func @transform_2(%arg0: i32) -> (i32, i32) {
    %c0_i32 = arith.constant 0 : i32
    %c0_i32_0 = arith.constant 0 : i32
    %c0_i32_1 = arith.constant 0 : i32
    return %c0_i32, %c0_i32_0 : i32, i32
  }
  func.func @transform_3(%arg0: i32) -> (i32, i32) {
    %c0_i32 = arith.constant 0 : i32
    %c0_i32_0 = arith.constant 0 : i32
    %c0_i32_1 = arith.constant 0 : i32
    return %c0_i32, %c0_i32_0 : i32, i32
  }
  func.func @transform_4(%arg0: i32) -> (i32, i32) {
    %c0_i32 = arith.constant 0 : i32
    %c0_i32_0 = arith.constant 0 : i32
    %c0_i32_1 = arith.constant 0 : i32
    return %c0_i32, %c0_i32_0 : i32, i32
  }
  func.func @transform_5(%arg0: i32) -> (i32, i32, i32) {
    %c0_i32 = arith.constant 0 : i32
    %c0_i32_0 = arith.constant 0 : i32
    %c0_i32_1 = arith.constant 0 : i32
    %c0_i32_2 = arith.constant 0 : i32
    return %c0_i32, %c0_i32_0, %c0_i32_1 : i32, i32, i32
  }
  func.func @transform_6(%arg0: i32) -> (i32, i32, i32, i32) {
    %c0_i32 = arith.constant 0 : i32
    %c0_i32_0 = arith.constant 0 : i32
    %c0_i32_1 = arith.constant 0 : i32
    %c0_i32_2 = arith.constant 0 : i32
    return %arg0, %c0_i32, %c0_i32_0, %c0_i32_1 : i32, i32, i32, i32
  }
  func.func @transform_7(%arg0: i32) -> (i32, i32, i32, i32) {
    %c0_i32 = arith.constant 0 : i32
    %c0_i32_0 = arith.constant 0 : i32
    %c0_i32_1 = arith.constant 0 : i32
    %c0_i32_2 = arith.constant 0 : i32
    return %arg0, %c0_i32, %c0_i32_0, %c0_i32_1 : i32, i32, i32, i32
  }
}

</mosaic_0001>

<llo_original>
// kernel: tpu_custom_call.1
$region0: #{tpu_custom_call.1}
  #allocation0 [shape = 'u32[]', space=smem, size = 0x4, offset = 0x4, fixed_abs, tag = 'smem constant byte address 0x4 - core index']
  #allocation1 [shape = 'u32[144,128]{1,0:T(1,128)}', space=vmem, size = 0x12000, scoped, tag = 'internal scratch']
  #allocation2 [shape = 'f32[4,32,16]{2,1,0:T(8,128)}', space=vmem, size = 0x10000, scoped, tag = 'scratch operand']
  %s0 = inlined_call_operand.hbm [shape: f32[2,4,16,16], index: 0, kind: input, shape index: {}]
  %s1 = inlined_call_operand.hbm [shape: f32[2,4,16,16], index: 1, kind: input, shape index: {}]
  %s2 = inlined_call_operand.vmem [shape: f32[16,16], index: 2, kind: input, shape index: {}]
  %s3 = inlined_call_operand.vmem [shape: f32[16,64], index: 3, kind: input, shape index: {}]
  %s4 = inlined_call_operand.vmem [shape: f32[64,16], index: 4, kind: input, shape index: {}]
  %s5 = inlined_call_operand.vmem [shape: f32[3,16,16], index: 5, kind: input, shape index: {}]
  %s6 = inlined_call_operand.hbm [shape: f32[2,4,16,16], index: 6, kind: output, shape index: {0}]
  %s7 = inlined_call_operand.hbm [shape: f32[2,4,16,16], index: 7, kind: output, shape index: {1}]
  %8 = xla_tuple %s6, %s7
  %s9 = sld [smem:[#allocation0]]
  $region73: #{tpu_custom_call.1} parent=0
    _
  %s11 = ssub.s32 1, %s9
  %s12 = scalar_select 0, %s11, %s9
  $region1: #{tpu_custom_call.1} parent=0
    #allocation3 [shape = 'u8[65536]{0}', space=vmem, size = 0x10000, scoped, tag = 'input window, operand 0']
    #allocation4 [shape = 's32[2]{0}', space=sflag, size = 0x8, scoped, tag = 'scoped memory for tpu_custom_call.1']
    #allocation5 [shape = 's32[2]{0}', space=sflag, size = 0x8, scoped, tag = 'scoped memory for tpu_custom_call.1']
    #allocation6 [shape = 'u8[65536]{0}', space=vmem, size = 0x10000, scoped, tag = 'input window, operand 1']
    #allocation7 [shape = 's32[2]{0}', space=sflag, size = 0x8, scoped, tag = 'scoped memory for tpu_custom_call.1']
    #allocation8 [shape = 'u8[65536]{0}', space=vmem, size = 0x10000, scoped, tag = 'output window, operand 0']
    #allocation9 [shape = 'u8[65536]{0}', space=vmem, size = 0x10000, scoped, tag = 'output window, operand 1']
    #allocation10 [shape = 's32[2]{0}', space=sflag, size = 0x8, scoped, tag = 'scoped memory for tpu_custom_call.1']
    %13 = vsyncpa [#allocation4], 0
    %s14 = scalar_lea.sflag [#allocation4], 1
    %15 = vsyncpa %s14, 0
    %16 = vsyncpa [#allocation7], 0
    %s17 = scalar_lea.sflag [#allocation7], 1
    %18 = vsyncpa %s17, 0
    %19 = vsyncpa [#allocation5], 0
    %s20 = scalar_lea.sflag [#allocation5], 1
    %21 = vsyncpa %s20, 0
    %22 = vsyncpa [#allocation10], 0
    %s23 = scalar_lea.sflag [#allocation10], 1
    %24 = vsyncpa %s23, 0
    loop: start=0, step=1, limit=4
    $region2: #{tpu_custom_call.1} parent=1 // loop_pre_header
      _
    $region3: #{tpu_custom_call.1} parent=1 // loop_header
      %s26 = sphi 0, %s30
      %p27 = scmp.ge.s32.totalorder %s26, 4
      %s36 = sphi 0, %s38
      %s39 = sphi 0, %s36
      %s40 = sphi 0, %s39
      %s56 = sphi 0, %s40
      %s62 = sphi 0, %s64
      %s65 = sphi 0, %s62
      %s66 = sphi 0, %s65
      %s82 = sphi 0, %s66
      %s86 = sphi 0, %s86
      %s88 = sphi 0, %s86
      %s89 = sphi 0, %s88
      %s103 = sphi 0, %s89
      %s107 = sphi 0, %s107
      %s109 = sphi 0, %s107
      %s110 = sphi 0, %s109
      %s124 = sphi 0, %s110
      %s128 = sphi 0, %s128
      %s130 = sphi 0, %s128
      %s131 = sphi 0, %s130
      %s145 = sphi 0, %s131
      %s149 = sphi 0, %s149
      %s151 = sphi 0, %s149
      %s152 = sphi 0, %s151
      %s166 = sphi 0, %s152
      %s172 = sphi 0, %s174
      %s175 = sphi 0, %s172
      %s176 = sphi 0, %s175
      %s192 = sphi 0, %s176
      %s198 = sphi 0, %s200
      %s201 = sphi 0, %s198
      %s202 = sphi 0, %s201
      %s218 = sphi 0, %s202
    $region4: #{tpu_custom_call.1} parent=1 // loop_header_branch
      %29 = sbr.rel (%p27) target = $region8
    $region5: #{tpu_custom_call.1} parent=1 // loop_body
      %s31 = ssub.s32 %s26, 1
      %s32 = ssub.s32 %s26, 2
      %s33 = sadd.s32 %s26, 1
      %s34 = ssub.s32 %s26, %s33
      %p35 = scmp.eq.s32.totalorder %s34, 0
      %s37 = sadd.s32 %s36, 1
      %s38 = scalar_select %p35, %s36, %s37
      %p41 = pneg %p35
      %p42 = scmp.eq.s32.totalorder %s26, 1
      %p43 = por %p41, %p42
      %p44 = scmp.ne.s32.totalorder %s36, %s39
      %p45 = scmp.eq.s32.totalorder %s26, 0
      %p46 = por %p44, %p45
      %p47 = scmp.ne.s32.totalorder %s36, %s39
      %p48 = scmp.eq.s32.totalorder %s31, 1
      %p49 = por %p47, %p48
      %p50 = scmp.ne.s32.totalorder %s39, %s40
      %p51 = scmp.eq.s32.totalorder %s31, 0
      %p52 = por %p50, %p51
      %p53 = scmp.ne.s32.totalorder %s39, %s40
      %p54 = scmp.eq.s32.totalorder %s32, 1
      %p55 = por %p53, %p54
      %p57 = scmp.ne.s32.totalorder %s40, %s56
      %p58 = scmp.eq.s32.totalorder %s32, 0
      %p59 = por %p57, %p58
      %s60 = ssub.s32 %s26, %s33
      %p61 = scmp.eq.s32.totalorder %s60, 0
      %s63 = sadd.s32 %s62, 1
      %s64 = scalar_select %p61, %s62, %s63
      %p67 = pneg %p61
      %p68 = scmp.eq.s32.totalorder %s26, 1
      %p69 = por %p67, %p68
      %p70 = scmp.ne.s32.totalorder %s62, %s65
      %p71 = scmp.eq.s32.totalorder %s26, 0
      %p72 = por %p70, %p71
      %p73 = scmp.ne.s32.totalorder %s62, %s65
      %p74 = scmp.eq.s32.totalorder %s31, 1
      %p75 = por %p73, %p74
      %p76 = scmp.ne.s32.totalorder %s65, %s66
      %p77 = scmp.eq.s32.totalorder %s31, 0
      %p78 = por %p76, %p77
      %p79 = scmp.ne.s32.totalorder %s65, %s66
      %p80 = scmp.eq.s32.totalorder %s32, 1
      %p81 = por %p79, %p80
      %p83 = scmp.ne.s32.totalorder %s66, %s82
      %p84 = scmp.eq.s32.totalorder %s32, 0
      %p85 = por %p83, %p84
      %s87 = sadd.s32 %s86, 1
      %p90 = scmp.eq.s32.totalorder %s26, 1
      %p91 = scmp.ne.s32.totalorder %s86, %s88
      %p92 = scmp.eq.s32.totalorder %s26, 0
      %p93 = por %p91, %p92
      %p94 = scmp.ne.s32.totalorder %s86, %s88
      %p95 = scmp.eq.s32.totalorder %s31, 1
      %p96 = por %p94, %p95
      %p97 = scmp.ne.s32.totalorder %s88, %s89
      %p98 = scmp.eq.s32.totalorder %s31, 0
      %p99 = por %p97, %p98
      %p100 = scmp.ne.s32.totalorder %s88, %s89
      %p101 = scmp.eq.s32.totalorder %s32, 1
      %p102 = por %p100, %p101
      %p104 = scmp.ne.s32.totalorder %s89, %s103
      %p105 = scmp.eq.s32.totalorder %s32, 0
      %p106 = por %p104, %p105
      %s108 = sadd.s32 %s107, 1
      %p111 = scmp.eq.s32.totalorder %s26, 1
      %p112 = scmp.ne.s32.totalorder %s107, %s109
      %p113 = scmp.eq.s32.totalorder %s26, 0
      %p114 = por %p112, %p113
      %p115 = scmp.ne.s32.totalorder %s107, %s109
      %p116 = scmp.eq.s32.totalorder %s31, 1
      %p117 = por %p115, %p116
      %p118 = scmp.ne.s32.totalorder %s109, %s110
      %p119 = scmp.eq.s32.totalorder %s31, 0
      %p120 = por %p118, %p119
      %p121 = scmp.ne.s32.totalorder %s109, %s110
      %p122 = scmp.eq.s32.totalorder %s32, 1
      %p123 = por %p121, %p122
      %p125 = scmp.ne.s32.totalorder %s110, %s124
      %p126 = scmp.eq.s32.totalorder %s32, 0
      %p127 = por %p125, %p126
      %s129 = sadd.s32 %s128, 1
      %p132 = scmp.eq.s32.totalorder %s26, 1
      %p133 = scmp.ne.s32.totalorder %s128, %s130
      %p134 = scmp.eq.s32.totalorder %s26, 0
      %p135 = por %p133, %p134
      %p136 = scmp.ne.s32.totalorder %s128, %s130
      %p137 = scmp.eq.s32.totalorder %s31, 1
      %p138 = por %p136, %p137
      %p139 = scmp.ne.s32.totalorder %s130, %s131
      %p140 = scmp.eq.s32.totalorder %s31, 0
      %p141 = por %p139, %p140
      %p142 = scmp.ne.s32.totalorder %s130, %s131
      %p143 = scmp.eq.s32.totalorder %s32, 1
      %p144 = por %p142, %p143
      %p146 = scmp.ne.s32.totalorder %s131, %s145
      %p147 = scmp.eq.s32.totalorder %s32, 0
      %p148 = por %p146, %p147
      %s150 = sadd.s32 %s149, 1
      %p153 = scmp.eq.s32.totalorder %s26, 1
      %p154 = scmp.ne.s32.totalorder %s149, %s151
      %p155 = scmp.eq.s32.totalorder %s26, 0
      %p156 = por %p154, %p155
      %p157 = scmp.ne.s32.totalorder %s149, %s151
      %p158 = scmp.eq.s32.totalorder %s31, 1
      %p159 = por %p157, %p158
      %p160 = scmp.ne.s32.totalorder %s151, %s152
      %p161 = scmp.eq.s32.totalorder %s31, 0
      %p162 = por %p160, %p161
      %p163 = scmp.ne.s32.totalorder %s151, %s152
      %p164 = scmp.eq.s32.totalorder %s32, 1
      %p165 = por %p163, %p164
      %p167 = scmp.ne.s32.totalorder %s152, %s166
      %p168 = scmp.eq.s32.totalorder %s32, 0
      %p169 = por %p167, %p168
      %s170 = ssub.s32 %s26, %s33
      %p171 = scmp.eq.s32.totalorder %s170, 0
      %s173 = sadd.s32 %s172, 1
      %s174 = scalar_select %p171, %s172, %s173
      %p177 = pneg %p171
      %p178 = scmp.eq.s32.totalorder %s26, 1
      %p179 = por %p177, %p178
      %p180 = scmp.ne.s32.totalorder %s172, %s175
      %p181 = scmp.eq.s32.totalorder %s26, 0
      %p182 = por %p180, %p181
      %p183 = scmp.ne.s32.totalorder %s172, %s175
      %p184 = scmp.eq.s32.totalorder %s31, 1
      %p185 = por %p183, %p184
      %p186 = scmp.ne.s32.totalorder %s175, %s176
      %p187 = scmp.eq.s32.totalorder %s31, 0
      %p188 = por %p186, %p187
      %p189 = scmp.ne.s32.totalorder %s175, %s176
      %p190 = scmp.eq.s32.totalorder %s32, 1
      %p191 = por %p189, %p190
      %p193 = scmp.ne.s32.totalorder %s176, %s192
      %p194 = scmp.eq.s32.totalorder %s32, 0
      %p195 = por %p193, %p194
      %s196 = ssub.s32 %s26, %s33
      %p197 = scmp.eq.s32.totalorder %s196, 0
      %s199 = sadd.s32 %s198, 1
      %s200 = scalar_select %p197, %s198, %s199
      %p203 = pneg %p197
      %p204 = scmp.eq.s32.totalorder %s26, 1
      %p205 = por %p203, %p204
      %p206 = scmp.ne.s32.totalorder %s198, %s201
      %p207 = scmp.eq.s32.totalorder %s26, 0
      %p208 = por %p206, %p207
      %p209 = scmp.ne.s32.totalorder %s198, %s201
      %p210 = scmp.eq.s32.totalorder %s31, 1
      %p211 = por %p209, %p210
      %p212 = scmp.ne.s32.totalorder %s201, %s202
      %p213 = scmp.eq.s32.totalorder %s31, 0
      %p214 = por %p212, %p213
      %p215 = scmp.ne.s32.totalorder %s201, %s202
      %p216 = scmp.eq.s32.totalorder %s32, 1
      %p217 = por %p215, %p216
      %p219 = scmp.ne.s32.totalorder %s202, %s218
      %p220 = scmp.eq.s32.totalorder %s32, 0
      %p221 = por %p219, %p220
      %p222 = scmp.le.s32.totalorder 1, %s26
      %p223 = scmp.lt.s32.totalorder %s26, 3
      %p224 = pnand %p222, %p223
      %p225 = pneg %p224
      // Predicated region
      $region9: #{tpu_custom_call.1} parent=5 // pred_check
        _
      $region10: #{tpu_custom_call.1} parent=5 // pred_check_branch
        %227 = sbr.rel (%p224) target = $region12
      $region11: #{tpu_custom_call.1} parent=5 // pred_region
        %s228 = ssub.s32 %s26, 1
        // Predicated region
        $region13: #{tpu_custom_call.1} parent=11 // pred_check
          %p229 = pneg %p99
        $region14: #{tpu_custom_call.1} parent=11 // pred_check_branch
          %231 = sbr.rel (%p229) target = $region16
        $region15: #{tpu_custom_call.1} parent=11 // pred_region
          _
        $region16: #{tpu_custom_call.1} parent=11 // pred_fallthru
          _
        // Predicated region
        $region17: #{tpu_custom_call.1} parent=11 // pred_check
          %p232 = pneg %p120
        $region18: #{tpu_custom_call.1} parent=11 // pred_check_branch
          %234 = sbr.rel (%p232) target = $region20
        $region19: #{tpu_custom_call.1} parent=11 // pred_region
          _
        $region20: #{tpu_custom_call.1} parent=11 // pred_fallthru
          _
        // Predicated region
        $region21: #{tpu_custom_call.1} parent=11 // pred_check
          %p235 = pneg %p141
        $region22: #{tpu_custom_call.1} parent=11 // pred_check_branch
          %237 = sbr.rel (%p235) target = $region24
        $region23: #{tpu_custom_call.1} parent=11 // pred_region
          _
        $region24: #{tpu_custom_call.1} parent=11 // pred_fallthru
          _
        // Predicated region
        $region25: #{tpu_custom_call.1} parent=11 // pred_check
          %p238 = pneg %p162
        $region26: #{tpu_custom_call.1} parent=11 // pred_check_branch
          %240 = sbr.rel (%p238) target = $region28
        $region27: #{tpu_custom_call.1} parent=11 // pred_region
          _
        $region28: #{tpu_custom_call.1} parent=11 // pred_fallthru
          _
      $region12: #{tpu_custom_call.1} parent=5 // pred_fallthru
        _
      %p241 = scmp.lt.s32.totalorder %s26, 2
      // Predicated region
      $region29: #{tpu_custom_call.1} parent=5 // pred_check
        %p242 = pneg %p241
      $region30: #{tpu_custom_call.1} parent=5 // pred_check_branch
        %244 = sbr.rel (%p242) target = $region32
      $region31: #{tpu_custom_call.1} parent=5 // pred_region
        // Predicated region
        $region33: #{tpu_custom_call.1} parent=31 // pred_check
          %p245 = pneg %p46
        $region34: #{tpu_custom_call.1} parent=31 // pred_check_branch
          %247 = sbr.rel (%p245) target = $region36
        $region35: #{tpu_custom_call.1} parent=31 // pred_region
          %s248 = sand.u32 %s36, 1
          %s249 = scalar_lea.sflag [#allocation4], %s248
          %s250 = sand.u32 %s36, 1
          %s251 = smul.addr %s250, 64
          %s252 = scalar_lea.vmem [#allocation3], %s251
          %s254 = ssub.s32 1024, 1024
          %255 = vsyncadd %s249, %s254
          %s256 = smul.addr %s26, 8
          %s257 = smul.addr %s256, 128
          %s258 = scalar_lea.hbm %s0, %s257
          %s259 = sshll.u32 %s252, 4
          %s260 = int_to_ptr.vmem [resolvable:$true] %s259
          %265 = dma.hbm_to_vmem [thread:$0]  %s258, 1024, %s260, %s249, 128, 128, 8
        $region36: #{tpu_custom_call.1} parent=31 // pred_fallthru
          _
        // Predicated region
        $region37: #{tpu_custom_call.1} parent=31 // pred_check
          %p266 = pneg %p72
        $region38: #{tpu_custom_call.1} parent=31 // pred_check_branch
          %268 = sbr.rel (%p266) target = $region40
        $region39: #{tpu_custom_call.1} parent=31 // pred_region
          %s269 = sand.u32 %s62, 1
          %s270 = scalar_lea.sflag [#allocation7], %s269
          %s271 = sand.u32 %s62, 1
          %s272 = smul.addr %s271, 64
          %s273 = scalar_lea.vmem [#allocation6], %s272
          %s275 = ssub.s32 1024, 1024
          %276 = vsyncadd %s270, %s275
          %s277 = smul.addr %s26, 8
          %s278 = smul.addr %s277, 128
          %s279 = scalar_lea.hbm %s1, %s278
          %s280 = sshll.u32 %s273, 4
          %s281 = int_to_ptr.vmem [resolvable:$true] %s280
          %286 = dma.hbm_to_vmem [thread:$0]  %s279, 1024, %s281, %s270, 128, 128, 8
        $region40: #{tpu_custom_call.1} parent=31 // pred_fallthru
          _
      $region32: #{tpu_custom_call.1} parent=5 // pred_fallthru
        _
      %p287 = scmp.le.s32.totalorder 1, %s26
      %p288 = scmp.lt.s32.totalorder %s26, 3
      %p289 = pnand %p287, %p288
      %p290 = pneg %p289
      // Predicated region
      $region41: #{tpu_custom_call.1} parent=5 // pred_check
        _
      $region42: #{tpu_custom_call.1} parent=5 // pred_check_branch
        %292 = sbr.rel (%p289) target = $region44
      $region43: #{tpu_custom_call.1} parent=5 // pred_region
        %s293 = ssub.s32 %s26, 1
        %s294 = sand.u32 %s39, 1
        %s295 = scalar_lea.sflag [#allocation4], %s294
        %s296 = sand.u32 %s39, 1
        %s297 = smul.addr %s296, 64
        %s298 = scalar_lea.vmem [#allocation3], %s297
        // Predicated region
        $region45: #{tpu_custom_call.1} parent=43 // pred_check
          %p299 = pneg %p52
        $region46: #{tpu_custom_call.1} parent=43 // pred_check_branch
          %301 = sbr.rel (%p299) target = $region48
        $region47: #{tpu_custom_call.1} parent=43 // pred_region
          %302 = dma.done %s295, 1024
        $region48: #{tpu_custom_call.1} parent=43 // pred_fallthru
          _
        %s303 = sand.u32 %s65, 1
        %s304 = scalar_lea.sflag [#allocation7], %s303
        %s305 = sand.u32 %s65, 1
        %s306 = smul.addr %s305, 64
        %s307 = scalar_lea.vmem [#allocation6], %s306
        // Predicated region
        $region49: #{tpu_custom_call.1} parent=43 // pred_check
          %p308 = pneg %p78
        $region50: #{tpu_custom_call.1} parent=43 // pred_check_branch
          %310 = sbr.rel (%p308) target = $region52
        $region51: #{tpu_custom_call.1} parent=43 // pred_region
          %311 = dma.done %s304, 1024
        $region52: #{tpu_custom_call.1} parent=43 // pred_fallthru
          _
        %s312 = sand.u32 %s39, 1
        %s313 = scalar_lea.sflag [#allocation4], %s312
        %s314 = sand.u32 %s39, 1
        %s315 = smul.addr %s314, 64
        %s316 = scalar_lea.vmem [#allocation3], %s315
        %p317 = pneg %p52
        %p318 = pneg %p49
        %s319 = sand.u32 %s65, 1
        %s320 = scalar_lea.sflag [#allocation7], %s319
        %s321 = sand.u32 %s65, 1
        %s322 = smul.addr %s321, 64
        %s323 = scalar_lea.vmem [#allocation6], %s322
        %p324 = pneg %p78
        %p325 = pneg %p75
        %p326 = pneg %p99
        %p327 = pneg %p96
        %p328 = pneg %p120
        %p329 = pneg %p117
        %p330 = pneg %p141
        %p331 = pneg %p138
        %p332 = pneg %p162
        %p333 = pneg %p159
        %p334 = pneg %p188
        %p335 = pneg %p185
        %s336 = sand.u32 %s175, 1
        %s337 = scalar_lea.sflag [#allocation5], %s336
        %s338 = sand.u32 %s175, 1
        %s339 = smul.addr %s338, 64
        %s340 = scalar_lea.vmem [#allocation8], %s339
        %p341 = pneg %p214
        %p342 = pneg %p211
        %s343 = sand.u32 %s201, 1
        %s344 = scalar_lea.sflag [#allocation10], %s343
        %s345 = sand.u32 %s201, 1
        %s346 = smul.addr %s345, 64
        %s347 = scalar_lea.vmem [#allocation9], %s346
        %v348 = vld [vmem:[%s298] sm:$0xff]
        %v349 = vld [vmem:[%s298 + $0x8] sm:$0xff]
        %v350 = vld [vmem:[%s298 + $0x10] sm:$0xff]
        %v351 = vld [vmem:[%s298 + $0x18] sm:$0xff]
        %v352 = vld [vmem:[%s298 + $0x20] sm:$0xff]
        %v353 = vld [vmem:[%s298 + $0x28] sm:$0xff]
        %v354 = vld [vmem:[%s298 + $0x30] sm:$0xff]
        %v355 = vld [vmem:[%s298 + $0x38] sm:$0xff]
        %v356 = vld [vmem:[%s307] sm:$0xff]
        %v357 = vld [vmem:[%s307 + $0x8] sm:$0xff]
        %v358 = vld [vmem:[%s307 + $0x10] sm:$0xff]
        %v359 = vld [vmem:[%s307 + $0x18] sm:$0xff]
        %v360 = vld [vmem:[%s307 + $0x20] sm:$0xff]
        %v361 = vld [vmem:[%s307 + $0x28] sm:$0xff]
        %v362 = vld [vmem:[%s307 + $0x30] sm:$0xff]
        %v363 = vld [vmem:[%s307 + $0x38] sm:$0xff]
        %v364 = vld [vmem:[%s2] sm:$0xff]
        %v365 = vld [vmem:[%s2 + $0x8] sm:$0xff]
        %v366 = vmul.f32 %v348, 0.25
        %v367 = vmul.f32 %v349, 0.25
        %v368 = vmul.f32 %v350, 0.25
        %v369 = vmul.f32 %v351, 0.25
        %v370 = vmul.f32 %v352, 0.25
        %v371 = vmul.f32 %v353, 0.25
        %v372 = vmul.f32 %v354, 0.25
        %v373 = vmul.f32 %v355, 0.25
        %vm374 = vcmask 130048
        %v376 = vsel %vm374, %v366, 0
        %v379 = vsel %vm374, %v367, 0
        %v382 = vsel %vm374, %v348, 0
        %v385 = vsel %vm374, %v349, 0
        %387 = vmatprep.subr.mxu0 0.0
        %388 = vmatpush1.xpose.msra.mxu0 %v382
        %389 = vmatprep.subr.mxu0 0.0
        %390 = vmatpush1.xpose.msra.mxu0 %v385
        %391 = vmatprep.subr.mxu0 0.0
        %392 = vmatpush1.xpose.msra.mxu0 0.0
        %393 = vmatprep.subr.mxu0 0.0
        %394 = vmatpush1.xpose.msra.mxu0 0.0
        %395 = vmatprep.subr.mxu0 0.0
        %396 = vmatpush1.xpose.msra.mxu0 0.0
        %397 = vmatprep.subr.mxu0 0.0
        %398 = vmatpush1.xpose.msra.mxu0 0.0
        %399 = vmatprep.subr.mxu0 0.0
        %400 = vmatpush1.xpose.msra.mxu0 0.0
        %401 = vmatprep.subr.mxu0 0.0
        %402 = vmatpush1.xpose.msra.mxu0 0.0
        %403 = vmatprep.subr.mxu0 0.0
        %404 = vmatpush1.xpose.msra.mxu0 0.0
        %405 = vmatprep.subr.mxu0 0.0
        %406 = vmatpush1.xpose.msra.mxu0 0.0
        %407 = vmatprep.subr.mxu0 0.0
        %408 = vmatpush1.xpose.msra.mxu0 0.0
        %409 = vmatprep.subr.mxu0 0.0
        %410 = vmatpush1.xpose.msra.mxu0 0.0
        %411 = vmatprep.subr.mxu0 0.0
        %412 = vmatpush1.xpose.msra.mxu0 0.0
        %413 = vmatprep.subr.mxu0 0.0
        %414 = vmatpush1.xpose.msra.mxu0 0.0
        %415 = vmatprep.subr.mxu0 0.0
        %416 = vmatpush1.xpose.msra.mxu0 0.0
        %417 = vmatprep.subr.mxu0 0.0
        %418 = vmatpush1.xpose.msra.mxu0 0.0
        %419 = vmatprep.subr.mxu0 0.0
        %420 = vmatpush1.xpose.msra.mxu0 0.0
        %421 = vmatprep.subr.mxu0 0.0
        %422 = vmatpush1.xpose.msra.mxu0 0.0
        %423 = vmatprep.subr.mxu0 0.0
        %424 = vmatpush1.xpose.msra.mxu0 0.0
        %425 = vmatprep.subr.mxu0 0.0
        %426 = vmatpush1.xpose.msra.mxu0 0.0
        %427 = vmatprep.subr.mxu0 0.0
        %428 = vmatpush1.xpose.msra.mxu0 0.0
        %429 = vmatprep.subr.mxu0 0.0
        %430 = vmatpush1.xpose.msra.mxu0 0.0
        %431 = vmatprep.subr.mxu0 0.0
        %432 = vmatpush1.xpose.msra.mxu0 0.0
        %433 = vmatprep.subr.mxu0 0.0
        %434 = vmatpush1.xpose.msra.mxu0 0.0
        %435 = vmatprep.subr.mxu0 0.0
        %436 = vmatpush1.xpose.msra.mxu0 0.0
        %437 = vmatprep.subr.mxu0 0.0
        %438 = vmatpush1.xpose.msra.mxu0 0.0
        %439 = vmatprep.subr.mxu0 0.0
        %440 = vmatpush1.xpose.msra.mxu0 0.0
        %441 = vmatprep.subr.mxu0 0.0
        %442 = vmatpush1.xpose.msra.mxu0 0.0
        %443 = vmatprep.subr.mxu0 0.0
        %444 = vmatpush1.xpose.msra.mxu0 0.0
        %445 = vmatprep.subr.mxu0 0.0
        %446 = vmatpush1.xpose.msra.mxu0 0.0
        %447 = vmatprep.subr.mxu0 0.0
        %448 = vmatpush1.xpose.msra.mxu0 0.0
        %449 = vmatprep.subr.mxu0 0.0
        %450 = vmatpush1.xpose.msra.mxu0 0.0
        %451 = vmatprep.mubr.f32.mxu0 0.0
        %452 = vmatmul.mubr.f32.gmra.mrb[0].mxu0 %v376
        %v453 = vpop.f32.mrb[0].mxu0
        %v454 = vadd.f32 0.0, %v453
        %v455 = vpop.f32.mrb[0].mxu0
        %456 = vmatprep.mubr.f32.mxu0 0.0
        %457 = vmatmul.mubr.f32.gmra.mrb[0].mxu0 %v379
        %v458 = vpop.f32.mrb[0].mxu0
        %v459 = vadd.f32 0.0, %v458
        %v460 = vpop.f32.mrb[0].mxu0
        %461 = vdwg.mxu0
        %v463 = vsel %vm374, %v368, 0
        %v466 = vsel %vm374, %v369, 0
        %v469 = vsel %vm374, %v350, 0
        %v472 = vsel %vm374, %v351, 0
        %474 = vmatprep.subr.mxu0 0.0
        %475 = vmatpush1.xpose.msra.mxu0 %v469
        %476 = vmatprep.subr.mxu0 0.0
        %477 = vmatpush1.xpose.msra.mxu0 %v472
        %478 = vmatprep.subr.mxu0 0.0
        %479 = vmatpush1.xpose.msra.mxu0 0.0
        %480 = vmatprep.subr.mxu0 0.0
        %481 = vmatpush1.xpose.msra.mxu0 0.0
        %482 = vmatprep.subr.mxu0 0.0
        %483 = vmatpush1.xpose.msra.mxu0 0.0
        %484 = vmatprep.subr.mxu0 0.0
        %485 = vmatpush1.xpose.msra.mxu0 0.0
        %486 = vmatprep.subr.mxu0 0.0
        %487 = vmatpush1.xpose.msra.mxu0 0.0
        %488 = vmatprep.subr.mxu0 0.0
        %489 = vmatpush1.xpose.msra.mxu0 0.0
        %490 = vmatprep.subr.mxu0 0.0
        %491 = vmatpush1.xpose.msra.mxu0 0.0
        %492 = vmatprep.subr.mxu0 0.0
        %493 = vmatpush1.xpose.msra.mxu0 0.0
        %494 = vmatprep.subr.mxu0 0.0
        %495 = vmatpush1.xpose.msra.mxu0 0.0
        %496 = vmatprep.subr.mxu0 0.0
        %497 = vmatpush1.xpose.msra.mxu0 0.0
        %498 = vmatprep.subr.mxu0 0.0
        %499 = vmatpush1.xpose.msra.mxu0 0.0
        %500 = vmatprep.subr.mxu0 0.0
        %501 = vmatpush1.xpose.msra.mxu0 0.0
        %502 = vmatprep.subr.mxu0 0.0
        %503 = vmatpush1.xpose.msra.mxu0 0.0
        %504 = vmatprep.subr.mxu0 0.0
        %505 = vmatpush1.xpose.msra.mxu0 0.0
        %506 = vmatprep.subr.mxu0 0.0
        %507 = vmatpush1.xpose.msra.mxu0 0.0
        %508 = vmatprep.subr.mxu0 0.0
        %509 = vmatpush1.xpose.msra.mxu0 0.0
        %510 = vmatprep.subr.mxu0 0.0
        %511 = vmatpush1.xpose.msra.mxu0 0.0
        %512 = vmatprep.subr.mxu0 0.0
        %513 = vmatpush1.xpose.msra.mxu0 0.0
        %514 = vmatprep.subr.mxu0 0.0
        %515 = vmatpush1.xpose.msra.mxu0 0.0
        %516 = vmatprep.subr.mxu0 0.0
        %517 = vmatpush1.xpose.msra.mxu0 0.0
        %518 = vmatprep.subr.mxu0 0.0
        %519 = vmatpush1.xpose.msra.mxu0 0.0
        %520 = vmatprep.subr.mxu0 0.0
        %521 = vmatpush1.xpose.msra.mxu0 0.0
        %522 = vmatprep.subr.mxu0 0.0
        %523 = vmatpush1.xpose.msra.mxu0 0.0
        %524 = vmatprep.subr.mxu0 0.0
        %525 = vmatpush1.xpose.msra.mxu0 0.0
        %526 = vmatprep.subr.mxu0 0.0
        %527 = vmatpush1.xpose.msra.mxu0 0.0
        %528 = vmatprep.subr.mxu0 0.0
        %529 = vmatpush1.xpose.msra.mxu0 0.0
        %530 = vmatprep.subr.mxu0 0.0
        %531 = vmatpush1.xpose.msra.mxu0 0.0
        %532 = vmatprep.subr.mxu0 0.0
        %533 = vmatpush1.xpose.msra.mxu0 0.0
        %534 = vmatprep.subr.mxu0 0.0
        %535 = vmatpush1.xpose.msra.mxu0 0.0
        %536 = vmatprep.subr.mxu0 0.0
        %537 = vmatpush1.xpose.msra.mxu0 0.0
        %538 = vmatprep.mubr.f32.mxu0 0.0
        %539 = vmatmul.mubr.f32.gmra.mrb[0].mxu0 %v463
        %v540 = vpop.f32.mrb[0].mxu0
        %v541 = vadd.f32 0.0, %v540
        %v542 = vpop.f32.mrb[0].mxu0
        %543 = vmatprep.mubr.f32.mxu0 0.0
        %544 = vmatmul.mubr.f32.gmra.mrb[0].mxu0 %v466
        %v545 = vpop.f32.mrb[0].mxu0
        %v546 = vadd.f32 0.0, %v545
        %v547 = vpop.f32.mrb[0].mxu0
        %548 = vdwg.mxu0
        %v550 = vsel %vm374, %v370, 0
        %v553 = vsel %vm374, %v371, 0
        %v556 = vsel %vm374, %v352, 0
        %v559 = vsel %vm374, %v353, 0
        %561 = vmatprep.subr.mxu0 0.0
        %562 = vmatpush1.xpose.msra.mxu0 %v556
        %563 = vmatprep.subr.mxu0 0.0
        %564 = vmatpush1.xpose.msra.mxu0 %v559
        %565 = vmatprep.subr.mxu0 0.0
        %566 = vmatpush1.xpose.msra.mxu0 0.0
        %567 = vmatprep.subr.mxu0 0.0
        %568 = vmatpush1.xpose.msra.mxu0 0.0
        %569 = vmatprep.subr.mxu0 0.0
        %570 = vmatpush1.xpose.msra.mxu0 0.0
        %571 = vmatprep.subr.mxu0 0.0
        %572 = vmatpush1.xpose.msra.mxu0 0.0
        %573 = vmatprep.subr.mxu0 0.0
        %574 = vmatpush1.xpose.msra.mxu0 0.0
        %575 = vmatprep.subr.mxu0 0.0
        %576 = vmatpush1.xpose.msra.mxu0 0.0
        %577 = vmatprep.subr.mxu0 0.0
        %578 = vmatpush1.xpose.msra.mxu0 0.0
        %579 = vmatprep.subr.mxu0 0.0
        %580 = vmatpush1.xpose.msra.mxu0 0.0
        %581 = vmatprep.subr.mxu0 0.0
        %582 = vmatpush1.xpose.msra.mxu0 0.0
        %583 = vmatprep.subr.mxu0 0.0
        %584 = vmatpush1.xpose.msra.mxu0 0.0
        %585 = vmatprep.subr.mxu0 0.0
        %586 = vmatpush1.xpose.msra.mxu0 0.0
        %587 = vmatprep.subr.mxu0 0.0
        %588 = vmatpush1.xpose.msra.mxu0 0.0
        %589 = vmatprep.subr.mxu0 0.0
        %590 = vmatpush1.xpose.msra.mxu0 0.0
        %591 = vmatprep.subr.mxu0 0.0
        %592 = vmatpush1.xpose.msra.mxu0 0.0
        %593 = vmatprep.subr.mxu0 0.0
        %594 = vmatpush1.xpose.msra.mxu0 0.0
        %595 = vmatprep.subr.mxu0 0.0
        %596 = vmatpush1.xpose.msra.mxu0 0.0
        %597 = vmatprep.subr.mxu0 0.0
        %598 = vmatpush1.xpose.msra.mxu0 0.0
        %599 = vmatprep.subr.mxu0 0.0
        %600 = vmatpush1.xpose.msra.mxu0 0.0
        %601 = vmatprep.subr.mxu0 0.0
        %602 = vmatpush1.xpose.msra.mxu0 0.0
        %603 = vmatprep.subr.mxu0 0.0
        %604 = vmatpush1.xpose.msra.mxu0 0.0
        %605 = vmatprep.subr.mxu0 0.0
        %606 = vmatpush1.xpose.msra.mxu0 0.0
        %607 = vmatprep.subr.mxu0 0.0
        %608 = vmatpush1.xpose.msra.mxu0 0.0
        %609 = vmatprep.subr.mxu0 0.0
        %610 = vmatpush1.xpose.msra.mxu0 0.0
        %611 = vmatprep.subr.mxu0 0.0
        %612 = vmatpush1.xpose.msra.mxu0 0.0
        %613 = vmatprep.subr.mxu0 0.0
        %614 = vmatpush1.xpose.msra.mxu0 0.0
        %615 = vmatprep.subr.mxu0 0.0
        %616 = vmatpush1.xpose.msra.mxu0 0.0
        %617 = vmatprep.subr.mxu0 0.0
        %618 = vmatpush1.xpose.msra.mxu0 0.0
        %619 = vmatprep.subr.mxu0 0.0
        %620 = vmatpush1.xpose.msra.mxu0 0.0
        %621 = vmatprep.subr.mxu0 0.0
        %622 = vmatpush1.xpose.msra.mxu0 0.0
        %623 = vmatprep.subr.mxu0 0.0
        %624 = vmatpush1.xpose.msra.mxu0 0.0
        %625 = vmatprep.mubr.f32.mxu0 0.0
        %626 = vmatmul.mubr.f32.gmra.mrb[0].mxu0 %v550
        %v627 = vpop.f32.mrb[0].mxu0
        %v628 = vadd.f32 0.0, %v627
        %v629 = vpop.f32.mrb[0].mxu0
        %630 = vmatprep.mubr.f32.mxu0 0.0
        %631 = vmatmul.mubr.f32.gmra.mrb[0].mxu0 %v553
        %v632 = vpop.f32.mrb[0].mxu0
        %v633 = vadd.f32 0.0, %v632
        %v634 = vpop.f32.mrb[0].mxu0
        %635 = vdwg.mxu0
        %v637 = vsel %vm374, %v372, 0
        %v640 = vsel %vm374, %v373, 0
        %v643 = vsel %vm374, %v354, 0
        %v646 = vsel %vm374, %v355, 0
        %648 = vmatprep.subr.mxu0 0.0
        %649 = vmatpush1.xpose.msra.mxu0 %v643
        %650 = vmatprep.subr.mxu0 0.0
        %651 = vmatpush1.xpose.msra.mxu0 %v646
        %652 = vmatprep.subr.mxu0 0.0
        %653 = vmatpush1.xpose.msra.mxu0 0.0
        %654 = vmatprep.subr.mxu0 0.0
        %655 = vmatpush1.xpose.msra.mxu0 0.0
        %656 = vmatprep.subr.mxu0 0.0
        %657 = vmatpush1.xpose.msra.mxu0 0.0
        %658 = vmatprep.subr.mxu0 0.0
        %659 = vmatpush1.xpose.msra.mxu0 0.0
        %660 = vmatprep.subr.mxu0 0.0
        %661 = vmatpush1.xpose.msra.mxu0 0.0
        %662 = vmatprep.subr.mxu0 0.0
        %663 = vmatpush1.xpose.msra.mxu0 0.0
        %664 = vmatprep.subr.mxu0 0.0
        %665 = vmatpush1.xpose.msra.mxu0 0.0
        %666 = vmatprep.subr.mxu0 0.0
        %667 = vmatpush1.xpose.msra.mxu0 0.0
        %668 = vmatprep.subr.mxu0 0.0
        %669 = vmatpush1.xpose.msra.mxu0 0.0
        %670 = vmatprep.subr.mxu0 0.0
        %671 = vmatpush1.xpose.msra.mxu0 0.0
        %672 = vmatprep.subr.mxu0 0.0
        %673 = vmatpush1.xpose.msra.mxu0 0.0
        %674 = vmatprep.subr.mxu0 0.0
        %675 = vmatpush1.xpose.msra.mxu0 0.0
        %676 = vmatprep.subr.mxu0 0.0
        %677 = vmatpush1.xpose.msra.mxu0 0.0
        %678 = vmatprep.subr.mxu0 0.0
        %679 = vmatpush1.xpose.msra.mxu0 0.0
        %680 = vmatprep.subr.mxu0 0.0
        %681 = vmatpush1.xpose.msra.mxu0 0.0
        %682 = vmatprep.subr.mxu0 0.0
        %683 = vmatpush1.xpose.msra.mxu0 0.0
        %684 = vmatprep.subr.mxu0 0.0
        %685 = vmatpush1.xpose.msra.mxu0 0.0
        %686 = vmatprep.subr.mxu0 0.0
        %687 = vmatpush1.xpose.msra.mxu0 0.0
        %688 = vmatprep.subr.mxu0 0.0
        %689 = vmatpush1.xpose.msra.mxu0 0.0
        %690 = vmatprep.subr.mxu0 0.0
        %691 = vmatpush1.xpose.msra.mxu0 0.0
        %692 = vmatprep.subr.mxu0 0.0
        %693 = vmatpush1.xpose.msra.mxu0 0.0
        %694 = vmatprep.subr.mxu0 0.0
        %695 = vmatpush1.xpose.msra.mxu0 0.0
        %696 = vmatprep.subr.mxu0 0.0
        %697 = vmatpush1.xpose.msra.mxu0 0.0
        %698 = vmatprep.subr.mxu0 0.0
        %699 = vmatpush1.xpose.msra.mxu0 0.0
        %700 = vmatprep.subr.mxu0 0.0
        %701 = vmatpush1.xpose.msra.mxu0 0.0
        %702 = vmatprep.subr.mxu0 0.0
        %703 = vmatpush1.xpose.msra.mxu0 0.0
        %704 = vmatprep.subr.mxu0 0.0
        %705 = vmatpush1.xpose.msra.mxu0 0.0
        %706 = vmatprep.subr.mxu0 0.0
        %707 = vmatpush1.xpose.msra.mxu0 0.0
        %708 = vmatprep.subr.mxu0 0.0
        %709 = vmatpush1.xpose.msra.mxu0 0.0
        %710 = vmatprep.subr.mxu0 0.0
        %711 = vmatpush1.xpose.msra.mxu0 0.0
        %712 = vmatprep.mubr.f32.mxu0 0.0
        %713 = vmatmul.mubr.f32.gmra.mrb[0].mxu0 %v637
        %v714 = vpop.f32.mrb[0].mxu0
        %v715 = vadd.f32 0.0, %v714
        %v716 = vpop.f32.mrb[0].mxu0
        %717 = vmatprep.mubr.f32.mxu0 0.0
        %718 = vmatmul.mubr.f32.gmra.mrb[0].mxu0 %v640
        %v719 = vpop.f32.mrb[0].mxu0
        %v720 = vadd.f32 0.0, %v719
        %v721 = vpop.f32.mrb[0].mxu0
        %722 = vdwg.mxu0
        %v723 = vsel %vm374, %v454, -inf
        %724 = vmax.xlane.f32.xlu0 %v723
        %v725 = vpop.xlane.xlu0 %724
        %v726 = vsel %vm374, %v459, -inf
        %727 = vmax.xlane.f32.xlu0 %v726
        %v728 = vpop.xlane.xlu0 %727
        %v729 = vsel %vm374, %v541, -inf
        %730 = vmax.xlane.f32.xlu0 %v729
        %v731 = vpop.xlane.xlu0 %730
        %v732 = vsel %vm374, %v546, -inf
        %733 = vmax.xlane.f32.xlu0 %v732
        %v734 = vpop.xlane.xlu0 %733
        %v735 = vsel %vm374, %v628, -inf
        %736 = vmax.xlane.f32.xlu0 %v735
        %v737 = vpop.xlane.xlu0 %736
        %v738 = vsel %vm374, %v633, -inf
        %739 = vmax.xlane.f32.xlu0 %v738
        %v740 = vpop.xlane.xlu0 %739
        %v741 = vsel %vm374, %v715, -inf
        %742 = vmax.xlane.f32.xlu0 %v741
        %v743 = vpop.xlane.xlu0 %742
        %v744 = vsel %vm374, %v720, -inf
        %745 = vmax.xlane.f32.xlu0 %v744
        %v746 = vpop.xlane.xlu0 %745
        %v747 = vsub.f32 %v454, %v725
        %v748 = vsub.f32 %v459, %v728
        %v749 = vsub.f32 %v541, %v731
        %v750 = vsub.f32 %v546, %v734
        %v751 = vsub.f32 %v628, %v737
        %v752 = vsub.f32 %v633, %v740
        %v753 = vsub.f32 %v715, %v743
        %v754 = vsub.f32 %v720, %v746
        %v755 = vmul.f32 %v747, 1.442695
        %v756 = vpow.pop %v755
        %v757 = vmul.f32 %v748, 1.442695
        %v758 = vpow.pop %v757
        %v759 = vmul.f32 %v749, 1.442695
        %v760 = vpow.pop %v759
        %v761 = vmul.f32 %v750, 1.442695
        %v762 = vpow.pop %v761
        %v763 = vmul.f32 %v751, 1.442695
        %v764 = vpow.pop %v763
        %v765 = vmul.f32 %v752, 1.442695
        %v766 = vpow.pop %v765
        %v767 = vmul.f32 %v753, 1.442695
        %v768 = vpow.pop %v767
        %v769 = vmul.f32 %v754, 1.442695
        %v770 = vpow.pop %v769
        %v771 = vsel %vm374, %v756, 0.0
        %772 = vadd.xlane.f32.xlu0 %v771
        %v773 = vpop.xlane.xlu0 %772
        %v774 = vsel %vm374, %v758, 0.0
        %775 = vadd.xlane.f32.xlu0 %v774
        %v776 = vpop.xlane.xlu0 %775
        %v777 = vsel %vm374, %v760, 0.0
        %778 = vadd.xlane.f32.xlu0 %v777
        %v779 = vpop.xlane.xlu0 %778
        %v780 = vsel %vm374, %v762, 0.0
        %781 = vadd.xlane.f32.xlu0 %v780
        %v782 = vpop.xlane.xlu0 %781
        %v783 = vsel %vm374, %v764, 0.0
        %784 = vadd.xlane.f32.xlu0 %v783
        %v785 = vpop.xlane.xlu0 %784
        %v786 = vsel %vm374, %v766, 0.0
        %787 = vadd.xlane.f32.xlu0 %v786
        %v788 = vpop.xlane.xlu0 %787
        %v789 = vsel %vm374, %v768, 0.0
        %790 = vadd.xlane.f32.xlu0 %v789
        %v791 = vpop.xlane.xlu0 %790
        %v792 = vsel %vm374, %v770, 0.0
        %793 = vadd.xlane.f32.xlu0 %v792
        %v794 = vpop.xlane.xlu0 %793
        %v795 = vrcp.pop %v773
        %v796 = vrcp.pop %v776
        %v797 = vrcp.pop %v779
        %v798 = vrcp.pop %v782
        %v799 = vrcp.pop %v785
        %v800 = vrcp.pop %v788
        %v801 = vrcp.pop %v791
        %v802 = vrcp.pop %v794
        %v803 = vmul.f32 %v756, %v795
        %v804 = vmul.f32 %v758, %v796
        %v805 = vmul.f32 %v760, %v797
        %v806 = vmul.f32 %v762, %v798
        %v807 = vmul.f32 %v764, %v799
        %v808 = vmul.f32 %v766, %v800
        %v809 = vmul.f32 %v768, %v801
        %v810 = vmul.f32 %v770, %v802
        %v812 = vsel %vm374, %v803, 0
        %v815 = vsel %vm374, %v804, 0
        %817 = vmatprep.subr.mxu0 0.0
        %818 = vmatpush1.msra.mxu0 %v348
        %819 = vmatprep.subr.mxu0 0.0
        %820 = vmatpush1.msra.mxu0 %v349
        %821 = vmatprep.subr.mxu0 0.0
        %822 = vmatpush1.msra.mxu0 0.0
        %823 = vmatprep.subr.mxu0 0.0
        %824 = vmatpush1.msra.mxu0 0.0
        %825 = vmatprep.subr.mxu0 0.0
        %826 = vmatpush1.msra.mxu0 0.0
        %827 = vmatprep.subr.mxu0 0.0
        %828 = vmatpush1.msra.mxu0 0.0
        %829 = vmatprep.subr.mxu0 0.0
        %830 = vmatpush1.msra.mxu0 0.0
        %831 = vmatprep.subr.mxu0 0.0
        %832 = vmatpush1.msra.mxu0 0.0
        %833 = vmatprep.subr.mxu0 0.0
        %834 = vmatpush1.msra.mxu0 0.0
        %835 = vmatprep.subr.mxu0 0.0
        %836 = vmatpush1.msra.mxu0 0.0
        %837 = vmatprep.subr.mxu0 0.0
        %838 = vmatpush1.msra.mxu0 0.0
        %839 = vmatprep.subr.mxu0 0.0
        %840 = vmatpush1.msra.mxu0 0.0
        %841 = vmatprep.subr.mxu0 0.0
        %842 = vmatpush1.msra.mxu0 0.0
        %843 = vmatprep.subr.mxu0 0.0
        %844 = vmatpush1.msra.mxu0 0.0
        %845 = vmatprep.subr.mxu0 0.0
        %846 = vmatpush1.msra.mxu0 0.0
        %847 = vmatprep.subr.mxu0 0.0
        %848 = vmatpush1.msra.mxu0 0.0
        %849 = vmatprep.subr.mxu0 0.0
        %850 = vmatpush1.msra.mxu0 0.0
        %851 = vmatprep.subr.mxu0 0.0
        %852 = vmatpush1.msra.mxu0 0.0
        %853 = vmatprep.subr.mxu0 0.0
        %854 = vmatpush1.msra.mxu0 0.0
        %855 = vmatprep.subr.mxu0 0.0
        %856 = vmatpush1.msra.mxu0 0.0
        %857 = vmatprep.subr.mxu0 0.0
        %858 = vmatpush1.msra.mxu0 0.0
        %859 = vmatprep.subr.mxu0 0.0
        %860 = vmatpush1.msra.mxu0 0.0
        %861 = vmatprep.subr.mxu0 0.0
        %862 = vmatpush1.msra.mxu0 0.0
        %863 = vmatprep.subr.mxu0 0.0
        %864 = vmatpush1.msra.mxu0 0.0
        %865 = vmatprep.subr.mxu0 0.0
        %866 = vmatpush1.msra.mxu0 0.0
        %867 = vmatprep.subr.mxu0 0.0
        %868 = vmatpush1.msra.mxu0 0.0
        %869 = vmatprep.subr.mxu0 0.0
        %870 = vmatpush1.msra.mxu0 0.0
        %871 = vmatprep.subr.mxu0 0.0
        %872 = vmatpush1.msra.mxu0 0.0
        %873 = vmatprep.subr.mxu0 0.0
        %874 = vmatpush1.msra.mxu0 0.0
        %875 = vmatprep.subr.mxu0 0.0
        %876 = vmatpush1.msra.mxu0 0.0
        %877 = vmatprep.subr.mxu0 0.0
        %878 = vmatpush1.msra.mxu0 0.0
        %879 = vmatprep.subr.mxu0 0.0
        %880 = vmatpush1.msra.mxu0 0.0
        %881 = vmatprep.mubr.f32.mxu0 0.0
        %882 = vmatmul.mubr.f32.gmra.mrb[0].mxu0 %v812
        %v883 = vpop.f32.mrb[0].mxu0
        %v884 = vadd.f32 0.0, %v883
        %v885 = vpop.f32.mrb[0].mxu0
        %886 = vmatprep.mubr.f32.mxu0 0.0
        %887 = vmatmul.mubr.f32.gmra.mrb[0].mxu0 %v815
        %v888 = vpop.f32.mrb[0].mxu0
        %v889 = vadd.f32 0.0, %v888
        %v890 = vpop.f32.mrb[0].mxu0
        %891 = vdwg.mxu0
        %v893 = vsel %vm374, %v805, 0
        %v896 = vsel %vm374, %v806, 0
        %898 = vmatprep.subr.mxu0 0.0
        %899 = vmatpush1.msra.mxu0 %v350
        %900 = vmatprep.subr.mxu0 0.0
        %901 = vmatpush1.msra.mxu0 %v351
        %902 = vmatprep.subr.mxu0 0.0
        %903 = vmatpush1.msra.mxu0 0.0
        %904 = vmatprep.subr.mxu0 0.0
        %905 = vmatpush1.msra.mxu0 0.0
        %906 = vmatprep.subr.mxu0 0.0
        %907 = vmatpush1.msra.mxu0 0.0
        %908 = vmatprep.subr.mxu0 0.0
        %909 = vmatpush1.msra.mxu0 0.0
        %910 = vmatprep.subr.mxu0 0.0
        %911 = vmatpush1.msra.mxu0 0.0
        %912 = vmatprep.subr.mxu0 0.0
        %913 = vmatpush1.msra.mxu0 0.0
        %914 = vmatprep.subr.mxu0 0.0
        %915 = vmatpush1.msra.mxu0 0.0
        %916 = vmatprep.subr.mxu0 0.0
        %917 = vmatpush1.msra.mxu0 0.0
        %918 = vmatprep.subr.mxu0 0.0
        %919 = vmatpush1.msra.mxu0 0.0
        %920 = vmatprep.subr.mxu0 0.0
        %921 = vmatpush1.msra.mxu0 0.0
        %922 = vmatprep.subr.mxu0 0.0
        %923 = vmatpush1.msra.mxu0 0.0
        %924 = vmatprep.subr.mxu0 0.0
        %925 = vmatpush1.msra.mxu0 0.0
        %926 = vmatprep.subr.mxu0 0.0
        %927 = vmatpush1.msra.mxu0 0.0
        %928 = vmatprep.subr.mxu0 0.0
        %929 = vmatpush1.msra.mxu0 0.0
        %930 = vmatprep.subr.mxu0 0.0
        %931 = vmatpush1.msra.mxu0 0.0
        %932 = vmatprep.subr.mxu0 0.0
        %933 = vmatpush1.msra.mxu0 0.0
        %934 = vmatprep.subr.mxu0 0.0
        %935 = vmatpush1.msra.mxu0 0.0
        %936 = vmatprep.subr.mxu0 0.0
        %937 = vmatpush1.msra.mxu0 0.0
        %938 = vmatprep.subr.mxu0 0.0
        %939 = vmatpush1.msra.mxu0 0.0
        %940 = vmatprep.subr.mxu0 0.0
        %941 = vmatpush1.msra.mxu0 0.0
        %942 = vmatprep.subr.mxu0 0.0
        %943 = vmatpush1.msra.mxu0 0.0
        %944 = vmatprep.subr.mxu0 0.0
        %945 = vmatpush1.msra.mxu0 0.0
        %946 = vmatprep.subr.mxu0 0.0
        %947 = vmatpush1.msra.mxu0 0.0
        %948 = vmatprep.subr.mxu0 0.0
        %949 = vmatpush1.msra.mxu0 0.0
        %950 = vmatprep.subr.mxu0 0.0
        %951 = vmatpush1.msra.mxu0 0.0
        %952 = vmatprep.subr.mxu0 0.0
        %953 = vmatpush1.msra.mxu0 0.0
        %954 = vmatprep.subr.mxu0 0.0
        %955 = vmatpush1.msra.mxu0 0.0
        %956 = vmatprep.subr.mxu0 0.0
        %957 = vmatpush1.msra.mxu0 0.0
        %958 = vmatprep.subr.mxu0 0.0
        %959 = vmatpush1.msra.mxu0 0.0
        %960 = vmatprep.subr.mxu0 0.0
        %961 = vmatpush1.msra.mxu0 0.0
        %962 = vmatprep.mubr.f32.mxu0 0.0
        %963 = vmatmul.mubr.f32.gmra.mrb[0].mxu0 %v893
        %v964 = vpop.f32.mrb[0].mxu0
        %v965 = vadd.f32 0.0, %v964
        %v966 = vpop.f32.mrb[0].mxu0
        %967 = vmatprep.mubr.f32.mxu0 0.0
        %968 = vmatmul.mubr.f32.gmra.mrb[0].mxu0 %v896
        %v969 = vpop.f32.mrb[0].mxu0
        %v970 = vadd.f32 0.0, %v969
        %v971 = vpop.f32.mrb[0].mxu0
        %972 = vdwg.mxu0
        %v974 = vsel %vm374, %v807, 0
        %v977 = vsel %vm374, %v808, 0
        %979 = vmatprep.subr.mxu0 0.0
        %980 = vmatpush1.msra.mxu0 %v352
        %981 = vmatprep.subr.mxu0 0.0
        %982 = vmatpush1.msra.mxu0 %v353
        %983 = vmatprep.subr.mxu0 0.0
        %984 = vmatpush1.msra.mxu0 0.0
        %985 = vmatprep.subr.mxu0 0.0
        %986 = vmatpush1.msra.mxu0 0.0
        %987 = vmatprep.subr.mxu0 0.0
        %988 = vmatpush1.msra.mxu0 0.0
        %989 = vmatprep.subr.mxu0 0.0
        %990 = vmatpush1.msra.mxu0 0.0
        %991 = vmatprep.subr.mxu0 0.0
        %992 = vmatpush1.msra.mxu0 0.0
        %993 = vmatprep.subr.mxu0 0.0
        %994 = vmatpush1.msra.mxu0 0.0
        %995 = vmatprep.subr.mxu0 0.0
        %996 = vmatpush1.msra.mxu0 0.0
        %997 = vmatprep.subr.mxu0 0.0
        %998 = vmatpush1.msra.mxu0 0.0
        %999 = vmatprep.subr.mxu0 0.0
        %1000 = vmatpush1.msra.mxu0 0.0
        %1001 = vmatprep.subr.mxu0 0.0
        %1002 = vmatpush1.msra.mxu0 0.0
        %1003 = vmatprep.subr.mxu0 0.0
        %1004 = vmatpush1.msra.mxu0 0.0
        %1005 = vmatprep.subr.mxu0 0.0
        %1006 = vmatpush1.msra.mxu0 0.0
        %1007 = vmatprep.subr.mxu0 0.0
        %1008 = vmatpush1.msra.mxu0 0.0
        %1009 = vmatprep.subr.mxu0 0.0
        %1010 = vmatpush1.msra.mxu0 0.0
        %1011 = vmatprep.subr.mxu0 0.0
        %1012 = vmatpush1.msra.mxu0 0.0
        %1013 = vmatprep.subr.mxu0 0.0
        %1014 = vmatpush1.msra.mxu0 0.0
        %1015 = vmatprep.subr.mxu0 0.0
        %1016 = vmatpush1.msra.mxu0 0.0
        %1017 = vmatprep.subr.mxu0 0.0
        %1018 = vmatpush1.msra.mxu0 0.0
        %1019 = vmatprep.subr.mxu0 0.0
        %1020 = vmatpush1.msra.mxu0 0.0
        %1021 = vmatprep.subr.mxu0 0.0
        %1022 = vmatpush1.msra.mxu0 0.0
        %1023 = vmatprep.subr.mxu0 0.0
        %1024 = vmatpush1.msra.mxu0 0.0
        %1025 = vmatprep.subr.mxu0 0.0
        %1026 = vmatpush1.msra.mxu0 0.0
        %1027 = vmatprep.subr.mxu0 0.0
        %1028 = vmatpush1.msra.mxu0 0.0
        %1029 = vmatprep.subr.mxu0 0.0
        %1030 = vmatpush1.msra.mxu0 0.0
        %1031 = vmatprep.subr.mxu0 0.0
        %1032 = vmatpush1.msra.mxu0 0.0
        %1033 = vmatprep.subr.mxu0 0.0
        %1034 = vmatpush1.msra.mxu0 0.0
        %1035 = vmatprep.subr.mxu0 0.0
        %1036 = vmatpush1.msra.mxu0 0.0
        %1037 = vmatprep.subr.mxu0 0.0
        %1038 = vmatpush1.msra.mxu0 0.0
        %1039 = vmatprep.subr.mxu0 0.0
        %1040 = vmatpush1.msra.mxu0 0.0
        %1041 = vmatprep.subr.mxu0 0.0
        %1042 = vmatpush1.msra.mxu0 0.0
        %1043 = vmatprep.mubr.f32.mxu0 0.0
        %1044 = vmatmul.mubr.f32.gmra.mrb[0].mxu0 %v974
        %v1045 = vpop.f32.mrb[0].mxu0
        %v1046 = vadd.f32 0.0, %v1045
        %v1047 = vpop.f32.mrb[0].mxu0
        %1048 = vmatprep.mubr.f32.mxu0 0.0
        %1049 = vmatmul.mubr.f32.gmra.mrb[0].mxu0 %v977
        %v1050 = vpop.f32.mrb[0].mxu0
        %v1051 = vadd.f32 0.0, %v1050
        %v1052 = vpop.f32.mrb[0].mxu0
        %1053 = vdwg.mxu0
        %v1055 = vsel %vm374, %v809, 0
        %v1058 = vsel %vm374, %v810, 0
        %1060 = vmatprep.subr.mxu0 0.0
        %1061 = vmatpush1.msra.mxu0 %v354
        %1062 = vmatprep.subr.mxu0 0.0
        %1063 = vmatpush1.msra.mxu0 %v355
        %1064 = vmatprep.subr.mxu0 0.0
        %1065 = vmatpush1.msra.mxu0 0.0
        %1066 = vmatprep.subr.mxu0 0.0
        %1067 = vmatpush1.msra.mxu0 0.0
        %1068 = vmatprep.subr.mxu0 0.0
        %1069 = vmatpush1.msra.mxu0 0.0
        %1070 = vmatprep.subr.mxu0 0.0
        %1071 = vmatpush1.msra.mxu0 0.0
        %1072 = vmatprep.subr.mxu0 0.0
        %1073 = vmatpush1.msra.mxu0 0.0
        %1074 = vmatprep.subr.mxu0 0.0
        %1075 = vmatpush1.msra.mxu0 0.0
        %1076 = vmatprep.subr.mxu0 0.0
        %1077 = vmatpush1.msra.mxu0 0.0
        %1078 = vmatprep.subr.mxu0 0.0
        %1079 = vmatpush1.msra.mxu0 0.0
        %1080 = vmatprep.subr.mxu0 0.0
        %1081 = vmatpush1.msra.mxu0 0.0
        %1082 = vmatprep.subr.mxu0 0.0
        %1083 = vmatpush1.msra.mxu0 0.0
        %1084 = vmatprep.subr.mxu0 0.0
        %1085 = vmatpush1.msra.mxu0 0.0
        %1086 = vmatprep.subr.mxu0 0.0
        %1087 = vmatpush1.msra.mxu0 0.0
        %1088 = vmatprep.subr.mxu0 0.0
        %1089 = vmatpush1.msra.mxu0 0.0
        %1090 = vmatprep.subr.mxu0 0.0
        %1091 = vmatpush1.msra.mxu0 0.0
        %1092 = vmatprep.subr.mxu0 0.0
        %1093 = vmatpush1.msra.mxu0 0.0
        %1094 = vmatprep.subr.mxu0 0.0
        %1095 = vmatpush1.msra.mxu0 0.0
        %1096 = vmatprep.subr.mxu0 0.0
        %1097 = vmatpush1.msra.mxu0 0.0
        %1098 = vmatprep.subr.mxu0 0.0
        %1099 = vmatpush1.msra.mxu0 0.0
        %1100 = vmatprep.subr.mxu0 0.0
        %1101 = vmatpush1.msra.mxu0 0.0
        %1102 = vmatprep.subr.mxu0 0.0
        %1103 = vmatpush1.msra.mxu0 0.0
        %1104 = vmatprep.subr.mxu0 0.0
        %1105 = vmatpush1.msra.mxu0 0.0
        %1106 = vmatprep.subr.mxu0 0.0
        %1107 = vmatpush1.msra.mxu0 0.0
        %1108 = vmatprep.subr.mxu0 0.0
        %1109 = vmatpush1.msra.mxu0 0.0
        %1110 = vmatprep.subr.mxu0 0.0
        %1111 = vmatpush1.msra.mxu0 0.0
        %1112 = vmatprep.subr.mxu0 0.0
        %1113 = vmatpush1.msra.mxu0 0.0
        %1114 = vmatprep.subr.mxu0 0.0
        %1115 = vmatpush1.msra.mxu0 0.0
        %1116 = vmatprep.subr.mxu0 0.0
        %1117 = vmatpush1.msra.mxu0 0.0
        %1118 = vmatprep.subr.mxu0 0.0
        %1119 = vmatpush1.msra.mxu0 0.0
        %1120 = vmatprep.subr.mxu0 0.0
        %1121 = vmatpush1.msra.mxu0 0.0
        %1122 = vmatprep.subr.mxu0 0.0
        %1123 = vmatpush1.msra.mxu0 0.0
        %1124 = vmatprep.mubr.f32.mxu0 0.0
        %1125 = vmatmul.mubr.f32.gmra.mrb[0].mxu0 %v1055
        %v1126 = vpop.f32.mrb[0].mxu0
        %v1127 = vadd.f32 0.0, %v1126
        %v1128 = vpop.f32.mrb[0].mxu0
        %1129 = vmatprep.mubr.f32.mxu0 0.0
        %1130 = vmatmul.mubr.f32.gmra.mrb[0].mxu0 %v1058
        %v1131 = vpop.f32.mrb[0].mxu0
        %v1132 = vadd.f32 0.0, %v1131
        %v1133 = vpop.f32.mrb[0].mxu0
        %1134 = vdwg.mxu0
        %v1135 = vadd.f32 %v348, %v884
        %v1136 = vadd.f32 %v349, %v889
        %v1137 = vadd.f32 %v350, %v965
        %v1138 = vadd.f32 %v351, %v970
        %v1139 = vadd.f32 %v352, %v1046
        %v1140 = vadd.f32 %v353, %v1051
        %v1141 = vadd.f32 %v354, %v1127
        %v1142 = vadd.f32 %v355, %v1132
        %v1144 = vsel %vm374, %v364, 0
        %v1147 = vsel %vm374, %v365, 0
        %1149 = vmatprep.subr.mxu0 0.0
        %1150 = vmatpush1.msra.mxu0 %v1135
        %1151 = vmatprep.subr.mxu0 0.0
        %1152 = vmatpush1.msra.mxu0 %v1136
        %1153 = vmatprep.subr.mxu0 0.0
        %1154 = vmatpush1.msra.mxu0 0.0
        %1155 = vmatprep.subr.mxu0 0.0
        %1156 = vmatpush1.msra.mxu0 0.0
        %1157 = vmatprep.subr.mxu0 0.0
        %1158 = vmatpush1.msra.mxu0 0.0
        %1159 = vmatprep.subr.mxu0 0.0
        %1160 = vmatpush1.msra.mxu0 0.0
        %1161 = vmatprep.subr.mxu0 0.0
        %1162 = vmatpush1.msra.mxu0 0.0
        %1163 = vmatprep.subr.mxu0 0.0
        %1164 = vmatpush1.msra.mxu0 0.0
        %1165 = vmatprep.subr.mxu0 0.0
        %1166 = vmatpush1.msra.mxu0 0.0
        %1167 = vmatprep.subr.mxu0 0.0
        %1168 = vmatpush1.msra.mxu0 0.0
        %1169 = vmatprep.subr.mxu0 0.0
        %1170 = vmatpush1.msra.mxu0 0.0
        %1171 = vmatprep.subr.mxu0 0.0
        %1172 = vmatpush1.msra.mxu0 0.0
        %1173 = vmatprep.subr.mxu0 0.0
        %1174 = vmatpush1.msra.mxu0 0.0
        %1175 = vmatprep.subr.mxu0 0.0
        %1176 = vmatpush1.msra.mxu0 0.0
        %1177 = vmatprep.subr.mxu0 0.0
        %1178 = vmatpush1.msra.mxu0 0.0
        %1179 = vmatprep.subr.mxu0 0.0
        %1180 = vmatpush1.msra.mxu0 0.0
        %1181 = vmatprep.subr.mxu0 0.0
        %1182 = vmatpush1.msra.mxu0 0.0
        %1183 = vmatprep.subr.mxu0 0.0
        %1184 = vmatpush1.msra.mxu0 0.0
        %1185 = vmatprep.subr.mxu0 0.0
        %1186 = vmatpush1.msra.mxu0 0.0
        %1187 = vmatprep.subr.mxu0 0.0
        %1188 = vmatpush1.msra.mxu0 0.0
        %1189 = vmatprep.subr.mxu0 0.0
        %1190 = vmatpush1.msra.mxu0 0.0
        %1191 = vmatprep.subr.mxu0 0.0
        %1192 = vmatpush1.msra.mxu0 0.0
        %1193 = vmatprep.subr.mxu0 0.0
        %1194 = vmatpush1.msra.mxu0 0.0
        %1195 = vmatprep.subr.mxu0 0.0
        %1196 = vmatpush1.msra.mxu0 0.0
        %1197 = vmatprep.subr.mxu0 0.0
        %1198 = vmatpush1.msra.mxu0 0.0
        %1199 = vmatprep.subr.mxu0 0.0
        %1200 = vmatpush1.msra.mxu0 0.0
        %1201 = vmatprep.subr.mxu0 0.0
        %1202 = vmatpush1.msra.mxu0 0.0
        %1203 = vmatprep.subr.mxu0 0.0
        %1204 = vmatpush1.msra.mxu0 0.0
        %1205 = vmatprep.subr.mxu0 0.0
        %1206 = vmatpush1.msra.mxu0 0.0
        %1207 = vmatprep.subr.mxu0 0.0
        %1208 = vmatpush1.msra.mxu0 0.0
        %1209 = vmatprep.subr.mxu0 0.0
        %1210 = vmatpush1.msra.mxu0 0.0
        %1211 = vmatprep.subr.mxu0 0.0
        %1212 = vmatpush1.msra.mxu0 0.0
        %1213 = vmatprep.mubr.f32.mxu0 0.0
        %1214 = vmatmul.mubr.f32.gmra.mrb[0].mxu0 %v1144
        %v1215 = vpop.f32.mrb[0].mxu0
        %v1216 = vadd.f32 0.0, %v1215
        %v1217 = vpop.f32.mrb[0].mxu0
        %1218 = vmatprep.mubr.f32.mxu0 0.0
        %1219 = vmatmul.mubr.f32.gmra.mrb[0].mxu0 %v1147
        %v1220 = vpop.f32.mrb[0].mxu0
        %v1221 = vadd.f32 0.0, %v1220
        %v1222 = vpop.f32.mrb[0].mxu0
        %1223 = vdwg.mxu0
        %1224 = vmatprep.subr.mxu0 0.0
        %1225 = vmatpush1.msra.mxu0 %v1137
        %1226 = vmatprep.subr.mxu0 0.0
        %1227 = vmatpush1.msra.mxu0 %v1138
        %1228 = vmatprep.subr.mxu0 0.0
        %1229 = vmatpush1.msra.mxu0 0.0
        %1230 = vmatprep.subr.mxu0 0.0
        %1231 = vmatpush1.msra.mxu0 0.0
        %1232 = vmatprep.subr.mxu0 0.0
        %1233 = vmatpush1.msra.mxu0 0.0
        %1234 = vmatprep.subr.mxu0 0.0
        %1235 = vmatpush1.msra.mxu0 0.0
        %1236 = vmatprep.subr.mxu0 0.0
        %1237 = vmatpush1.msra.mxu0 0.0
        %1238 = vmatprep.subr.mxu0 0.0
        %1239 = vmatpush1.msra.mxu0 0.0
        %1240 = vmatprep.subr.mxu0 0.0
        %1241 = vmatpush1.msra.mxu0 0.0
        %1242 = vmatprep.subr.mxu0 0.0
        %1243 = vmatpush1.msra.mxu0 0.0
        %1244 = vmatprep.subr.mxu0 0.0
        %1245 = vmatpush1.msra.mxu0 0.0
        %1246 = vmatprep.subr.mxu0 0.0
        %1247 = vmatpush1.msra.mxu0 0.0
        %1248 = vmatprep.subr.mxu0 0.0
        %1249 = vmatpush1.msra.mxu0 0.0
        %1250 = vmatprep.subr.mxu0 0.0
        %1251 = vmatpush1.msra.mxu0 0.0
        %1252 = vmatprep.subr.mxu0 0.0
        %1253 = vmatpush1.msra.mxu0 0.0
        %1254 = vmatprep.subr.mxu0 0.0
        %1255 = vmatpush1.msra.mxu0 0.0
        %1256 = vmatprep.subr.mxu0 0.0
        %1257 = vmatpush1.msra.mxu0 0.0
        %1258 = vmatprep.subr.mxu0 0.0
        %1259 = vmatpush1.msra.mxu0 0.0
        %1260 = vmatprep.subr.mxu0 0.0
        %1261 = vmatpush1.msra.mxu0 0.0
        %1262 = vmatprep.subr.mxu0 0.0
        %1263 = vmatpush1.msra.mxu0 0.0
        %1264 = vmatprep.subr.mxu0 0.0
        %1265 = vmatpush1.msra.mxu0 0.0
        %1266 = vmatprep.subr.mxu0 0.0
        %1267 = vmatpush1.msra.mxu0 0.0
        %1268 = vmatprep.subr.mxu0 0.0
        %1269 = vmatpush1.msra.mxu0 0.0
        %1270 = vmatprep.subr.mxu0 0.0
        %1271 = vmatpush1.msra.mxu0 0.0
        %1272 = vmatprep.subr.mxu0 0.0
        %1273 = vmatpush1.msra.mxu0 0.0
        %1274 = vmatprep.subr.mxu0 0.0
        %1275 = vmatpush1.msra.mxu0 0.0
        %1276 = vmatprep.subr.mxu0 0.0
        %1277 = vmatpush1.msra.mxu0 0.0
        %1278 = vmatprep.subr.mxu0 0.0
        %1279 = vmatpush1.msra.mxu0 0.0
        %1280 = vmatprep.subr.mxu0 0.0
        %1281 = vmatpush1.msra.mxu0 0.0
        %1282 = vmatprep.subr.mxu0 0.0
        %1283 = vmatpush1.msra.mxu0 0.0
        %1284 = vmatprep.subr.mxu0 0.0
        %1285 = vmatpush1.msra.mxu0 0.0
        %1286 = vmatprep.subr.mxu0 0.0
        %1287 = vmatpush1.msra.mxu0 0.0
        %1288 = vmatprep.mubr.f32.mxu0 0.0
        %1289 = vmatmul.mubr.f32.gmra.mrb[0].mxu0 %v1144
        %v1290 = vpop.f32.mrb[0].mxu0
        %v1291 = vadd.f32 0.0, %v1290
        %v1292 = vpop.f32.mrb[0].mxu0
        %1293 = vmatprep.mubr.f32.mxu0 0.0
        %1294 = vmatmul.mubr.f32.gmra.mrb[0].mxu0 %v1147
        %v1295 = vpop.f32.mrb[0].mxu0
        %v1296 = vadd.f32 0.0, %v1295
        %v1297 = vpop.f32.mrb[0].mxu0
        %1298 = vdwg.mxu0
        %1299 = vmatprep.subr.mxu0 0.0
        %1300 = vmatpush1.msra.mxu0 %v1139
        %1301 = vmatprep.subr.mxu0 0.0
        %1302 = vmatpush1.msra.mxu0 %v1140
        %1303 = vmatprep.subr.mxu0 0.0
        %1304 = vmatpush1.msra.mxu0 0.0
        %1305 = vmatprep.subr.mxu0 0.0
        %1306 = vmatpush1.msra.mxu0 0.0
        %1307 = vmatprep.subr.mxu0 0.0
        %1308 = vmatpush1.msra.mxu0 0.0
        %1309 = vmatprep.subr.mxu0 0.0
        %1310 = vmatpush1.msra.mxu0 0.0
        %1311 = vmatprep.subr.mxu0 0.0
        %1312 = vmatpush1.msra.mxu0 0.0
        %1313 = vmatprep.subr.mxu0 0.0
        %1314 = vmatpush1.msra.mxu0 0.0
        %1315 = vmatprep.subr.mxu0 0.0
        %1316 = vmatpush1.msra.mxu0 0.0
        %1317 = vmatprep.subr.mxu0 0.0
        %1318 = vmatpush1.msra.mxu0 0.0
        %1319 = vmatprep.subr.mxu0 0.0
        %1320 = vmatpush1.msra.mxu0 0.0
        %1321 = vmatprep.subr.mxu0 0.0
        %1322 = vmatpush1.msra.mxu0 0.0
        %1323 = vmatprep.subr.mxu0 0.0
        %1324 = vmatpush1.msra.mxu0 0.0
        %1325 = vmatprep.subr.mxu0 0.0
        %1326 = vmatpush1.msra.mxu0 0.0
        %1327 = vmatprep.subr.mxu0 0.0
        %1328 = vmatpush1.msra.mxu0 0.0
        %1329 = vmatprep.subr.mxu0 0.0
        %1330 = vmatpush1.msra.mxu0 0.0
        %1331 = vmatprep.subr.mxu0 0.0
        %1332 = vmatpush1.msra.mxu0 0.0
        %1333 = vmatprep.subr.mxu0 0.0
        %1334 = vmatpush1.msra.mxu0 0.0
        %1335 = vmatprep.subr.mxu0 0.0
        %1336 = vmatpush1.msra.mxu0 0.0
        %1337 = vmatprep.subr.mxu0 0.0
        %1338 = vmatpush1.msra.mxu0 0.0
        %1339 = vmatprep.subr.mxu0 0.0
        %1340 = vmatpush1.msra.mxu0 0.0
        %1341 = vmatprep.subr.mxu0 0.0
        %1342 = vmatpush1.msra.mxu0 0.0
        %1343 = vmatprep.subr.mxu0 0.0
        %1344 = vmatpush1.msra.mxu0 0.0
        %1345 = vmatprep.subr.mxu0 0.0
        %1346 = vmatpush1.msra.mxu0 0.0
        %1347 = vmatprep.subr.mxu0 0.0
        %1348 = vmatpush1.msra.mxu0 0.0
        %1349 = vmatprep.subr.mxu0 0.0
        %1350 = vmatpush1.msra.mxu0 0.0
        %1351 = vmatprep.subr.mxu0 0.0
        %1352 = vmatpush1.msra.mxu0 0.0
        %1353 = vmatprep.subr.mxu0 0.0
        %1354 = vmatpush1.msra.mxu0 0.0
        %1355 = vmatprep.subr.mxu0 0.0
        %1356 = vmatpush1.msra.mxu0 0.0
        %1357 = vmatprep.subr.mxu0 0.0
        %1358 = vmatpush1.msra.mxu0 0.0
        %1359 = vmatprep.subr.mxu0 0.0
        %1360 = vmatpush1.msra.mxu0 0.0
        %1361 = vmatprep.subr.mxu0 0.0
        %1362 = vmatpush1.msra.mxu0 0.0
        %1363 = vmatprep.mubr.f32.mxu0 0.0
        %1364 = vmatmul.mubr.f32.gmra.mrb[0].mxu0 %v1144
        %v1365 = vpop.f32.mrb[0].mxu0
        %v1366 = vadd.f32 0.0, %v1365
        %v1367 = vpop.f32.mrb[0].mxu0
        %1368 = vmatprep.mubr.f32.mxu0 0.0
        %1369 = vmatmul.mubr.f32.gmra.mrb[0].mxu0 %v1147
        %v1370 = vpop.f32.mrb[0].mxu0
        %v1371 = vadd.f32 0.0, %v1370
        %v1372 = vpop.f32.mrb[0].mxu0
        %1373 = vdwg.mxu0
        %1374 = vmatprep.subr.mxu0 0.0
        %1375 = vmatpush1.msra.mxu0 %v1141
        %1376 = vmatprep.subr.mxu0 0.0
        %1377 = vmatpush1.msra.mxu0 %v1142
        %1378 = vmatprep.subr.mxu0 0.0
        %1379 = vmatpush1.msra.mxu0 0.0
        %1380 = vmatprep.subr.mxu0 0.0
        %1381 = vmatpush1.msra.mxu0 0.0
        %1382 = vmatprep.subr.mxu0 0.0
        %1383 = vmatpush1.msra.mxu0 0.0
        %1384 = vmatprep.subr.mxu0 0.0
        %1385 = vmatpush1.msra.mxu0 0.0
        %1386 = vmatprep.subr.mxu0 0.0
        %1387 = vmatpush1.msra.mxu0 0.0
        %1388 = vmatprep.subr.mxu0 0.0
        %1389 = vmatpush1.msra.mxu0 0.0
        %1390 = vmatprep.subr.mxu0 0.0
        %1391 = vmatpush1.msra.mxu0 0.0
        %1392 = vmatprep.subr.mxu0 0.0
        %1393 = vmatpush1.msra.mxu0 0.0
        %1394 = vmatprep.subr.mxu0 0.0
        %1395 = vmatpush1.msra.mxu0 0.0
        %1396 = vmatprep.subr.mxu0 0.0
        %1397 = vmatpush1.msra.mxu0 0.0
        %1398 = vmatprep.subr.mxu0 0.0
        %1399 = vmatpush1.msra.mxu0 0.0
        %1400 = vmatprep.subr.mxu0 0.0
        %1401 = vmatpush1.msra.mxu0 0.0
        %1402 = vmatprep.subr.mxu0 0.0
        %1403 = vmatpush1.msra.mxu0 0.0
        %1404 = vmatprep.subr.mxu0 0.0
        %1405 = vmatpush1.msra.mxu0 0.0
        %1406 = vmatprep.subr.mxu0 0.0
        %1407 = vmatpush1.msra.mxu0 0.0
        %1408 = vmatprep.subr.mxu0 0.0
        %1409 = vmatpush1.msra.mxu0 0.0
        %1410 = vmatprep.subr.mxu0 0.0
        %1411 = vmatpush1.msra.mxu0 0.0
        %1412 = vmatprep.subr.mxu0 0.0
        %1413 = vmatpush1.msra.mxu0 0.0
        %1414 = vmatprep.subr.mxu0 0.0
        %1415 = vmatpush1.msra.mxu0 0.0
        %1416 = vmatprep.subr.mxu0 0.0
        %1417 = vmatpush1.msra.mxu0 0.0
        %1418 = vmatprep.subr.mxu0 0.0
        %1419 = vmatpush1.msra.mxu0 0.0
        %1420 = vmatprep.subr.mxu0 0.0
        %1421 = vmatpush1.msra.mxu0 0.0
        %1422 = vmatprep.subr.mxu0 0.0
        %1423 = vmatpush1.msra.mxu0 0.0
        %1424 = vmatprep.subr.mxu0 0.0
        %1425 = vmatpush1.msra.mxu0 0.0
        %1426 = vmatprep.subr.mxu0 0.0
        %1427 = vmatpush1.msra.mxu0 0.0
        %1428 = vmatprep.subr.mxu0 0.0
        %1429 = vmatpush1.msra.mxu0 0.0
        %1430 = vmatprep.subr.mxu0 0.0
        %1431 = vmatpush1.msra.mxu0 0.0
        %1432 = vmatprep.subr.mxu0 0.0
        %1433 = vmatpush1.msra.mxu0 0.0
        %1434 = vmatprep.subr.mxu0 0.0
        %1435 = vmatpush1.msra.mxu0 0.0
        %1436 = vmatprep.subr.mxu0 0.0
        %1437 = vmatpush1.msra.mxu0 0.0
        %1438 = vmatprep.mubr.f32.mxu0 0.0
        %1439 = vmatmul.mubr.f32.gmra.mrb[0].mxu0 %v1144
        %v1440 = vpop.f32.mrb[0].mxu0
        %v1441 = vadd.f32 0.0, %v1440
        %v1442 = vpop.f32.mrb[0].mxu0
        %1443 = vmatprep.mubr.f32.mxu0 0.0
        %1444 = vmatmul.mubr.f32.gmra.mrb[0].mxu0 %v1147
        %v1445 = vpop.f32.mrb[0].mxu0
        %v1446 = vadd.f32 0.0, %v1445
        %v1447 = vpop.f32.mrb[0].mxu0
        %1448 = vdwg.mxu0
        %v1449 = vsub.f32 %v1135, %v1216
        %v1450 = vsub.f32 %v1136, %v1221
        %v1451 = vsub.f32 %v1137, %v1291
        %v1452 = vsub.f32 %v1138, %v1296
        %v1453 = vsub.f32 %v1139, %v1366
        %v1454 = vsub.f32 %v1140, %v1371
        %v1455 = vsub.f32 %v1141, %v1441
        %v1456 = vsub.f32 %v1142, %v1446
        %v1457 = vmul.f32 %v1449, 0.25
        %v1458 = vmul.f32 %v1450, 0.25
        %v1459 = vmul.f32 %v1451, 0.25
        %v1460 = vmul.f32 %v1452, 0.25
        %v1461 = vmul.f32 %v1453, 0.25
        %v1462 = vmul.f32 %v1454, 0.25
        %v1463 = vmul.f32 %v1455, 0.25
        %v1464 = vmul.f32 %v1456, 0.25
        %v1466 = vsel %vm374, %v1457, 0
        %v1469 = vsel %vm374, %v1458, 0
        %v1472 = vsel %vm374, %v356, 0
        %v1475 = vsel %vm374, %v357, 0
        %1477 = vmatprep.subr.mxu0 0.0
        %1478 = vmatpush1.xpose.msra.mxu0 %v1472
        %1479 = vmatprep.subr.mxu0 0.0
        %1480 = vmatpush1.xpose.msra.mxu0 %v1475
        %1481 = vmatprep.subr.mxu0 0.0
        %1482 = vmatpush1.xpose.msra.mxu0 0.0
        %1483 = vmatprep.subr.mxu0 0.0
        %1484 = vmatpush1.xpose.msra.mxu0 0.0
        %1485 = vmatprep.subr.mxu0 0.0
        %1486 = vmatpush1.xpose.msra.mxu0 0.0
        %1487 = vmatprep.subr.mxu0 0.0
        %1488 = vmatpush1.xpose.msra.mxu0 0.0
        %1489 = vmatprep.subr.mxu0 0.0
        %1490 = vmatpush1.xpose.msra.mxu0 0.0
        %1491 = vmatprep.subr.mxu0 0.0
        %1492 = vmatpush1.xpose.msra.mxu0 0.0
        %1493 = vmatprep.subr.mxu0 0.0
        %1494 = vmatpush1.xpose.msra.mxu0 0.0
        %1495 = vmatprep.subr.mxu0 0.0
        %1496 = vmatpush1.xpose.msra.mxu0 0.0
        %1497 = vmatprep.subr.mxu0 0.0
        %1498 = vmatpush1.xpose.msra.mxu0 0.0
        %1499 = vmatprep.subr.mxu0 0.0
        %1500 = vmatpush1.xpose.msra.mxu0 0.0
        %1501 = vmatprep.subr.mxu0 0.0
        %1502 = vmatpush1.xpose.msra.mxu0 0.0
        %1503 = vmatprep.subr.mxu0 0.0
        %1504 = vmatpush1.xpose.msra.mxu0 0.0
        %1505 = vmatprep.subr.mxu0 0.0
        %1506 = vmatpush1.xpose.msra.mxu0 0.0
        %1507 = vmatprep.subr.mxu0 0.0
        %1508 = vmatpush1.xpose.msra.mxu0 0.0
        %1509 = vmatprep.subr.mxu0 0.0
        %1510 = vmatpush1.xpose.msra.mxu0 0.0
        %1511 = vmatprep.subr.mxu0 0.0
        %1512 = vmatpush1.xpose.msra.mxu0 0.0
        %1513 = vmatprep.subr.mxu0 0.0
        %1514 = vmatpush1.xpose.msra.mxu0 0.0
        %1515 = vmatprep.subr.mxu0 0.0
        %1516 = vmatpush1.xpose.msra.mxu0 0.0
        %1517 = vmatprep.subr.mxu0 0.0
        %1518 = vmatpush1.xpose.msra.mxu0 0.0
        %1519 = vmatprep.subr.mxu0 0.0
        %1520 = vmatpush1.xpose.msra.mxu0 0.0
        %1521 = vmatprep.subr.mxu0 0.0
        %1522 = vmatpush1.xpose.msra.mxu0 0.0
        %1523 = vmatprep.subr.mxu0 0.0
        %1524 = vmatpush1.xpose.msra.mxu0 0.0
        %1525 = vmatprep.subr.mxu0 0.0
        %1526 = vmatpush1.xpose.msra.mxu0 0.0
        %1527 = vmatprep.subr.mxu0 0.0
        %1528 = vmatpush1.xpose.msra.mxu0 0.0
        %1529 = vmatprep.subr.mxu0 0.0
        %1530 = vmatpush1.xpose.msra.mxu0 0.0
        %1531 = vmatprep.subr.mxu0 0.0
        %1532 = vmatpush1.xpose.msra.mxu0 0.0
        %1533 = vmatprep.subr.mxu0 0.0
        %1534 = vmatpush1.xpose.msra.mxu0 0.0
        %1535 = vmatprep.subr.mxu0 0.0
        %1536 = vmatpush1.xpose.msra.mxu0 0.0
        %1537 = vmatprep.subr.mxu0 0.0
        %1538 = vmatpush1.xpose.msra.mxu0 0.0
        %1539 = vmatprep.subr.mxu0 0.0
        %1540 = vmatpush1.xpose.msra.mxu0 0.0
        %1541 = vmatprep.mubr.f32.mxu0 0.0
        %1542 = vmatmul.mubr.f32.gmra.mrb[0].mxu0 %v1466
        %v1543 = vpop.f32.mrb[0].mxu0
        %v1544 = vadd.f32 0.0, %v1543
        %v1545 = vpop.f32.mrb[0].mxu0
        %1546 = vmatprep.mubr.f32.mxu0 0.0
        %1547 = vmatmul.mubr.f32.gmra.mrb[0].mxu0 %v1469
        %v1548 = vpop.f32.mrb[0].mxu0
        %v1549 = vadd.f32 0.0, %v1548
        %v1550 = vpop.f32.mrb[0].mxu0
        %1551 = vdwg.mxu0
        %v1553 = vsel %vm374, %v1459, 0
        %v1556 = vsel %vm374, %v1460, 0
        %v1559 = vsel %vm374, %v358, 0
        %v1562 = vsel %vm374, %v359, 0
        %1564 = vmatprep.subr.mxu0 0.0
        %1565 = vmatpush1.xpose.msra.mxu0 %v1559
        %1566 = vmatprep.subr.mxu0 0.0
        %1567 = vmatpush1.xpose.msra.mxu0 %v1562
        %1568 = vmatprep.subr.mxu0 0.0
        %1569 = vmatpush1.xpose.msra.mxu0 0.0
        %1570 = vmatprep.subr.mxu0 0.0
        %1571 = vmatpush1.xpose.msra.mxu0 0.0
        %1572 = vmatprep.subr.mxu0 0.0
        %1573 = vmatpush1.xpose.msra.mxu0 0.0
        %1574 = vmatprep.subr.mxu0 0.0
        %1575 = vmatpush1.xpose.msra.mxu0 0.0
        %1576 = vmatprep.subr.mxu0 0.0
        %1577 = vmatpush1.xpose.msra.mxu0 0.0
        %1578 = vmatprep.subr.mxu0 0.0
        %1579 = vmatpush1.xpose.msra.mxu0 0.0
        %1580 = vmatprep.subr.mxu0 0.0
        %1581 = vmatpush1.xpose.msra.mxu0 0.0
        %1582 = vmatprep.subr.mxu0 0.0
        %1583 = vmatpush1.xpose.msra.mxu0 0.0
        %1584 = vmatprep.subr.mxu0 0.0
        %1585 = vmatpush1.xpose.msra.mxu0 0.0
        %1586 = vmatprep.subr.mxu0 0.0
        %1587 = vmatpush1.xpose.msra.mxu0 0.0
        %1588 = vmatprep.subr.mxu0 0.0
        %1589 = vmatpush1.xpose.msra.mxu0 0.0
        %1590 = vmatprep.subr.mxu0 0.0
        %1591 = vmatpush1.xpose.msra.mxu0 0.0
        %1592 = vmatprep.subr.mxu0 0.0
        %1593 = vmatpush1.xpose.msra.mxu0 0.0
        %1594 = vmatprep.subr.mxu0 0.0
        %1595 = vmatpush1.xpose.msra.mxu0 0.0
        %1596 = vmatprep.subr.mxu0 0.0
        %1597 = vmatpush1.xpose.msra.mxu0 0.0
        %1598 = vmatprep.subr.mxu0 0.0
        %1599 = vmatpush1.xpose.msra.mxu0 0.0
        %1600 = vmatprep.subr.mxu0 0.0
        %1601 = vmatpush1.xpose.msra.mxu0 0.0
        %1602 = vmatprep.subr.mxu0 0.0
        %1603 = vmatpush1.xpose.msra.mxu0 0.0
        %1604 = vmatprep.subr.mxu0 0.0
        %1605 = vmatpush1.xpose.msra.mxu0 0.0
        %1606 = vmatprep.subr.mxu0 0.0
        %1607 = vmatpush1.xpose.msra.mxu0 0.0
        %1608 = vmatprep.subr.mxu0 0.0
        %1609 = vmatpush1.xpose.msra.mxu0 0.0
        %1610 = vmatprep.subr.mxu0 0.0
        %1611 = vmatpush1.xpose.msra.mxu0 0.0
        %1612 = vmatprep.subr.mxu0 0.0
        %1613 = vmatpush1.xpose.msra.mxu0 0.0
        %1614 = vmatprep.subr.mxu0 0.0
        %1615 = vmatpush1.xpose.msra.mxu0 0.0
        %1616 = vmatprep.subr.mxu0 0.0
        %1617 = vmatpush1.xpose.msra.mxu0 0.0
        %1618 = vmatprep.subr.mxu0 0.0
        %1619 = vmatpush1.xpose.msra.mxu0 0.0
        %1620 = vmatprep.subr.mxu0 0.0
        %1621 = vmatpush1.xpose.msra.mxu0 0.0
        %1622 = vmatprep.subr.mxu0 0.0
        %1623 = vmatpush1.xpose.msra.mxu0 0.0
        %1624 = vmatprep.subr.mxu0 0.0
        %1625 = vmatpush1.xpose.msra.mxu0 0.0
        %1626 = vmatprep.subr.mxu0 0.0
        %1627 = vmatpush1.xpose.msra.mxu0 0.0
        %1628 = vmatprep.mubr.f32.mxu0 0.0
        %1629 = vmatmul.mubr.f32.gmra.mrb[0].mxu0 %v1553
        %v1630 = vpop.f32.mrb[0].mxu0
        %v1631 = vadd.f32 0.0, %v1630
        %v1632 = vpop.f32.mrb[0].mxu0
        %1633 = vmatprep.mubr.f32.mxu0 0.0
        %1634 = vmatmul.mubr.f32.gmra.mrb[0].mxu0 %v1556
        %v1635 = vpop.f32.mrb[0].mxu0
        %v1636 = vadd.f32 0.0, %v1635
        %v1637 = vpop.f32.mrb[0].mxu0
        %1638 = vdwg.mxu0
        %v1640 = vsel %vm374, %v1461, 0
        %v1643 = vsel %vm374, %v1462, 0
        %v1646 = vsel %vm374, %v360, 0
        %v1649 = vsel %vm374, %v361, 0
        %1651 = vmatprep.subr.mxu0 0.0
        %1652 = vmatpush1.xpose.msra.mxu0 %v1646
        %1653 = vmatprep.subr.mxu0 0.0
        %1654 = vmatpush1.xpose.msra.mxu0 %v1649
        %1655 = vmatprep.subr.mxu0 0.0
        %1656 = vmatpush1.xpose.msra.mxu0 0.0
        %1657 = vmatprep.subr.mxu0 0.0
        %1658 = vmatpush1.xpose.msra.mxu0 0.0
        %1659 = vmatprep.subr.mxu0 0.0
        %1660 = vmatpush1.xpose.msra.mxu0 0.0
        %1661 = vmatprep.subr.mxu0 0.0
        %1662 = vmatpush1.xpose.msra.mxu0 0.0
        %1663 = vmatprep.subr.mxu0 0.0
        %1664 = vmatpush1.xpose.msra.mxu0 0.0
        %1665 = vmatprep.subr.mxu0 0.0
        %1666 = vmatpush1.xpose.msra.mxu0 0.0
        %1667 = vmatprep.subr.mxu0 0.0
        %1668 = vmatpush1.xpose.msra.mxu0 0.0
        %1669 = vmatprep.subr.mxu0 0.0
        %1670 = vmatpush1.xpose.msra.mxu0 0.0
        %1671 = vmatprep.subr.mxu0 0.0
        %1672 = vmatpush1.xpose.msra.mxu0 0.0
        %1673 = vmatprep.subr.mxu0 0.0
        %1674 = vmatpush1.xpose.msra.mxu0 0.0
        %1675 = vmatprep.subr.mxu0 0.0
        %1676 = vmatpush1.xpose.msra.mxu0 0.0
        %1677 = vmatprep.subr.mxu0 0.0
        %1678 = vmatpush1.xpose.msra.mxu0 0.0
        %1679 = vmatprep.subr.mxu0 0.0
        %1680 = vmatpush1.xpose.msra.mxu0 0.0
        %1681 = vmatprep.subr.mxu0 0.0
        %1682 = vmatpush1.xpose.msra.mxu0 0.0
        %1683 = vmatprep.subr.mxu0 0.0
        %1684 = vmatpush1.xpose.msra.mxu0 0.0
        %1685 = vmatprep.subr.mxu0 0.0
        %1686 = vmatpush1.xpose.msra.mxu0 0.0
        %1687 = vmatprep.subr.mxu0 0.0
        %1688 = vmatpush1.xpose.msra.mxu0 0.0
        %1689 = vmatprep.subr.mxu0 0.0
        %1690 = vmatpush1.xpose.msra.mxu0 0.0
        %1691 = vmatprep.subr.mxu0 0.0
        %1692 = vmatpush1.xpose.msra.mxu0 0.0
        %1693 = vmatprep.subr.mxu0 0.0
        %1694 = vmatpush1.xpose.msra.mxu0 0.0
        %1695 = vmatprep.subr.mxu0 0.0
        %1696 = vmatpush1.xpose.msra.mxu0 0.0
        %1697 = vmatprep.subr.mxu0 0.0
        %1698 = vmatpush1.xpose.msra.mxu0 0.0
        %1699 = vmatprep.subr.mxu0 0.0
        %1700 = vmatpush1.xpose.msra.mxu0 0.0
        %1701 = vmatprep.subr.mxu0 0.0
        %1702 = vmatpush1.xpose.msra.mxu0 0.0
        %1703 = vmatprep.subr.mxu0 0.0
        %1704 = vmatpush1.xpose.msra.mxu0 0.0
        %1705 = vmatprep.subr.mxu0 0.0
        %1706 = vmatpush1.xpose.msra.mxu0 0.0
        %1707 = vmatprep.subr.mxu0 0.0
        %1708 = vmatpush1.xpose.msra.mxu0 0.0
        %1709 = vmatprep.subr.mxu0 0.0
        %1710 = vmatpush1.xpose.msra.mxu0 0.0
        %1711 = vmatprep.subr.mxu0 0.0
        %1712 = vmatpush1.xpose.msra.mxu0 0.0
        %1713 = vmatprep.subr.mxu0 0.0
        %1714 = vmatpush1.xpose.msra.mxu0 0.0
        %1715 = vmatprep.mubr.f32.mxu0 0.0
        %1716 = vmatmul.mubr.f32.gmra.mrb[0].mxu0 %v1640
        %v1717 = vpop.f32.mrb[0].mxu0
        %v1718 = vadd.f32 0.0, %v1717
        %v1719 = vpop.f32.mrb[0].mxu0
        %1720 = vmatprep.mubr.f32.mxu0 0.0
        %1721 = vmatmul.mubr.f32.gmra.mrb[0].mxu0 %v1643
        %v1722 = vpop.f32.mrb[0].mxu0
        %v1723 = vadd.f32 0.0, %v1722
        %v1724 = vpop.f32.mrb[0].mxu0
        %1725 = vdwg.mxu0
        %v1727 = vsel %vm374, %v1463, 0
        %v1730 = vsel %vm374, %v1464, 0
        %v1733 = vsel %vm374, %v362, 0
        %v1736 = vsel %vm374, %v363, 0
        %1738 = vmatprep.subr.mxu0 0.0
        %1739 = vmatpush1.xpose.msra.mxu0 %v1733
        %1740 = vmatprep.subr.mxu0 0.0
        %1741 = vmatpush1.xpose.msra.mxu0 %v1736
        %1742 = vmatprep.subr.mxu0 0.0
        %1743 = vmatpush1.xpose.msra.mxu0 0.0
        %1744 = vmatprep.subr.mxu0 0.0
        %1745 = vmatpush1.xpose.msra.mxu0 0.0
        %1746 = vmatprep.subr.mxu0 0.0
        %1747 = vmatpush1.xpose.msra.mxu0 0.0
        %1748 = vmatprep.subr.mxu0 0.0
        %1749 = vmatpush1.xpose.msra.mxu0 0.0
        %1750 = vmatprep.subr.mxu0 0.0
        %1751 = vmatpush1.xpose.msra.mxu0 0.0
        %1752 = vmatprep.subr.mxu0 0.0
        %1753 = vmatpush1.xpose.msra.mxu0 0.0
        %1754 = vmatprep.subr.mxu0 0.0
        %1755 = vmatpush1.xpose.msra.mxu0 0.0
        %1756 = vmatprep.subr.mxu0 0.0
        %1757 = vmatpush1.xpose.msra.mxu0 0.0
        %1758 = vmatprep.subr.mxu0 0.0
        %1759 = vmatpush1.xpose.msra.mxu0 0.0
        %1760 = vmatprep.subr.mxu0 0.0
        %1761 = vmatpush1.xpose.msra.mxu0 0.0
        %1762 = vmatprep.subr.mxu0 0.0
        %1763 = vmatpush1.xpose.msra.mxu0 0.0
        %1764 = vmatprep.subr.mxu0 0.0
        %1765 = vmatpush1.xpose.msra.mxu0 0.0
        %1766 = vmatprep.subr.mxu0 0.0
        %1767 = vmatpush1.xpose.msra.mxu0 0.0
        %1768 = vmatprep.subr.mxu0 0.0
        %1769 = vmatpush1.xpose.msra.mxu0 0.0
        %1770 = vmatprep.subr.mxu0 0.0
        %1771 = vmatpush1.xpose.msra.mxu0 0.0
        %1772 = vmatprep.subr.mxu0 0.0
        %1773 = vmatpush1.xpose.msra.mxu0 0.0
        %1774 = vmatprep.subr.mxu0 0.0
        %1775 = vmatpush1.xpose.msra.mxu0 0.0
        %1776 = vmatprep.subr.mxu0 0.0
        %1777 = vmatpush1.xpose.msra.mxu0 0.0
        %1778 = vmatprep.subr.mxu0 0.0
        %1779 = vmatpush1.xpose.msra.mxu0 0.0
        %1780 = vmatprep.subr.mxu0 0.0
        %1781 = vmatpush1.xpose.msra.mxu0 0.0
        %1782 = vmatprep.subr.mxu0 0.0
        %1783 = vmatpush1.xpose.msra.mxu0 0.0
        %1784 = vmatprep.subr.mxu0 0.0
        %1785 = vmatpush1.xpose.msra.mxu0 0.0
        %1786 = vmatprep.subr.mxu0 0.0
        %1787 = vmatpush1.xpose.msra.mxu0 0.0
        %1788 = vmatprep.subr.mxu0 0.0
        %1789 = vmatpush1.xpose.msra.mxu0 0.0
        %1790 = vmatprep.subr.mxu0 0.0
        %1791 = vmatpush1.xpose.msra.mxu0 0.0
        %1792 = vmatprep.subr.mxu0 0.0
        %1793 = vmatpush1.xpose.msra.mxu0 0.0
        %1794 = vmatprep.subr.mxu0 0.0
        %1795 = vmatpush1.xpose.msra.mxu0 0.0
        %1796 = vmatprep.subr.mxu0 0.0
        %1797 = vmatpush1.xpose.msra.mxu0 0.0
        %1798 = vmatprep.subr.mxu0 0.0
        %1799 = vmatpush1.xpose.msra.mxu0 0.0
        %1800 = vmatprep.subr.mxu0 0.0
        %1801 = vmatpush1.xpose.msra.mxu0 0.0
        %1802 = vmatprep.mubr.f32.mxu0 0.0
        %1803 = vmatmul.mubr.f32.gmra.mrb[0].mxu0 %v1727
        %v1804 = vpop.f32.mrb[0].mxu0
        %v1805 = vadd.f32 0.0, %v1804
        %v1806 = vpop.f32.mrb[0].mxu0
        %1807 = vmatprep.mubr.f32.mxu0 0.0
        %1808 = vmatmul.mubr.f32.gmra.mrb[0].mxu0 %v1730
        %v1809 = vpop.f32.mrb[0].mxu0
        %v1810 = vadd.f32 0.0, %v1809
        %v1811 = vpop.f32.mrb[0].mxu0
        %1812 = vdwg.mxu0
        %v1813 = vsel %vm374, %v1544, -inf
        %1814 = vmax.xlane.f32.xlu0 %v1813
        %v1815 = vpop.xlane.xlu0 %1814
        %v1816 = vsel %vm374, %v1549, -inf
        %1817 = vmax.xlane.f32.xlu0 %v1816
        %v1818 = vpop.xlane.xlu0 %1817
        %v1819 = vsel %vm374, %v1631, -inf
        %1820 = vmax.xlane.f32.xlu0 %v1819
        %v1821 = vpop.xlane.xlu0 %1820
        %v1822 = vsel %vm374, %v1636, -inf
        %1823 = vmax.xlane.f32.xlu0 %v1822
        %v1824 = vpop.xlane.xlu0 %1823
        %v1825 = vsel %vm374, %v1718, -inf
        %1826 = vmax.xlane.f32.xlu0 %v1825
        %v1827 = vpop.xlane.xlu0 %1826
        %v1828 = vsel %vm374, %v1723, -inf
        %1829 = vmax.xlane.f32.xlu0 %v1828
        %v1830 = vpop.xlane.xlu0 %1829
        %v1831 = vsel %vm374, %v1805, -inf
        %1832 = vmax.xlane.f32.xlu0 %v1831
        %v1833 = vpop.xlane.xlu0 %1832
        %v1834 = vsel %vm374, %v1810, -inf
        %1835 = vmax.xlane.f32.xlu0 %v1834
        %v1836 = vpop.xlane.xlu0 %1835
        %v1837 = vsub.f32 %v1544, %v1815
        %v1838 = vsub.f32 %v1549, %v1818
        %v1839 = vsub.f32 %v1631, %v1821
        %v1840 = vsub.f32 %v1636, %v1824
        %v1841 = vsub.f32 %v1718, %v1827
        %v1842 = vsub.f32 %v1723, %v1830
        %v1843 = vsub.f32 %v1805, %v1833
        %v1844 = vsub.f32 %v1810, %v1836
        %v1845 = vmul.f32 %v1837, 1.442695
        %v1846 = vpow.pop %v1845
        %v1847 = vmul.f32 %v1838, 1.442695
        %v1848 = vpow.pop %v1847
        %v1849 = vmul.f32 %v1839, 1.442695
        %v1850 = vpow.pop %v1849
        %v1851 = vmul.f32 %v1840, 1.442695
        %v1852 = vpow.pop %v1851
        %v1853 = vmul.f32 %v1841, 1.442695
        %v1854 = vpow.pop %v1853
        %v1855 = vmul.f32 %v1842, 1.442695
        %v1856 = vpow.pop %v1855
        %v1857 = vmul.f32 %v1843, 1.442695
        %v1858 = vpow.pop %v1857
        %v1859 = vmul.f32 %v1844, 1.442695
        %v1860 = vpow.pop %v1859
        %v1861 = vsel %vm374, %v1846, 0.0
        %1862 = vadd.xlane.f32.xlu0 %v1861
        %v1863 = vpop.xlane.xlu0 %1862
        %v1864 = vsel %vm374, %v1848, 0.0
        %1865 = vadd.xlane.f32.xlu0 %v1864
        %v1866 = vpop.xlane.xlu0 %1865
        %v1867 = vsel %vm374, %v1850, 0.0
        %1868 = vadd.xlane.f32.xlu0 %v1867
        %v1869 = vpop.xlane.xlu0 %1868
        %v1870 = vsel %vm374, %v1852, 0.0
        %1871 = vadd.xlane.f32.xlu0 %v1870
        %v1872 = vpop.xlane.xlu0 %1871
        %v1873 = vsel %vm374, %v1854, 0.0
        %1874 = vadd.xlane.f32.xlu0 %v1873
        %v1875 = vpop.xlane.xlu0 %1874
        %v1876 = vsel %vm374, %v1856, 0.0
        %1877 = vadd.xlane.f32.xlu0 %v1876
        %v1878 = vpop.xlane.xlu0 %1877
        %v1879 = vsel %vm374, %v1858, 0.0
        %1880 = vadd.xlane.f32.xlu0 %v1879
        %v1881 = vpop.xlane.xlu0 %1880
        %v1882 = vsel %vm374, %v1860, 0.0
        %1883 = vadd.xlane.f32.xlu0 %v1882
        %v1884 = vpop.xlane.xlu0 %1883
        %v1885 = vrcp.pop %v1863
        %v1886 = vrcp.pop %v1866
        %v1887 = vrcp.pop %v1869
        %v1888 = vrcp.pop %v1872
        %v1889 = vrcp.pop %v1875
        %v1890 = vrcp.pop %v1878
        %v1891 = vrcp.pop %v1881
        %v1892 = vrcp.pop %v1884
        %v1893 = vmul.f32 %v1846, %v1885
        %v1894 = vmul.f32 %v1848, %v1886
        %v1895 = vmul.f32 %v1850, %v1887
        %v1896 = vmul.f32 %v1852, %v1888
        %v1897 = vmul.f32 %v1854, %v1889
        %v1898 = vmul.f32 %v1856, %v1890
        %v1899 = vmul.f32 %v1858, %v1891
        %v1900 = vmul.f32 %v1860, %v1892
        %v1902 = vsel %vm374, %v1893, 0
        %v1905 = vsel %vm374, %v1894, 0
        %1907 = vmatprep.subr.mxu0 0.0
        %1908 = vmatpush1.msra.mxu0 %v356
        %1909 = vmatprep.subr.mxu0 0.0
        %1910 = vmatpush1.msra.mxu0 %v357
        %1911 = vmatprep.subr.mxu0 0.0
        %1912 = vmatpush1.msra.mxu0 0.0
        %1913 = vmatprep.subr.mxu0 0.0
        %1914 = vmatpush1.msra.mxu0 0.0
        %1915 = vmatprep.subr.mxu0 0.0
        %1916 = vmatpush1.msra.mxu0 0.0
        %1917 = vmatprep.subr.mxu0 0.0
        %1918 = vmatpush1.msra.mxu0 0.0
        %1919 = vmatprep.subr.mxu0 0.0
        %1920 = vmatpush1.msra.mxu0 0.0
        %1921 = vmatprep.subr.mxu0 0.0
        %1922 = vmatpush1.msra.mxu0 0.0
        %1923 = vmatprep.subr.mxu0 0.0
        %1924 = vmatpush1.msra.mxu0 0.0
        %1925 = vmatprep.subr.mxu0 0.0
        %1926 = vmatpush1.msra.mxu0 0.0
        %1927 = vmatprep.subr.mxu0 0.0
        %1928 = vmatpush1.msra.mxu0 0.0
        %1929 = vmatprep.subr.mxu0 0.0
        %1930 = vmatpush1.msra.mxu0 0.0
        %1931 = vmatprep.subr.mxu0 0.0
        %1932 = vmatpush1.msra.mxu0 0.0
        %1933 = vmatprep.subr.mxu0 0.0
        %1934 = vmatpush1.msra.mxu0 0.0
        %1935 = vmatprep.subr.mxu0 0.0
        %1936 = vmatpush1.msra.mxu0 0.0
        %1937 = vmatprep.subr.mxu0 0.0
        %1938 = vmatpush1.msra.mxu0 0.0
        %1939 = vmatprep.subr.mxu0 0.0
        %1940 = vmatpush1.msra.mxu0 0.0
        %1941 = vmatprep.subr.mxu0 0.0
        %1942 = vmatpush1.msra.mxu0 0.0
        %1943 = vmatprep.subr.mxu0 0.0
        %1944 = vmatpush1.msra.mxu0 0.0
        %1945 = vmatprep.subr.mxu0 0.0
        %1946 = vmatpush1.msra.mxu0 0.0
        %1947 = vmatprep.subr.mxu0 0.0
        %1948 = vmatpush1.msra.mxu0 0.0
        %1949 = vmatprep.subr.mxu0 0.0
        %1950 = vmatpush1.msra.mxu0 0.0
        %1951 = vmatprep.subr.mxu0 0.0
        %1952 = vmatpush1.msra.mxu0 0.0
        %1953 = vmatprep.subr.mxu0 0.0
        %1954 = vmatpush1.msra.mxu0 0.0
        %1955 = vmatprep.subr.mxu0 0.0
        %1956 = vmatpush1.msra.mxu0 0.0
        %1957 = vmatprep.subr.mxu0 0.0
        %1958 = vmatpush1.msra.mxu0 0.0
        %1959 = vmatprep.subr.mxu0 0.0
        %1960 = vmatpush1.msra.mxu0 0.0
        %1961 = vmatprep.subr.mxu0 0.0
        %1962 = vmatpush1.msra.mxu0 0.0
        %1963 = vmatprep.subr.mxu0 0.0
        %1964 = vmatpush1.msra.mxu0 0.0
        %1965 = vmatprep.subr.mxu0 0.0
        %1966 = vmatpush1.msra.mxu0 0.0
        %1967 = vmatprep.subr.mxu0 0.0
        %1968 = vmatpush1.msra.mxu0 0.0
        %1969 = vmatprep.subr.mxu0 0.0
        %1970 = vmatpush1.msra.mxu0 0.0
        %1971 = vmatprep.mubr.f32.mxu0 0.0
        %1972 = vmatmul.mubr.f32.gmra.mrb[0].mxu0 %v1902
        %v1973 = vpop.f32.mrb[0].mxu0
        %v1974 = vadd.f32 0.0, %v1973
        %v1975 = vpop.f32.mrb[0].mxu0
        %1976 = vmatprep.mubr.f32.mxu0 0.0
        %1977 = vmatmul.mubr.f32.gmra.mrb[0].mxu0 %v1905
        %v1978 = vpop.f32.mrb[0].mxu0
        %v1979 = vadd.f32 0.0, %v1978
        %v1980 = vpop.f32.mrb[0].mxu0
        %1981 = vdwg.mxu0
        %v1983 = vsel %vm374, %v1895, 0
        %v1986 = vsel %vm374, %v1896, 0
        %1988 = vmatprep.subr.mxu0 0.0
        %1989 = vmatpush1.msra.mxu0 %v358
        %1990 = vmatprep.subr.mxu0 0.0
        %1991 = vmatpush1.msra.mxu0 %v359
        %1992 = vmatprep.subr.mxu0 0.0
        %1993 = vmatpush1.msra.mxu0 0.0
        %1994 = vmatprep.subr.mxu0 0.0
        %1995 = vmatpush1.msra.mxu0 0.0
        %1996 = vmatprep.subr.mxu0 0.0
        %1997 = vmatpush1.msra.mxu0 0.0
        %1998 = vmatprep.subr.mxu0 0.0
        %1999 = vmatpush1.msra.mxu0 0.0
        %2000 = vmatprep.subr.mxu0 0.0
        %2001 = vmatpush1.msra.mxu0 0.0
        %2002 = vmatprep.subr.mxu0 0.0
        %2003 = vmatpush1.msra.mxu0 0.0
        %2004 = vmatprep.subr.mxu0 0.0
        %2005 = vmatpush1.msra.mxu0 0.0
        %2006 = vmatprep.subr.mxu0 0.0
        %2007 = vmatpush1.msra.mxu0 0.0
        %2008 = vmatprep.subr.mxu0 0.0
        %2009 = vmatpush1.msra.mxu0 0.0
        %2010 = vmatprep.subr.mxu0 0.0
        %2011 = vmatpush1.msra.mxu0 0.0
        %2012 = vmatprep.subr.mxu0 0.0
        %2013 = vmatpush1.msra.mxu0 0.0
        %2014 = vmatprep.subr.mxu0 0.0
        %2015 = vmatpush1.msra.mxu0 0.0
        %2016 = vmatprep.subr.mxu0 0.0
        %2017 = vmatpush1.msra.mxu0 0.0
        %2018 = vmatprep.subr.mxu0 0.0
        %2019 = vmatpush1.msra.mxu0 0.0
        %2020 = vmatprep.subr.mxu0 0.0
        %2021 = vmatpush1.msra.mxu0 0.0
        %2022 = vmatprep.subr.mxu0 0.0
        %2023 = vmatpush1.msra.mxu0 0.0
        %2024 = vmatprep.subr.mxu0 0.0
        %2025 = vmatpush1.msra.mxu0 0.0
        %2026 = vmatprep.subr.mxu0 0.0
        %2027 = vmatpush1.msra.mxu0 0.0
        %2028 = vmatprep.subr.mxu0 0.0
        %2029 = vmatpush1.msra.mxu0 0.0
        %2030 = vmatprep.subr.mxu0 0.0
        %2031 = vmatpush1.msra.mxu0 0.0
        %2032 = vmatprep.subr.mxu0 0.0
        %2033 = vmatpush1.msra.mxu0 0.0
        %2034 = vmatprep.subr.mxu0 0.0
        %2035 = vmatpush1.msra.mxu0 0.0
        %2036 = vmatprep.subr.mxu0 0.0
        %2037 = vmatpush1.msra.mxu0 0.0
        %2038 = vmatprep.subr.mxu0 0.0
        %2039 = vmatpush1.msra.mxu0 0.0
        %2040 = vmatprep.subr.mxu0 0.0
        %2041 = vmatpush1.msra.mxu0 0.0
        %2042 = vmatprep.subr.mxu0 0.0
        %2043 = vmatpush1.msra.mxu0 0.0
        %2044 = vmatprep.subr.mxu0 0.0
        %2045 = vmatpush1.msra.mxu0 0.0
        %2046 = vmatprep.subr.mxu0 0.0
        %2047 = vmatpush1.msra.mxu0 0.0
        %2048 = vmatprep.subr.mxu0 0.0
        %2049 = vmatpush1.msra.mxu0 0.0
        %2050 = vmatprep.subr.mxu0 0.0
        %2051 = vmatpush1.msra.mxu0 0.0
        %2052 = vmatprep.mubr.f32.mxu0 0.0
        %2053 = vmatmul.mubr.f32.gmra.mrb[0].mxu0 %v1983
        %v2054 = vpop.f32.mrb[0].mxu0
        %v2055 = vadd.f32 0.0, %v2054
        %v2056 = vpop.f32.mrb[0].mxu0
        %2057 = vmatprep.mubr.f32.mxu0 0.0
        %2058 = vmatmul.mubr.f32.gmra.mrb[0].mxu0 %v1986
        %v2059 = vpop.f32.mrb[0].mxu0
        %v2060 = vadd.f32 0.0, %v2059
        %v2061 = vpop.f32.mrb[0].mxu0
        %2062 = vdwg.mxu0
        %v2064 = vsel %vm374, %v1897, 0
        %v2067 = vsel %vm374, %v1898, 0
        %2069 = vmatprep.subr.mxu0 0.0
        %2070 = vmatpush1.msra.mxu0 %v360
        %2071 = vmatprep.subr.mxu0 0.0
        %2072 = vmatpush1.msra.mxu0 %v361
        %2073 = vmatprep.subr.mxu0 0.0
        %2074 = vmatpush1.msra.mxu0 0.0
        %2075 = vmatprep.subr.mxu0 0.0
        %2076 = vmatpush1.msra.mxu0 0.0
        %2077 = vmatprep.subr.mxu0 0.0
        %2078 = vmatpush1.msra.mxu0 0.0
        %2079 = vmatprep.subr.mxu0 0.0
        %2080 = vmatpush1.msra.mxu0 0.0
        %2081 = vmatprep.subr.mxu0 0.0
        %2082 = vmatpush1.msra.mxu0 0.0
        %2083 = vmatprep.subr.mxu0 0.0
        %2084 = vmatpush1.msra.mxu0 0.0
        %2085 = vmatprep.subr.mxu0 0.0
        %2086 = vmatpush1.msra.mxu0 0.0
        %2087 = vmatprep.subr.mxu0 0.0
        %2088 = vmatpush1.msra.mxu0 0.0
        %2089 = vmatprep.subr.mxu0 0.0
        %2090 = vmatpush1.msra.mxu0 0.0
        %2091 = vmatprep.subr.mxu0 0.0
        %2092 = vmatpush1.msra.mxu0 0.0
        %2093 = vmatprep.subr.mxu0 0.0
        %2094 = vmatpush1.msra.mxu0 0.0
        %2095 = vmatprep.subr.mxu0 0.0
        %2096 = vmatpush1.msra.mxu0 0.0
        %2097 = vmatprep.subr.mxu0 0.0
        %2098 = vmatpush1.msra.mxu0 0.0
        %2099 = vmatprep.subr.mxu0 0.0
        %2100 = vmatpush1.msra.mxu0 0.0
        %2101 = vmatprep.subr.mxu0 0.0
        %2102 = vmatpush1.msra.mxu0 0.0
        %2103 = vmatprep.subr.mxu0 0.0
        %2104 = vmatpush1.msra.mxu0 0.0
        %2105 = vmatprep.subr.mxu0 0.0
        %2106 = vmatpush1.msra.mxu0 0.0
        %2107 = vmatprep.subr.mxu0 0.0
        %2108 = vmatpush1.msra.mxu0 0.0
        %2109 = vmatprep.subr.mxu0 0.0
        %2110 = vmatpush1.msra.mxu0 0.0
        %2111 = vmatprep.subr.mxu0 0.0
        %2112 = vmatpush1.msra.mxu0 0.0
        %2113 = vmatprep.subr.mxu0 0.0
        %2114 = vmatpush1.msra.mxu0 0.0
        %2115 = vmatprep.subr.mxu0 0.0
        %2116 = vmatpush1.msra.mxu0 0.0
        %2117 = vmatprep.subr.mxu0 0.0
        %2118 = vmatpush1.msra.mxu0 0.0
        %2119 = vmatprep.subr.mxu0 0.0
        %2120 = vmatpush1.msra.mxu0 0.0
        %2121 = vmatprep.subr.mxu0 0.0
        %2122 = vmatpush1.msra.mxu0 0.0
        %2123 = vmatprep.subr.mxu0 0.0
        %2124 = vmatpush1.msra.mxu0 0.0
        %2125 = vmatprep.subr.mxu0 0.0
        %2126 = vmatpush1.msra.mxu0 0.0
        %2127 = vmatprep.subr.mxu0 0.0
        %2128 = vmatpush1.msra.mxu0 0.0
        %2129 = vmatprep.subr.mxu0 0.0
        %2130 = vmatpush1.msra.mxu0 0.0
        %2131 = vmatprep.subr.mxu0 0.0
        %2132 = vmatpush1.msra.mxu0 0.0
        %2133 = vmatprep.mubr.f32.mxu0 0.0
        %2134 = vmatmul.mubr.f32.gmra.mrb[0].mxu0 %v2064
        %v2135 = vpop.f32.mrb[0].mxu0
        %v2136 = vadd.f32 0.0, %v2135
        %v2137 = vpop.f32.mrb[0].mxu0
        %2138 = vmatprep.mubr.f32.mxu0 0.0
        %2139 = vmatmul.mubr.f32.gmra.mrb[0].mxu0 %v2067
        %v2140 = vpop.f32.mrb[0].mxu0
        %v2141 = vadd.f32 0.0, %v2140
        %v2142 = vpop.f32.mrb[0].mxu0
        %2143 = vdwg.mxu0
        %v2145 = vsel %vm374, %v1899, 0
        %v2148 = vsel %vm374, %v1900, 0
        %2150 = vmatprep.subr.mxu0 0.0
        %2151 = vmatpush1.msra.mxu0 %v362
        %2152 = vmatprep.subr.mxu0 0.0
        %2153 = vmatpush1.msra.mxu0 %v363
        %2154 = vmatprep.subr.mxu0 0.0
        %2155 = vmatpush1.msra.mxu0 0.0
        %2156 = vmatprep.subr.mxu0 0.0
        %2157 = vmatpush1.msra.mxu0 0.0
        %2158 = vmatprep.subr.mxu0 0.0
        %2159 = vmatpush1.msra.mxu0 0.0
        %2160 = vmatprep.subr.mxu0 0.0
        %2161 = vmatpush1.msra.mxu0 0.0
        %2162 = vmatprep.subr.mxu0 0.0
        %2163 = vmatpush1.msra.mxu0 0.0
        %2164 = vmatprep.subr.mxu0 0.0
        %2165 = vmatpush1.msra.mxu0 0.0
        %2166 = vmatprep.subr.mxu0 0.0
        %2167 = vmatpush1.msra.mxu0 0.0
        %2168 = vmatprep.subr.mxu0 0.0
        %2169 = vmatpush1.msra.mxu0 0.0
        %2170 = vmatprep.subr.mxu0 0.0
        %2171 = vmatpush1.msra.mxu0 0.0
        %2172 = vmatprep.subr.mxu0 0.0
        %2173 = vmatpush1.msra.mxu0 0.0
        %2174 = vmatprep.subr.mxu0 0.0
        %2175 = vmatpush1.msra.mxu0 0.0
        %2176 = vmatprep.subr.mxu0 0.0
        %2177 = vmatpush1.msra.mxu0 0.0
        %2178 = vmatprep.subr.mxu0 0.0
        %2179 = vmatpush1.msra.mxu0 0.0
        %2180 = vmatprep.subr.mxu0 0.0
        %2181 = vmatpush1.msra.mxu0 0.0
        %2182 = vmatprep.subr.mxu0 0.0
        %2183 = vmatpush1.msra.mxu0 0.0
        %2184 = vmatprep.subr.mxu0 0.0
        %2185 = vmatpush1.msra.mxu0 0.0
        %2186 = vmatprep.subr.mxu0 0.0
        %2187 = vmatpush1.msra.mxu0 0.0
        %2188 = vmatprep.subr.mxu0 0.0
        %2189 = vmatpush1.msra.mxu0 0.0
        %2190 = vmatprep.subr.mxu0 0.0
        %2191 = vmatpush1.msra.mxu0 0.0
        %2192 = vmatprep.subr.mxu0 0.0
        %2193 = vmatpush1.msra.mxu0 0.0
        %2194 = vmatprep.subr.mxu0 0.0
        %2195 = vmatpush1.msra.mxu0 0.0
        %2196 = vmatprep.subr.mxu0 0.0
        %2197 = vmatpush1.msra.mxu0 0.0
        %2198 = vmatprep.subr.mxu0 0.0
        %2199 = vmatpush1.msra.mxu0 0.0
        %2200 = vmatprep.subr.mxu0 0.0
        %2201 = vmatpush1.msra.mxu0 0.0
        %2202 = vmatprep.subr.mxu0 0.0
        %2203 = vmatpush1.msra.mxu0 0.0
        %2204 = vmatprep.subr.mxu0 0.0
        %2205 = vmatpush1.msra.mxu0 0.0
        %2206 = vmatprep.subr.mxu0 0.0
        %2207 = vmatpush1.msra.mxu0 0.0
        %2208 = vmatprep.subr.mxu0 0.0
        %2209 = vmatpush1.msra.mxu0 0.0
        %2210 = vmatprep.subr.mxu0 0.0
        %2211 = vmatpush1.msra.mxu0 0.0
        %2212 = vmatprep.subr.mxu0 0.0
        %2213 = vmatpush1.msra.mxu0 0.0
        %2214 = vmatprep.mubr.f32.mxu0 0.0
        %2215 = vmatmul.mubr.f32.gmra.mrb[0].mxu0 %v2145
        %v2216 = vpop.f32.mrb[0].mxu0
        %v2217 = vadd.f32 0.0, %v2216
        %v2218 = vpop.f32.mrb[0].mxu0
        %2219 = vmatprep.mubr.f32.mxu0 0.0
        %2220 = vmatmul.mubr.f32.gmra.mrb[0].mxu0 %v2148
        %v2221 = vpop.f32.mrb[0].mxu0
        %v2222 = vadd.f32 0.0, %v2221
        %v2223 = vpop.f32.mrb[0].mxu0
        %2224 = vdwg.mxu0
        %v2225 = vadd.f32 %v1449, %v1974
        %v2226 = vadd.f32 %v1450, %v1979
        %v2227 = vadd.f32 %v1451, %v2055
        %v2228 = vadd.f32 %v1452, %v2060
        %v2229 = vadd.f32 %v1453, %v2136
        %v2230 = vadd.f32 %v1454, %v2141
        %v2231 = vadd.f32 %v1455, %v2217
        %v2232 = vadd.f32 %v1456, %v2222
        %2233 = vmatprep.subr.mxu0 0.0
        %2234 = vmatpush1.msra.mxu0 %v2225
        %2235 = vmatprep.subr.mxu0 0.0
        %2236 = vmatpush1.msra.mxu0 %v2226
        %2237 = vmatprep.subr.mxu0 0.0
        %2238 = vmatpush1.msra.mxu0 0.0
        %2239 = vmatprep.subr.mxu0 0.0
        %2240 = vmatpush1.msra.mxu0 0.0
        %2241 = vmatprep.subr.mxu0 0.0
        %2242 = vmatpush1.msra.mxu0 0.0
        %2243 = vmatprep.subr.mxu0 0.0
        %2244 = vmatpush1.msra.mxu0 0.0
        %2245 = vmatprep.subr.mxu0 0.0
        %2246 = vmatpush1.msra.mxu0 0.0
        %2247 = vmatprep.subr.mxu0 0.0
        %2248 = vmatpush1.msra.mxu0 0.0
        %2249 = vmatprep.subr.mxu0 0.0
        %2250 = vmatpush1.msra.mxu0 0.0
        %2251 = vmatprep.subr.mxu0 0.0
        %2252 = vmatpush1.msra.mxu0 0.0
        %2253 = vmatprep.subr.mxu0 0.0
        %2254 = vmatpush1.msra.mxu0 0.0
        %2255 = vmatprep.subr.mxu0 0.0
        %2256 = vmatpush1.msra.mxu0 0.0
        %2257 = vmatprep.subr.mxu0 0.0
        %2258 = vmatpush1.msra.mxu0 0.0
        %2259 = vmatprep.subr.mxu0 0.0
        %2260 = vmatpush1.msra.mxu0 0.0
        %2261 = vmatprep.subr.mxu0 0.0
        %2262 = vmatpush1.msra.mxu0 0.0
        %2263 = vmatprep.subr.mxu0 0.0
        %2264 = vmatpush1.msra.mxu0 0.0
        %2265 = vmatprep.subr.mxu0 0.0
        %2266 = vmatpush1.msra.mxu0 0.0
        %2267 = vmatprep.subr.mxu0 0.0
        %2268 = vmatpush1.msra.mxu0 0.0
        %2269 = vmatprep.subr.mxu0 0.0
        %2270 = vmatpush1.msra.mxu0 0.0
        %2271 = vmatprep.subr.mxu0 0.0
        %2272 = vmatpush1.msra.mxu0 0.0
        %2273 = vmatprep.subr.mxu0 0.0
        %2274 = vmatpush1.msra.mxu0 0.0
        %2275 = vmatprep.subr.mxu0 0.0
        %2276 = vmatpush1.msra.mxu0 0.0
        %2277 = vmatprep.subr.mxu0 0.0
        %2278 = vmatpush1.msra.mxu0 0.0
        %2279 = vmatprep.subr.mxu0 0.0
        %2280 = vmatpush1.msra.mxu0 0.0
        %2281 = vmatprep.subr.mxu0 0.0
        %2282 = vmatpush1.msra.mxu0 0.0
        %2283 = vmatprep.subr.mxu0 0.0
        %2284 = vmatpush1.msra.mxu0 0.0
        %2285 = vmatprep.subr.mxu0 0.0
        %2286 = vmatpush1.msra.mxu0 0.0
        %2287 = vmatprep.subr.mxu0 0.0
        %2288 = vmatpush1.msra.mxu0 0.0
        %2289 = vmatprep.subr.mxu0 0.0
        %2290 = vmatpush1.msra.mxu0 0.0
        %2291 = vmatprep.subr.mxu0 0.0
        %2292 = vmatpush1.msra.mxu0 0.0
        %2293 = vmatprep.subr.mxu0 0.0
        %2294 = vmatpush1.msra.mxu0 0.0
        %2295 = vmatprep.subr.mxu0 0.0
        %2296 = vmatpush1.msra.mxu0 0.0
        %2297 = vmatprep.mubr.f32.mxu0 0.0
        %2298 = vmatmul.mubr.f32.gmra.mrb[0].mxu0 %v1144
        %v2299 = vpop.f32.mrb[0].mxu0
        %v2300 = vadd.f32 0.0, %v2299
        %v2301 = vpop.f32.mrb[0].mxu0
        %2302 = vmatprep.mubr.f32.mxu0 0.0
        %2303 = vmatmul.mubr.f32.gmra.mrb[0].mxu0 %v1147
        %v2304 = vpop.f32.mrb[0].mxu0
        %v2305 = vadd.f32 0.0, %v2304
        %v2306 = vpop.f32.mrb[0].mxu0
        %2307 = vdwg.mxu0
        %2308 = vmatprep.subr.mxu0 0.0
        %2309 = vmatpush1.msra.mxu0 %v2227
        %2310 = vmatprep.subr.mxu0 0.0
        %2311 = vmatpush1.msra.mxu0 %v2228
        %2312 = vmatprep.subr.mxu0 0.0
        %2313 = vmatpush1.msra.mxu0 0.0
        %2314 = vmatprep.subr.mxu0 0.0
        %2315 = vmatpush1.msra.mxu0 0.0
        %2316 = vmatprep.subr.mxu0 0.0
        %2317 = vmatpush1.msra.mxu0 0.0
        %2318 = vmatprep.subr.mxu0 0.0
        %2319 = vmatpush1.msra.mxu0 0.0
        %2320 = vmatprep.subr.mxu0 0.0
        %2321 = vmatpush1.msra.mxu0 0.0
        %2322 = vmatprep.subr.mxu0 0.0
        %2323 = vmatpush1.msra.mxu0 0.0
        %2324 = vmatprep.subr.mxu0 0.0
        %2325 = vmatpush1.msra.mxu0 0.0
        %2326 = vmatprep.subr.mxu0 0.0
        %2327 = vmatpush1.msra.mxu0 0.0
        %2328 = vmatprep.subr.mxu0 0.0
        %2329 = vmatpush1.msra.mxu0 0.0
        %2330 = vmatprep.subr.mxu0 0.0
        %2331 = vmatpush1.msra.mxu0 0.0
        %2332 = vmatprep.subr.mxu0 0.0
        %2333 = vmatpush1.msra.mxu0 0.0
        %2334 = vmatprep.subr.mxu0 0.0
        %2335 = vmatpush1.msra.mxu0 0.0
        %2336 = vmatprep.subr.mxu0 0.0
        %2337 = vmatpush1.msra.mxu0 0.0
        %2338 = vmatprep.subr.mxu0 0.0
        %2339 = vmatpush1.msra.mxu0 0.0
        %2340 = vmatprep.subr.mxu0 0.0
        %2341 = vmatpush1.msra.mxu0 0.0
        %2342 = vmatprep.subr.mxu0 0.0
        %2343 = vmatpush1.msra.mxu0 0.0
        %2344 = vmatprep.subr.mxu0 0.0
        %2345 = vmatpush1.msra.mxu0 0.0
        %2346 = vmatprep.subr.mxu0 0.0
        %2347 = vmatpush1.msra.mxu0 0.0
        %2348 = vmatprep.subr.mxu0 0.0
        %2349 = vmatpush1.msra.mxu0 0.0
        %2350 = vmatprep.subr.mxu0 0.0
        %2351 = vmatpush1.msra.mxu0 0.0
        %2352 = vmatprep.subr.mxu0 0.0
        %2353 = vmatpush1.msra.mxu0 0.0
        %2354 = vmatprep.subr.mxu0 0.0
        %2355 = vmatpush1.msra.mxu0 0.0
        %2356 = vmatprep.subr.mxu0 0.0
        %2357 = vmatpush1.msra.mxu0 0.0
        %2358 = vmatprep.subr.mxu0 0.0
        %2359 = vmatpush1.msra.mxu0 0.0
        %2360 = vmatprep.subr.mxu0 0.0
        %2361 = vmatpush1.msra.mxu0 0.0
        %2362 = vmatprep.subr.mxu0 0.0
        %2363 = vmatpush1.msra.mxu0 0.0
        %2364 = vmatprep.subr.mxu0 0.0
        %2365 = vmatpush1.msra.mxu0 0.0
        %2366 = vmatprep.subr.mxu0 0.0
        %2367 = vmatpush1.msra.mxu0 0.0
        %2368 = vmatprep.subr.mxu0 0.0
        %2369 = vmatpush1.msra.mxu0 0.0
        %2370 = vmatprep.subr.mxu0 0.0
        %2371 = vmatpush1.msra.mxu0 0.0
        %2372 = vmatprep.mubr.f32.mxu0 0.0
        %2373 = vmatmul.mubr.f32.gmra.mrb[0].mxu0 %v1144
        %v2374 = vpop.f32.mrb[0].mxu0
        %v2375 = vadd.f32 0.0, %v2374
        %v2376 = vpop.f32.mrb[0].mxu0
        %2377 = vmatprep.mubr.f32.mxu0 0.0
        %2378 = vmatmul.mubr.f32.gmra.mrb[0].mxu0 %v1147
        %v2379 = vpop.f32.mrb[0].mxu0
        %v2380 = vadd.f32 0.0, %v2379
        %v2381 = vpop.f32.mrb[0].mxu0
        %2382 = vdwg.mxu0
        %2383 = vmatprep.subr.mxu0 0.0
        %2384 = vmatpush1.msra.mxu0 %v2229
        %2385 = vmatprep.subr.mxu0 0.0
        %2386 = vmatpush1.msra.mxu0 %v2230
        %2387 = vmatprep.subr.mxu0 0.0
        %2388 = vmatpush1.msra.mxu0 0.0
        %2389 = vmatprep.subr.mxu0 0.0
        %2390 = vmatpush1.msra.mxu0 0.0
        %2391 = vmatprep.subr.mxu0 0.0
        %2392 = vmatpush1.msra.mxu0 0.0
        %2393 = vmatprep.subr.mxu0 0.0
        %2394 = vmatpush1.msra.mxu0 0.0
        %2395 = vmatprep.subr.mxu0 0.0
        %2396 = vmatpush1.msra.mxu0 0.0
        %2397 = vmatprep.subr.mxu0 0.0
        %2398 = vmatpush1.msra.mxu0 0.0
        %2399 = vmatprep.subr.mxu0 0.0
        %2400 = vmatpush1.msra.mxu0 0.0
        %2401 = vmatprep.subr.mxu0 0.0
        %2402 = vmatpush1.msra.mxu0 0.0
        %2403 = vmatprep.subr.mxu0 0.0
        %2404 = vmatpush1.msra.mxu0 0.0
        %2405 = vmatprep.subr.mxu0 0.0
        %2406 = vmatpush1.msra.mxu0 0.0
        %2407 = vmatprep.subr.mxu0 0.0
        %2408 = vmatpush1.msra.mxu0 0.0
        %2409 = vmatprep.subr.mxu0 0.0
        %2410 = vmatpush1.msra.mxu0 0.0
        %2411 = vmatprep.subr.mxu0 0.0
        %2412 = vmatpush1.msra.mxu0 0.0
        %2413 = vmatprep.subr.mxu0 0.0
        %2414 = vmatpush1.msra.mxu0 0.0
        %2415 = vmatprep.subr.mxu0 0.0
        %2416 = vmatpush1.msra.mxu0 0.0
        %2417 = vmatprep.subr.mxu0 0.0
        %2418 = vmatpush1.msra.mxu0 0.0
        %2419 = vmatprep.subr.mxu0 0.0
        %2420 = vmatpush1.msra.mxu0 0.0
        %2421 = vmatprep.subr.mxu0 0.0
        %2422 = vmatpush1.msra.mxu0 0.0
        %2423 = vmatprep.subr.mxu0 0.0
        %2424 = vmatpush1.msra.mxu0 0.0
        %2425 = vmatprep.subr.mxu0 0.0
        %2426 = vmatpush1.msra.mxu0 0.0
        %2427 = vmatprep.subr.mxu0 0.0
        %2428 = vmatpush1.msra.mxu0 0.0
        %2429 = vmatprep.subr.mxu0 0.0
        %2430 = vmatpush1.msra.mxu0 0.0
        %2431 = vmatprep.subr.mxu0 0.0
        %2432 = vmatpush1.msra.mxu0 0.0
        %2433 = vmatprep.subr.mxu0 0.0
        %2434 = vmatpush1.msra.mxu0 0.0
        %2435 = vmatprep.subr.mxu0 0.0
        %2436 = vmatpush1.msra.mxu0 0.0
        %2437 = vmatprep.subr.mxu0 0.0
        %2438 = vmatpush1.msra.mxu0 0.0
        %2439 = vmatprep.subr.mxu0 0.0
        %2440 = vmatpush1.msra.mxu0 0.0
        %2441 = vmatprep.subr.mxu0 0.0
        %2442 = vmatpush1.msra.mxu0 0.0
        %2443 = vmatprep.subr.mxu0 0.0
        %2444 = vmatpush1.msra.mxu0 0.0
        %2445 = vmatprep.subr.mxu0 0.0
        %2446 = vmatpush1.msra.mxu0 0.0
        %2447 = vmatprep.mubr.f32.mxu0 0.0
        %2448 = vmatmul.mubr.f32.gmra.mrb[0].mxu0 %v1144
        %v2449 = vpop.f32.mrb[0].mxu0
        %v2450 = vadd.f32 0.0, %v2449
        %v2451 = vpop.f32.mrb[0].mxu0
        %2452 = vmatprep.mubr.f32.mxu0 0.0
        %2453 = vmatmul.mubr.f32.gmra.mrb[0].mxu0 %v1147
        %v2454 = vpop.f32.mrb[0].mxu0
        %v2455 = vadd.f32 0.0, %v2454
        %v2456 = vpop.f32.mrb[0].mxu0
        %2457 = vdwg.mxu0
        %2458 = vmatprep.subr.mxu0 0.0
        %2459 = vmatpush1.msra.mxu0 %v2231
        %2460 = vmatprep.subr.mxu0 0.0
        %2461 = vmatpush1.msra.mxu0 %v2232
        %2462 = vmatprep.subr.mxu0 0.0
        %2463 = vmatpush1.msra.mxu0 0.0
        %2464 = vmatprep.subr.mxu0 0.0
        %2465 = vmatpush1.msra.mxu0 0.0
        %2466 = vmatprep.subr.mxu0 0.0
        %2467 = vmatpush1.msra.mxu0 0.0
        %2468 = vmatprep.subr.mxu0 0.0
        %2469 = vmatpush1.msra.mxu0 0.0
        %2470 = vmatprep.subr.mxu0 0.0
        %2471 = vmatpush1.msra.mxu0 0.0
        %2472 = vmatprep.subr.mxu0 0.0
        %2473 = vmatpush1.msra.mxu0 0.0
        %2474 = vmatprep.subr.mxu0 0.0
        %2475 = vmatpush1.msra.mxu0 0.0
        %2476 = vmatprep.subr.mxu0 0.0
        %2477 = vmatpush1.msra.mxu0 0.0
        %2478 = vmatprep.subr.mxu0 0.0
        %2479 = vmatpush1.msra.mxu0 0.0
        %2480 = vmatprep.subr.mxu0 0.0
        %2481 = vmatpush1.msra.mxu0 0.0
        %2482 = vmatprep.subr.mxu0 0.0
        %2483 = vmatpush1.msra.mxu0 0.0
        %2484 = vmatprep.subr.mxu0 0.0
        %2485 = vmatpush1.msra.mxu0 0.0
        %2486 = vmatprep.subr.mxu0 0.0
        %2487 = vmatpush1.msra.mxu0 0.0
        %2488 = vmatprep.subr.mxu0 0.0
        %2489 = vmatpush1.msra.mxu0 0.0
        %2490 = vmatprep.subr.mxu0 0.0
        %2491 = vmatpush1.msra.mxu0 0.0
        %2492 = vmatprep.subr.mxu0 0.0
        %2493 = vmatpush1.msra.mxu0 0.0
        %2494 = vmatprep.subr.mxu0 0.0
        %2495 = vmatpush1.msra.mxu0 0.0
        %2496 = vmatprep.subr.mxu0 0.0
        %2497 = vmatpush1.msra.mxu0 0.0
        %2498 = vmatprep.subr.mxu0 0.0
        %2499 = vmatpush1.msra.mxu0 0.0
        %2500 = vmatprep.subr.mxu0 0.0
        %2501 = vmatpush1.msra.mxu0 0.0
        %2502 = vmatprep.subr.mxu0 0.0
        %2503 = vmatpush1.msra.mxu0 0.0
        %2504 = vmatprep.subr.mxu0 0.0
        %2505 = vmatpush1.msra.mxu0 0.0
        %2506 = vmatprep.subr.mxu0 0.0
        %2507 = vmatpush1.msra.mxu0 0.0
        %2508 = vmatprep.subr.mxu0 0.0
        %2509 = vmatpush1.msra.mxu0 0.0
        %2510 = vmatprep.subr.mxu0 0.0
        %2511 = vmatpush1.msra.mxu0 0.0
        %2512 = vmatprep.subr.mxu0 0.0
        %2513 = vmatpush1.msra.mxu0 0.0
        %2514 = vmatprep.subr.mxu0 0.0
        %2515 = vmatpush1.msra.mxu0 0.0
        %2516 = vmatprep.subr.mxu0 0.0
        %2517 = vmatpush1.msra.mxu0 0.0
        %2518 = vmatprep.subr.mxu0 0.0
        %2519 = vmatpush1.msra.mxu0 0.0
        %2520 = vmatprep.subr.mxu0 0.0
        %2521 = vmatpush1.msra.mxu0 0.0
        %2522 = vmatprep.mubr.f32.mxu0 0.0
        %2523 = vmatmul.mubr.f32.gmra.mrb[0].mxu0 %v1144
        %v2524 = vpop.f32.mrb[0].mxu0
        %v2525 = vadd.f32 0.0, %v2524
        %v2526 = vpop.f32.mrb[0].mxu0
        %2527 = vmatprep.mubr.f32.mxu0 0.0
        %2528 = vmatmul.mubr.f32.gmra.mrb[0].mxu0 %v1147
        %v2529 = vpop.f32.mrb[0].mxu0
        %v2530 = vadd.f32 0.0, %v2529
        %v2531 = vpop.f32.mrb[0].mxu0
        %2532 = vdwg.mxu0
        %v2533 = vsub.f32 %v2225, %v2300
        %v2534 = vsub.f32 %v2226, %v2305
        %v2535 = vsub.f32 %v2227, %v2375
        %v2536 = vsub.f32 %v2228, %v2380
        %v2537 = vsub.f32 %v2229, %v2450
        %v2538 = vsub.f32 %v2230, %v2455
        %v2539 = vsub.f32 %v2231, %v2525
        %v2540 = vsub.f32 %v2232, %v2530
        %v2541 = vld [vmem:[%s3] sm:$0xff]
        %v2542 = vld [vmem:[%s3 + $0x8] sm:$0xff]
        %v2544 = vsel %vm374, %v2533, 0
        %v2547 = vsel %vm374, %v2534, 0
        %v2550 = vsel %vm374, %v2535, 0
        %v2553 = vsel %vm374, %v2536, 0
        %v2556 = vsel %vm374, %v2537, 0
        %v2559 = vsel %vm374, %v2538, 0
        %v2562 = vsel %vm374, %v2539, 0
        %v2565 = vsel %vm374, %v2540, 0
        %2567 = vmatprep.subr.mxu0 0.0
        %2568 = vmatpush1.msra.mxu0 %v2541
        %2569 = vmatprep.subr.mxu0 0.0
        %2570 = vmatpush1.msra.mxu0 %v2542
        %2571 = vmatprep.subr.mxu0 0.0
        %2572 = vmatpush1.msra.mxu0 0.0
        %2573 = vmatprep.subr.mxu0 0.0
        %2574 = vmatpush1.msra.mxu0 0.0
        %2575 = vmatprep.subr.mxu0 0.0
        %2576 = vmatpush1.msra.mxu0 0.0
        %2577 = vmatprep.subr.mxu0 0.0
        %2578 = vmatpush1.msra.mxu0 0.0
        %2579 = vmatprep.subr.mxu0 0.0
        %2580 = vmatpush1.msra.mxu0 0.0
        %2581 = vmatprep.subr.mxu0 0.0
        %2582 = vmatpush1.msra.mxu0 0.0
        %2583 = vmatprep.subr.mxu0 0.0
        %2584 = vmatpush1.msra.mxu0 0.0
        %2585 = vmatprep.subr.mxu0 0.0
        %2586 = vmatpush1.msra.mxu0 0.0
        %2587 = vmatprep.subr.mxu0 0.0
        %2588 = vmatpush1.msra.mxu0 0.0
        %2589 = vmatprep.subr.mxu0 0.0
        %2590 = vmatpush1.msra.mxu0 0.0
        %2591 = vmatprep.subr.mxu0 0.0
        %2592 = vmatpush1.msra.mxu0 0.0
        %2593 = vmatprep.subr.mxu0 0.0
        %2594 = vmatpush1.msra.mxu0 0.0
        %2595 = vmatprep.subr.mxu0 0.0
        %2596 = vmatpush1.msra.mxu0 0.0
        %2597 = vmatprep.subr.mxu0 0.0
        %2598 = vmatpush1.msra.mxu0 0.0
        %2599 = vmatprep.subr.mxu0 0.0
        %2600 = vmatpush1.msra.mxu0 0.0
        %2601 = vmatprep.subr.mxu0 0.0
        %2602 = vmatpush1.msra.mxu0 0.0
        %2603 = vmatprep.subr.mxu0 0.0
        %2604 = vmatpush1.msra.mxu0 0.0
        %2605 = vmatprep.subr.mxu0 0.0
        %2606 = vmatpush1.msra.mxu0 0.0
        %2607 = vmatprep.subr.mxu0 0.0
        %2608 = vmatpush1.msra.mxu0 0.0
        %2609 = vmatprep.subr.mxu0 0.0
        %2610 = vmatpush1.msra.mxu0 0.0
        %2611 = vmatprep.subr.mxu0 0.0
        %2612 = vmatpush1.msra.mxu0 0.0
        %2613 = vmatprep.subr.mxu0 0.0
        %2614 = vmatpush1.msra.mxu0 0.0
        %2615 = vmatprep.subr.mxu0 0.0
        %2616 = vmatpush1.msra.mxu0 0.0
        %2617 = vmatprep.subr.mxu0 0.0
        %2618 = vmatpush1.msra.mxu0 0.0
        %2619 = vmatprep.subr.mxu0 0.0
        %2620 = vmatpush1.msra.mxu0 0.0
        %2621 = vmatprep.subr.mxu0 0.0
        %2622 = vmatpush1.msra.mxu0 0.0
        %2623 = vmatprep.subr.mxu0 0.0
        %2624 = vmatpush1.msra.mxu0 0.0
        %2625 = vmatprep.subr.mxu0 0.0
        %2626 = vmatpush1.msra.mxu0 0.0
        %2627 = vmatprep.subr.mxu0 0.0
        %2628 = vmatpush1.msra.mxu0 0.0
        %2629 = vmatprep.subr.mxu0 0.0
        %2630 = vmatpush1.msra.mxu0 0.0
        %2631 = vmatprep.mubr.f32.mxu0 0.0
        %2632 = vmatmul.mubr.f32.gmra.mrb[0].mxu0 %v2544
        %v2633 = vpop.f32.mrb[0].mxu0
        %v2634 = vadd.f32 0.0, %v2633
        %v2635 = vpop.f32.mrb[0].mxu0
        %2636 = vmatprep.mubr.f32.mxu0 0.0
        %2637 = vmatmul.mubr.f32.gmra.mrb[0].mxu0 %v2547
        %v2638 = vpop.f32.mrb[0].mxu0
        %v2639 = vadd.f32 0.0, %v2638
        %v2640 = vpop.f32.mrb[0].mxu0
        %2641 = vmatprep.mubr.f32.mxu0 0.0
        %2642 = vmatmul.mubr.f32.gmra.mrb[0].mxu0 %v2550
        %v2643 = vpop.f32.mrb[0].mxu0
        %v2644 = vadd.f32 0.0, %v2643
        %v2645 = vpop.f32.mrb[0].mxu0
        %2646 = vmatprep.mubr.f32.mxu0 0.0
        %2647 = vmatmul.mubr.f32.gmra.mrb[0].mxu0 %v2553
        %v2648 = vpop.f32.mrb[0].mxu0
        %v2649 = vadd.f32 0.0, %v2648
        %v2650 = vpop.f32.mrb[0].mxu0
        %2651 = vmatprep.mubr.f32.mxu0 0.0
        %2652 = vmatmul.mubr.f32.gmra.mrb[0].mxu0 %v2556
        %v2653 = vpop.f32.mrb[0].mxu0
        %v2654 = vadd.f32 0.0, %v2653
        %v2655 = vpop.f32.mrb[0].mxu0
        %2656 = vmatprep.mubr.f32.mxu0 0.0
        %2657 = vmatmul.mubr.f32.gmra.mrb[0].mxu0 %v2559
        %v2658 = vpop.f32.mrb[0].mxu0
        %v2659 = vadd.f32 0.0, %v2658
        %v2660 = vpop.f32.mrb[0].mxu0
        %2661 = vmatprep.mubr.f32.mxu0 0.0
        %2662 = vmatmul.mubr.f32.gmra.mrb[0].mxu0 %v2562
        %v2663 = vpop.f32.mrb[0].mxu0
        %v2664 = vadd.f32 0.0, %v2663
        %v2665 = vpop.f32.mrb[0].mxu0
        %2666 = vmatprep.mubr.f32.mxu0 0.0
        %2667 = vmatmul.mubr.f32.gmra.mrb[0].mxu0 %v2565
        %v2668 = vpop.f32.mrb[0].mxu0
        %v2669 = vadd.f32 0.0, %v2668
        %v2670 = vpop.f32.mrb[0].mxu0
        %2671 = vdwg.mxu0
        %v2672 = vmax.f32 %v2634, 0.0
        %v2673 = vmax.f32 %v2639, 0.0
        %v2674 = vmax.f32 %v2644, 0.0
        %v2675 = vmax.f32 %v2649, 0.0
        %v2676 = vmax.f32 %v2654, 0.0
        %v2677 = vmax.f32 %v2659, 0.0
        %v2678 = vmax.f32 %v2664, 0.0
        %v2679 = vmax.f32 %v2669, 0.0
        %v2680 = vld [vmem:[%s4] sm:$0xff]
        %v2681 = vld [vmem:[%s4 + $0x8] sm:$0xff]
        %v2682 = vld [vmem:[%s4 + $0x10] sm:$0xff]
        %v2683 = vld [vmem:[%s4 + $0x18] sm:$0xff]
        %v2684 = vld [vmem:[%s4 + $0x20] sm:$0xff]
        %v2685 = vld [vmem:[%s4 + $0x28] sm:$0xff]
        %v2686 = vld [vmem:[%s4 + $0x30] sm:$0xff]
        %v2687 = vld [vmem:[%s4 + $0x38] sm:$0xff]
        %vm2688 = vcmask 523264
        %v2690 = vsel %vm2688, %v2672, 0
        %v2693 = vsel %vm2688, %v2673, 0
        %v2696 = vsel %vm2688, %v2674, 0
        %v2699 = vsel %vm2688, %v2675, 0
        %v2702 = vsel %vm2688, %v2676, 0
        %v2705 = vsel %vm2688, %v2677, 0
        %v2708 = vsel %vm2688, %v2678, 0
        %v2711 = vsel %vm2688, %v2679, 0
        %2713 = vmatprep.subr.mxu0 0.0
        %2714 = vmatpush1.msra.mxu0 %v2680
        %2715 = vmatprep.subr.mxu0 0.0
        %2716 = vmatpush1.msra.mxu0 %v2681
        %2717 = vmatprep.subr.mxu0 0.0
        %2718 = vmatpush1.msra.mxu0 %v2682
        %2719 = vmatprep.subr.mxu0 0.0
        %2720 = vmatpush1.msra.mxu0 %v2683
        %2721 = vmatprep.subr.mxu0 0.0
        %2722 = vmatpush1.msra.mxu0 %v2684
        %2723 = vmatprep.subr.mxu0 0.0
        %2724 = vmatpush1.msra.mxu0 %v2685
        %2725 = vmatprep.subr.mxu0 0.0
        %2726 = vmatpush1.msra.mxu0 %v2686
        %2727 = vmatprep.subr.mxu0 0.0
        %2728 = vmatpush1.msra.mxu0 %v2687
        %2729 = vmatprep.subr.mxu0 0.0
        %2730 = vmatpush1.msra.mxu0 0.0
        %2731 = vmatprep.subr.mxu0 0.0
        %2732 = vmatpush1.msra.mxu0 0.0
        %2733 = vmatprep.subr.mxu0 0.0
        %2734 = vmatpush1.msra.mxu0 0.0
        %2735 = vmatprep.subr.mxu0 0.0
        %2736 = vmatpush1.msra.mxu0 0.0
        %2737 = vmatprep.subr.mxu0 0.0
        %2738 = vmatpush1.msra.mxu0 0.0
        %2739 = vmatprep.subr.mxu0 0.0
        %2740 = vmatpush1.msra.mxu0 0.0
        %2741 = vmatprep.subr.mxu0 0.0
        %2742 = vmatpush1.msra.mxu0 0.0
        %2743 = vmatprep.subr.mxu0 0.0
        %2744 = vmatpush1.msra.mxu0 0.0
        %2745 = vmatprep.subr.mxu0 0.0
        %2746 = vmatpush1.msra.mxu0 0.0
        %2747 = vmatprep.subr.mxu0 0.0
        %2748 = vmatpush1.msra.mxu0 0.0
        %2749 = vmatprep.subr.mxu0 0.0
        %2750 = vmatpush1.msra.mxu0 0.0
        %2751 = vmatprep.subr.mxu0 0.0
        %2752 = vmatpush1.msra.mxu0 0.0
        %2753 = vmatprep.subr.mxu0 0.0
        %2754 = vmatpush1.msra.mxu0 0.0
        %2755 = vmatprep.subr.mxu0 0.0
        %2756 = vmatpush1.msra.mxu0 0.0
        %2757 = vmatprep.subr.mxu0 0.0
        %2758 = vmatpush1.msra.mxu0 0.0
        %2759 = vmatprep.subr.mxu0 0.0
        %2760 = vmatpush1.msra.mxu0 0.0
        %2761 = vmatprep.subr.mxu0 0.0
        %2762 = vmatpush1.msra.mxu0 0.0
        %2763 = vmatprep.subr.mxu0 0.0
        %2764 = vmatpush1.msra.mxu0 0.0
        %2765 = vmatprep.subr.mxu0 0.0
        %2766 = vmatpush1.msra.mxu0 0.0
        %2767 = vmatprep.subr.mxu0 0.0
        %2768 = vmatpush1.msra.mxu0 0.0
        %2769 = vmatprep.subr.mxu0 0.0
        %2770 = vmatpush1.msra.mxu0 0.0
        %2771 = vmatprep.subr.mxu0 0.0
        %2772 = vmatpush1.msra.mxu0 0.0
        %2773 = vmatprep.subr.mxu0 0.0
        %2774 = vmatpush1.msra.mxu0 0.0
        %2775 = vmatprep.subr.mxu0 0.0
        %2776 = vmatpush1.msra.mxu0 0.0
        %2777 = vmatprep.mubr.f32.mxu0 0.0
        %2778 = vmatmul.mubr.f32.gmra.mrb[0].mxu0 %v2690
        %v2779 = vpop.f32.mrb[0].mxu0
        %v2780 = vadd.f32 0.0, %v2779
        %v2781 = vpop.f32.mrb[0].mxu0
        %2782 = vmatprep.mubr.f32.mxu0 0.0
        %2783 = vmatmul.mubr.f32.gmra.mrb[0].mxu0 %v2693
        %v2784 = vpop.f32.mrb[0].mxu0
        %v2785 = vadd.f32 0.0, %v2784
        %v2786 = vpop.f32.mrb[0].mxu0
        %2787 = vmatprep.mubr.f32.mxu0 0.0
        %2788 = vmatmul.mubr.f32.gmra.mrb[0].mxu0 %v2696
        %v2789 = vpop.f32.mrb[0].mxu0
        %v2790 = vadd.f32 0.0, %v2789
        %v2791 = vpop.f32.mrb[0].mxu0
        %2792 = vmatprep.mubr.f32.mxu0 0.0
        %2793 = vmatmul.mubr.f32.gmra.mrb[0].mxu0 %v2699
        %v2794 = vpop.f32.mrb[0].mxu0
        %v2795 = vadd.f32 0.0, %v2794
        %v2796 = vpop.f32.mrb[0].mxu0
        %2797 = vmatprep.mubr.f32.mxu0 0.0
        %2798 = vmatmul.mubr.f32.gmra.mrb[0].mxu0 %v2702
        %v2799 = vpop.f32.mrb[0].mxu0
        %v2800 = vadd.f32 0.0, %v2799
        %v2801 = vpop.f32.mrb[0].mxu0
        %2802 = vmatprep.mubr.f32.mxu0 0.0
        %2803 = vmatmul.mubr.f32.gmra.mrb[0].mxu0 %v2705
        %v2804 = vpop.f32.mrb[0].mxu0
        %v2805 = vadd.f32 0.0, %v2804
        %v2806 = vpop.f32.mrb[0].mxu0
        %2807 = vmatprep.mubr.f32.mxu0 0.0
        %2808 = vmatmul.mubr.f32.gmra.mrb[0].mxu0 %v2708
        %v2809 = vpop.f32.mrb[0].mxu0
        %v2810 = vadd.f32 0.0, %v2809
        %v2811 = vpop.f32.mrb[0].mxu0
        %2812 = vmatprep.mubr.f32.mxu0 0.0
        %2813 = vmatmul.mubr.f32.gmra.mrb[0].mxu0 %v2711
        %v2814 = vpop.f32.mrb[0].mxu0
        %v2815 = vadd.f32 0.0, %v2814
        %v2816 = vpop.f32.mrb[0].mxu0
        %2817 = vdwg.mxu0
        %v2818 = vadd.f32 %v2533, %v2780
        %v2819 = vadd.f32 %v2534, %v2785
        %v2820 = vadd.f32 %v2535, %v2790
        %v2821 = vadd.f32 %v2536, %v2795
        %v2822 = vadd.f32 %v2537, %v2800
        %v2823 = vadd.f32 %v2538, %v2805
        %v2824 = vadd.f32 %v2539, %v2810
        %v2825 = vadd.f32 %v2540, %v2815
        %2826 = vmatprep.subr.mxu0 0.0
        %2827 = vmatpush1.msra.mxu0 %v2818
        %2828 = vmatprep.subr.mxu0 0.0
        %2829 = vmatpush1.msra.mxu0 %v2819
        %2830 = vmatprep.subr.mxu0 0.0
        %2831 = vmatpush1.msra.mxu0 0.0
        %2832 = vmatprep.subr.mxu0 0.0
        %2833 = vmatpush1.msra.mxu0 0.0
        %2834 = vmatprep.subr.mxu0 0.0
        %2835 = vmatpush1.msra.mxu0 0.0
        %2836 = vmatprep.subr.mxu0 0.0
        %2837 = vmatpush1.msra.mxu0 0.0
        %2838 = vmatprep.subr.mxu0 0.0
        %2839 = vmatpush1.msra.mxu0 0.0
        %2840 = vmatprep.subr.mxu0 0.0
        %2841 = vmatpush1.msra.mxu0 0.0
        %2842 = vmatprep.subr.mxu0 0.0
        %2843 = vmatpush1.msra.mxu0 0.0
        %2844 = vmatprep.subr.mxu0 0.0
        %2845 = vmatpush1.msra.mxu0 0.0
        %2846 = vmatprep.subr.mxu0 0.0
        %2847 = vmatpush1.msra.mxu0 0.0
        %2848 = vmatprep.subr.mxu0 0.0
        %2849 = vmatpush1.msra.mxu0 0.0
        %2850 = vmatprep.subr.mxu0 0.0
        %2851 = vmatpush1.msra.mxu0 0.0
        %2852 = vmatprep.subr.mxu0 0.0
        %2853 = vmatpush1.msra.mxu0 0.0
        %2854 = vmatprep.subr.mxu0 0.0
        %2855 = vmatpush1.msra.mxu0 0.0
        %2856 = vmatprep.subr.mxu0 0.0
        %2857 = vmatpush1.msra.mxu0 0.0
        %2858 = vmatprep.subr.mxu0 0.0
        %2859 = vmatpush1.msra.mxu0 0.0
        %2860 = vmatprep.subr.mxu0 0.0
        %2861 = vmatpush1.msra.mxu0 0.0
        %2862 = vmatprep.subr.mxu0 0.0
        %2863 = vmatpush1.msra.mxu0 0.0
        %2864 = vmatprep.subr.mxu0 0.0
        %2865 = vmatpush1.msra.mxu0 0.0
        %2866 = vmatprep.subr.mxu0 0.0
        %2867 = vmatpush1.msra.mxu0 0.0
        %2868 = vmatprep.subr.mxu0 0.0
        %2869 = vmatpush1.msra.mxu0 0.0
        %2870 = vmatprep.subr.mxu0 0.0
        %2871 = vmatpush1.msra.mxu0 0.0
        %2872 = vmatprep.subr.mxu0 0.0
        %2873 = vmatpush1.msra.mxu0 0.0
        %2874 = vmatprep.subr.mxu0 0.0
        %2875 = vmatpush1.msra.mxu0 0.0
        %2876 = vmatprep.subr.mxu0 0.0
        %2877 = vmatpush1.msra.mxu0 0.0
        %2878 = vmatprep.subr.mxu0 0.0
        %2879 = vmatpush1.msra.mxu0 0.0
        %2880 = vmatprep.subr.mxu0 0.0
        %2881 = vmatpush1.msra.mxu0 0.0
        %2882 = vmatprep.subr.mxu0 0.0
        %2883 = vmatpush1.msra.mxu0 0.0
        %2884 = vmatprep.subr.mxu0 0.0
        %2885 = vmatpush1.msra.mxu0 0.0
        %2886 = vmatprep.subr.mxu0 0.0
        %2887 = vmatpush1.msra.mxu0 0.0
        %2888 = vmatprep.subr.mxu0 0.0
        %2889 = vmatpush1.msra.mxu0 0.0
        %2890 = vmatprep.mubr.f32.mxu0 0.0
        %2891 = vmatmul.mubr.f32.gmra.mrb[0].mxu0 %v1144
        %v2892 = vpop.f32.mrb[0].mxu0
        %v2893 = vadd.f32 0.0, %v2892
        %v2894 = vpop.f32.mrb[0].mxu0
        %2895 = vmatprep.mubr.f32.mxu0 0.0
        %2896 = vmatmul.mubr.f32.gmra.mrb[0].mxu0 %v1147
        %v2897 = vpop.f32.mrb[0].mxu0
        %v2898 = vadd.f32 0.0, %v2897
        %v2899 = vpop.f32.mrb[0].mxu0
        %2900 = vdwg.mxu0
        %2901 = vmatprep.subr.mxu0 0.0
        %2902 = vmatpush1.msra.mxu0 %v2820
        %2903 = vmatprep.subr.mxu0 0.0
        %2904 = vmatpush1.msra.mxu0 %v2821
        %2905 = vmatprep.subr.mxu0 0.0
        %2906 = vmatpush1.msra.mxu0 0.0
        %2907 = vmatprep.subr.mxu0 0.0
        %2908 = vmatpush1.msra.mxu0 0.0
        %2909 = vmatprep.subr.mxu0 0.0
        %2910 = vmatpush1.msra.mxu0 0.0
        %2911 = vmatprep.subr.mxu0 0.0
        %2912 = vmatpush1.msra.mxu0 0.0
        %2913 = vmatprep.subr.mxu0 0.0
        %2914 = vmatpush1.msra.mxu0 0.0
        %2915 = vmatprep.subr.mxu0 0.0
        %2916 = vmatpush1.msra.mxu0 0.0
        %2917 = vmatprep.subr.mxu0 0.0
        %2918 = vmatpush1.msra.mxu0 0.0
        %2919 = vmatprep.subr.mxu0 0.0
        %2920 = vmatpush1.msra.mxu0 0.0
        %2921 = vmatprep.subr.mxu0 0.0
        %2922 = vmatpush1.msra.mxu0 0.0
        %2923 = vmatprep.subr.mxu0 0.0
        %2924 = vmatpush1.msra.mxu0 0.0
        %2925 = vmatprep.subr.mxu0 0.0
        %2926 = vmatpush1.msra.mxu0 0.0
        %2927 = vmatprep.subr.mxu0 0.0
        %2928 = vmatpush1.msra.mxu0 0.0
        %2929 = vmatprep.subr.mxu0 0.0
        %2930 = vmatpush1.msra.mxu0 0.0
        %2931 = vmatprep.subr.mxu0 0.0
        %2932 = vmatpush1.msra.mxu0 0.0
        %2933 = vmatprep.subr.mxu0 0.0
        %2934 = vmatpush1.msra.mxu0 0.0
        %2935 = vmatprep.subr.mxu0 0.0
        %2936 = vmatpush1.msra.mxu0 0.0
        %2937 = vmatprep.subr.mxu0 0.0
        %2938 = vmatpush1.msra.mxu0 0.0
        %2939 = vmatprep.subr.mxu0 0.0
        %2940 = vmatpush1.msra.mxu0 0.0
        %2941 = vmatprep.subr.mxu0 0.0
        %2942 = vmatpush1.msra.mxu0 0.0
        %2943 = vmatprep.subr.mxu0 0.0
        %2944 = vmatpush1.msra.mxu0 0.0
        %2945 = vmatprep.subr.mxu0 0.0
        %2946 = vmatpush1.msra.mxu0 0.0
        %2947 = vmatprep.subr.mxu0 0.0
        %2948 = vmatpush1.msra.mxu0 0.0
        %2949 = vmatprep.subr.mxu0 0.0
        %2950 = vmatpush1.msra.mxu0 0.0
        %2951 = vmatprep.subr.mxu0 0.0
        %2952 = vmatpush1.msra.mxu0 0.0
        %2953 = vmatprep.subr.mxu0 0.0
        %2954 = vmatpush1.msra.mxu0 0.0
        %2955 = vmatprep.subr.mxu0 0.0
        %2956 = vmatpush1.msra.mxu0 0.0
        %2957 = vmatprep.subr.mxu0 0.0
        %2958 = vmatpush1.msra.mxu0 0.0
        %2959 = vmatprep.subr.mxu0 0.0
        %2960 = vmatpush1.msra.mxu0 0.0
        %2961 = vmatprep.subr.mxu0 0.0
        %2962 = vmatpush1.msra.mxu0 0.0
        %2963 = vmatprep.subr.mxu0 0.0
        %2964 = vmatpush1.msra.mxu0 0.0
        %2965 = vmatprep.mubr.f32.mxu0 0.0
        %2966 = vmatmul.mubr.f32.gmra.mrb[0].mxu0 %v1144
        %v2967 = vpop.f32.mrb[0].mxu0
        %v2968 = vadd.f32 0.0, %v2967
        %v2969 = vpop.f32.mrb[0].mxu0
        %2970 = vmatprep.mubr.f32.mxu0 0.0
        %2971 = vmatmul.mubr.f32.gmra.mrb[0].mxu0 %v1147
        %v2972 = vpop.f32.mrb[0].mxu0
        %v2973 = vadd.f32 0.0, %v2972
        %v2974 = vpop.f32.mrb[0].mxu0
        %2975 = vdwg.mxu0
        %2976 = vmatprep.subr.mxu0 0.0
        %2977 = vmatpush1.msra.mxu0 %v2822
        %2978 = vmatprep.subr.mxu0 0.0
        %2979 = vmatpush1.msra.mxu0 %v2823
        %2980 = vmatprep.subr.mxu0 0.0
        %2981 = vmatpush1.msra.mxu0 0.0
        %2982 = vmatprep.subr.mxu0 0.0
        %2983 = vmatpush1.msra.mxu0 0.0
        %2984 = vmatprep.subr.mxu0 0.0
        %2985 = vmatpush1.msra.mxu0 0.0
        %2986 = vmatprep.subr.mxu0 0.0
        %2987 = vmatpush1.msra.mxu0 0.0
        %2988 = vmatprep.subr.mxu0 0.0
        %2989 = vmatpush1.msra.mxu0 0.0
        %2990 = vmatprep.subr.mxu0 0.0
        %2991 = vmatpush1.msra.mxu0 0.0
        %2992 = vmatprep.subr.mxu0 0.0
        %2993 = vmatpush1.msra.mxu0 0.0
        %2994 = vmatprep.subr.mxu0 0.0
        %2995 = vmatpush1.msra.mxu0 0.0
        %2996 = vmatprep.subr.mxu0 0.0
        %2997 = vmatpush1.msra.mxu0 0.0
        %2998 = vmatprep.subr.mxu0 0.0
        %2999 = vmatpush1.msra.mxu0 0.0
        %3000 = vmatprep.subr.mxu0 0.0
        %3001 = vmatpush1.msra.mxu0 0.0
        %3002 = vmatprep.subr.mxu0 0.0
        %3003 = vmatpush1.msra.mxu0 0.0
        %3004 = vmatprep.subr.mxu0 0.0
        %3005 = vmatpush1.msra.mxu0 0.0
        %3006 = vmatprep.subr.mxu0 0.0
        %3007 = vmatpush1.msra.mxu0 0.0
        %3008 = vmatprep.subr.mxu0 0.0
        %3009 = vmatpush1.msra.mxu0 0.0
        %3010 = vmatprep.subr.mxu0 0.0
        %3011 = vmatpush1.msra.mxu0 0.0
        %3012 = vmatprep.subr.mxu0 0.0
        %3013 = vmatpush1.msra.mxu0 0.0
        %3014 = vmatprep.subr.mxu0 0.0
        %3015 = vmatpush1.msra.mxu0 0.0
        %3016 = vmatprep.subr.mxu0 0.0
        %3017 = vmatpush1.msra.mxu0 0.0
        %3018 = vmatprep.subr.mxu0 0.0
        %3019 = vmatpush1.msra.mxu0 0.0
        %3020 = vmatprep.subr.mxu0 0.0
        %3021 = vmatpush1.msra.mxu0 0.0
        %3022 = vmatprep.subr.mxu0 0.0
        %3023 = vmatpush1.msra.mxu0 0.0
        %3024 = vmatprep.subr.mxu0 0.0
        %3025 = vmatpush1.msra.mxu0 0.0
        %3026 = vmatprep.subr.mxu0 0.0
        %3027 = vmatpush1.msra.mxu0 0.0
        %3028 = vmatprep.subr.mxu0 0.0
        %3029 = vmatpush1.msra.mxu0 0.0
        %3030 = vmatprep.subr.mxu0 0.0
        %3031 = vmatpush1.msra.mxu0 0.0
        %3032 = vmatprep.subr.mxu0 0.0
        %3033 = vmatpush1.msra.mxu0 0.0
        %3034 = vmatprep.subr.mxu0 0.0
        %3035 = vmatpush1.msra.mxu0 0.0
        %3036 = vmatprep.subr.mxu0 0.0
        %3037 = vmatpush1.msra.mxu0 0.0
        %3038 = vmatprep.subr.mxu0 0.0
        %3039 = vmatpush1.msra.mxu0 0.0
        %3040 = vmatprep.mubr.f32.mxu0 0.0
        %3041 = vmatmul.mubr.f32.gmra.mrb[0].mxu0 %v1144
        %v3042 = vpop.f32.mrb[0].mxu0
        %v3043 = vadd.f32 0.0, %v3042
        %v3044 = vpop.f32.mrb[0].mxu0
        %3045 = vmatprep.mubr.f32.mxu0 0.0
        %3046 = vmatmul.mubr.f32.gmra.mrb[0].mxu0 %v1147
        %v3047 = vpop.f32.mrb[0].mxu0
        %v3048 = vadd.f32 0.0, %v3047
        %v3049 = vpop.f32.mrb[0].mxu0
        %3050 = vdwg.mxu0
        %3051 = vmatprep.subr.mxu0 0.0
        %3052 = vmatpush1.msra.mxu0 %v2824
        %3053 = vmatprep.subr.mxu0 0.0
        %3054 = vmatpush1.msra.mxu0 %v2825
        %3055 = vmatprep.subr.mxu0 0.0
        %3056 = vmatpush1.msra.mxu0 0.0
        %3057 = vmatprep.subr.mxu0 0.0
        %3058 = vmatpush1.msra.mxu0 0.0
        %3059 = vmatprep.subr.mxu0 0.0
        %3060 = vmatpush1.msra.mxu0 0.0
        %3061 = vmatprep.subr.mxu0 0.0
        %3062 = vmatpush1.msra.mxu0 0.0
        %3063 = vmatprep.subr.mxu0 0.0
        %3064 = vmatpush1.msra.mxu0 0.0
        %3065 = vmatprep.subr.mxu0 0.0
        %3066 = vmatpush1.msra.mxu0 0.0
        %3067 = vmatprep.subr.mxu0 0.0
        %3068 = vmatpush1.msra.mxu0 0.0
        %3069 = vmatprep.subr.mxu0 0.0
        %3070 = vmatpush1.msra.mxu0 0.0
        %3071 = vmatprep.subr.mxu0 0.0
        %3072 = vmatpush1.msra.mxu0 0.0
        %3073 = vmatprep.subr.mxu0 0.0
        %3074 = vmatpush1.msra.mxu0 0.0
        %3075 = vmatprep.subr.mxu0 0.0
        %3076 = vmatpush1.msra.mxu0 0.0
        %3077 = vmatprep.subr.mxu0 0.0
        %3078 = vmatpush1.msra.mxu0 0.0
        %3079 = vmatprep.subr.mxu0 0.0
        %3080 = vmatpush1.msra.mxu0 0.0
        %3081 = vmatprep.subr.mxu0 0.0
        %3082 = vmatpush1.msra.mxu0 0.0
        %3083 = vmatprep.subr.mxu0 0.0
        %3084 = vmatpush1.msra.mxu0 0.0
        %3085 = vmatprep.subr.mxu0 0.0
        %3086 = vmatpush1.msra.mxu0 0.0
        %3087 = vmatprep.subr.mxu0 0.0
        %3088 = vmatpush1.msra.mxu0 0.0
        %3089 = vmatprep.subr.mxu0 0.0
        %3090 = vmatpush1.msra.mxu0 0.0
        %3091 = vmatprep.subr.mxu0 0.0
        %3092 = vmatpush1.msra.mxu0 0.0
        %3093 = vmatprep.subr.mxu0 0.0
        %3094 = vmatpush1.msra.mxu0 0.0
        %3095 = vmatprep.subr.mxu0 0.0
        %3096 = vmatpush1.msra.mxu0 0.0
        %3097 = vmatprep.subr.mxu0 0.0
        %3098 = vmatpush1.msra.mxu0 0.0
        %3099 = vmatprep.subr.mxu0 0.0
        %3100 = vmatpush1.msra.mxu0 0.0
        %3101 = vmatprep.subr.mxu0 0.0
        %3102 = vmatpush1.msra.mxu0 0.0
        %3103 = vmatprep.subr.mxu0 0.0
        %3104 = vmatpush1.msra.mxu0 0.0
        %3105 = vmatprep.subr.mxu0 0.0
        %3106 = vmatpush1.msra.mxu0 0.0
        %3107 = vmatprep.subr.mxu0 0.0
        %3108 = vmatpush1.msra.mxu0 0.0
        %3109 = vmatprep.subr.mxu0 0.0
        %3110 = vmatpush1.msra.mxu0 0.0
        %3111 = vmatprep.subr.mxu0 0.0
        %3112 = vmatpush1.msra.mxu0 0.0
        %3113 = vmatprep.subr.mxu0 0.0
        %3114 = vmatpush1.msra.mxu0 0.0
        %3115 = vmatprep.mubr.f32.mxu0 0.0
        %3116 = vmatmul.mubr.f32.gmra.mrb[0].mxu0 %v1144
        %v3117 = vpop.f32.mrb[0].mxu0
        %v3118 = vadd.f32 0.0, %v3117
        %v3119 = vpop.f32.mrb[0].mxu0
        %3120 = vmatprep.mubr.f32.mxu0 0.0
        %3121 = vmatmul.mubr.f32.gmra.mrb[0].mxu0 %v1147
        %v3122 = vpop.f32.mrb[0].mxu0
        %v3123 = vadd.f32 0.0, %v3122
        %v3124 = vpop.f32.mrb[0].mxu0
        %3125 = vdwg.mxu0
        %v3126 = vsub.f32 %v2818, %v2893
        %v3127 = vsub.f32 %v2819, %v2898
        %v3128 = vsub.f32 %v2820, %v2968
        %v3129 = vsub.f32 %v2821, %v2973
        %v3130 = vsub.f32 %v2822, %v3043
        %v3131 = vsub.f32 %v2823, %v3048
        %v3132 = vsub.f32 %v2824, %v3118
        %v3133 = vsub.f32 %v2825, %v3123
        %3134 = vst.msk [vmem:[%s340] sm:$0xff] %vm374, %v3126
        %3135 = vst.msk [vmem:[%s340 + $0x8] sm:$0xff] %vm374, %v3127
        %3136 = vst.msk [vmem:[%s340 + $0x10] sm:$0xff] %vm374, %v3128
        %3137 = vst.msk [vmem:[%s340 + $0x18] sm:$0xff] %vm374, %v3129
        %3138 = vst.msk [vmem:[%s340 + $0x20] sm:$0xff] %vm374, %v3130
        %3139 = vst.msk [vmem:[%s340 + $0x28] sm:$0xff] %vm374, %v3131
        %3140 = vst.msk [vmem:[%s340 + $0x30] sm:$0xff] %vm374, %v3132
        %3141 = vst.msk [vmem:[%s340 + $0x38] sm:$0xff] %vm374, %v3133
        %v3142 = vadd.f32 %v1216, %v2300
        %v3143 = vadd.f32 %v1221, %v2305
        %v3144 = vadd.f32 %v1291, %v2375
        %v3145 = vadd.f32 %v1296, %v2380
        %v3146 = vadd.f32 %v1366, %v2450
        %v3147 = vadd.f32 %v1371, %v2455
        %v3148 = vadd.f32 %v1441, %v2525
        %v3149 = vadd.f32 %v1446, %v2530
        %v3150 = vadd.f32 %v3142, %v2893
        %v3151 = vadd.f32 %v3143, %v2898
        %v3152 = vadd.f32 %v3144, %v2968
        %v3153 = vadd.f32 %v3145, %v2973
        %v3154 = vadd.f32 %v3146, %v3043
        %v3155 = vadd.f32 %v3147, %v3048
        %v3156 = vadd.f32 %v3148, %v3118
        %v3157 = vadd.f32 %v3149, %v3123
        %3158 = vst.msk [vmem:[#allocation2] sm:$0xff] %vm374, %v3150
        %3159 = vst.msk [vmem:[#allocation2 + $0x8] sm:$0xff] %vm374, %v3151
        %3160 = vst.msk [vmem:[#allocation2 + $0x20] sm:$0xff] %vm374, %v3152
        %3161 = vst.msk [vmem:[#allocation2 + $0x28] sm:$0xff] %vm374, %v3153
        %3162 = vst.msk [vmem:[#allocation2 + $0x40] sm:$0xff] %vm374, %v3154
        %3163 = vst.msk [vmem:[#allocation2 + $0x48] sm:$0xff] %vm374, %v3155
        %3164 = vst.msk [vmem:[#allocation2 + $0x60] sm:$0xff] %vm374, %v3156
        %3165 = vst.msk [vmem:[#allocation2 + $0x68] sm:$0xff] %vm374, %v3157
        %3166 = vst.msk [vmem:[#allocation2 + $0x10] sm:$0xff] %vm374, %v3150
        %3167 = vst.msk [vmem:[#allocation2 + $0x18] sm:$0xff] %vm374, %v3151
        %3168 = vst.msk [vmem:[#allocation2 + $0x30] sm:$0xff] %vm374, %v3152
        %3169 = vst.msk [vmem:[#allocation2 + $0x38] sm:$0xff] %vm374, %v3153
        %3170 = vst.msk [vmem:[#allocation2 + $0x50] sm:$0xff] %vm374, %v3154
        %3171 = vst.msk [vmem:[#allocation2 + $0x58] sm:$0xff] %vm374, %v3155
        %3172 = vst.msk [vmem:[#allocation2 + $0x70] sm:$0xff] %vm374, %v3156
        %3173 = vst.msk [vmem:[#allocation2 + $0x78] sm:$0xff] %vm374, %v3157
        %v3174 = vld [vmem:[#allocation2 + $0xf] sm:$0xff]
        %v3175 = vld [vmem:[#allocation2 + $0x17] sm:$0xff]
        %v3176 = vld [vmem:[#allocation2 + $0x2f] sm:$0xff]
        %v3177 = vld [vmem:[#allocation2 + $0x37] sm:$0xff]
        %v3178 = vld [vmem:[#allocation2 + $0x4f] sm:$0xff]
        %v3179 = vld [vmem:[#allocation2 + $0x57] sm:$0xff]
        %v3180 = vld [vmem:[#allocation2 + $0x6f] sm:$0xff]
        %v3181 = vld [vmem:[#allocation2 + $0x77] sm:$0xff]
        %v3182 = vld [vmem:[#allocation2 + $0x1] sm:$0xff]
        %v3183 = vld [vmem:[#allocation2 + $0x9] sm:$0xff]
        %v3184 = vld [vmem:[#allocation2 + $0x21] sm:$0xff]
        %v3185 = vld [vmem:[#allocation2 + $0x29] sm:$0xff]
        %v3186 = vld [vmem:[#allocation2 + $0x41] sm:$0xff]
        %v3187 = vld [vmem:[#allocation2 + $0x49] sm:$0xff]
        %v3188 = vld [vmem:[#allocation2 + $0x61] sm:$0xff]
        %v3189 = vld [vmem:[#allocation2 + $0x69] sm:$0xff]
        %v3190 = vld [vmem:[%s5] sm:$0xff]
        %v3191 = vld [vmem:[%s5 + $0x8] sm:$0xff]
        %s3192 = scalar_lea.vmem %s5, 16
        %v3193 = vld [vmem:[%s3192] sm:$0xff]
        %v3194 = vld [vmem:[%s3192 + $0x8] sm:$0xff]
        %v3196 = vsel %vm374, %v3150, 0
        %v3199 = vsel %vm374, %v3151, 0
        %v3202 = vsel %vm374, %v3152, 0
        %v3205 = vsel %vm374, %v3153, 0
        %v3208 = vsel %vm374, %v3154, 0
        %v3211 = vsel %vm374, %v3155, 0
        %v3214 = vsel %vm374, %v3156, 0
        %v3217 = vsel %vm374, %v3157, 0
        %3219 = vmatprep.subr.mxu0 0.0
        %3220 = vmatpush1.msra.mxu0 %v3193
        %3221 = vmatprep.subr.mxu0 0.0
        %3222 = vmatpush1.msra.mxu0 %v3194
        %3223 = vmatprep.subr.mxu0 0.0
        %3224 = vmatpush1.msra.mxu0 0.0
        %3225 = vmatprep.subr.mxu0 0.0
        %3226 = vmatpush1.msra.mxu0 0.0
        %3227 = vmatprep.subr.mxu0 0.0
        %3228 = vmatpush1.msra.mxu0 0.0
        %3229 = vmatprep.subr.mxu0 0.0
        %3230 = vmatpush1.msra.mxu0 0.0
        %3231 = vmatprep.subr.mxu0 0.0
        %3232 = vmatpush1.msra.mxu0 0.0
        %3233 = vmatprep.subr.mxu0 0.0
        %3234 = vmatpush1.msra.mxu0 0.0
        %3235 = vmatprep.subr.mxu0 0.0
        %3236 = vmatpush1.msra.mxu0 0.0
        %3237 = vmatprep.subr.mxu0 0.0
        %3238 = vmatpush1.msra.mxu0 0.0
        %3239 = vmatprep.subr.mxu0 0.0
        %3240 = vmatpush1.msra.mxu0 0.0
        %3241 = vmatprep.subr.mxu0 0.0
        %3242 = vmatpush1.msra.mxu0 0.0
        %3243 = vmatprep.subr.mxu0 0.0
        %3244 = vmatpush1.msra.mxu0 0.0
        %3245 = vmatprep.subr.mxu0 0.0
        %3246 = vmatpush1.msra.mxu0 0.0
        %3247 = vmatprep.subr.mxu0 0.0
        %3248 = vmatpush1.msra.mxu0 0.0
        %3249 = vmatprep.subr.mxu0 0.0
        %3250 = vmatpush1.msra.mxu0 0.0
        %3251 = vmatprep.subr.mxu0 0.0
        %3252 = vmatpush1.msra.mxu0 0.0
        %3253 = vmatprep.subr.mxu0 0.0
        %3254 = vmatpush1.msra.mxu0 0.0
        %3255 = vmatprep.subr.mxu0 0.0
        %3256 = vmatpush1.msra.mxu0 0.0
        %3257 = vmatprep.subr.mxu0 0.0
        %3258 = vmatpush1.msra.mxu0 0.0
        %3259 = vmatprep.subr.mxu0 0.0
        %3260 = vmatpush1.msra.mxu0 0.0
        %3261 = vmatprep.subr.mxu0 0.0
        %3262 = vmatpush1.msra.mxu0 0.0
        %3263 = vmatprep.subr.mxu0 0.0
        %3264 = vmatpush1.msra.mxu0 0.0
        %3265 = vmatprep.subr.mxu0 0.0
        %3266 = vmatpush1.msra.mxu0 0.0
        %3267 = vmatprep.subr.mxu0 0.0
        %3268 = vmatpush1.msra.mxu0 0.0
        %3269 = vmatprep.subr.mxu0 0.0
        %3270 = vmatpush1.msra.mxu0 0.0
        %3271 = vmatprep.subr.mxu0 0.0
        %3272 = vmatpush1.msra.mxu0 0.0
        %3273 = vmatprep.subr.mxu0 0.0
        %3274 = vmatpush1.msra.mxu0 0.0
        %3275 = vmatprep.subr.mxu0 0.0
        %3276 = vmatpush1.msra.mxu0 0.0
        %3277 = vmatprep.subr.mxu0 0.0
        %3278 = vmatpush1.msra.mxu0 0.0
        %3279 = vmatprep.subr.mxu0 0.0
        %3280 = vmatpush1.msra.mxu0 0.0
        %3281 = vmatprep.subr.mxu0 0.0
        %3282 = vmatpush1.msra.mxu0 0.0
        %3283 = vmatprep.mubr.f32.mxu0 0.0
        %3284 = vmatmul.mubr.f32.gmra.mrb[0].mxu0 %v3196
        %v3285 = vpop.f32.mrb[0].mxu0
        %v3286 = vadd.f32 0.0, %v3285
        %v3287 = vpop.f32.mrb[0].mxu0
        %3288 = vmatprep.mubr.f32.mxu0 0.0
        %3289 = vmatmul.mubr.f32.gmra.mrb[0].mxu0 %v3199
        %v3290 = vpop.f32.mrb[0].mxu0
        %v3291 = vadd.f32 0.0, %v3290
        %v3292 = vpop.f32.mrb[0].mxu0
        %3293 = vmatprep.mubr.f32.mxu0 0.0
        %3294 = vmatmul.mubr.f32.gmra.mrb[0].mxu0 %v3202
        %v3295 = vpop.f32.mrb[0].mxu0
        %v3296 = vadd.f32 0.0, %v3295
        %v3297 = vpop.f32.mrb[0].mxu0
        %3298 = vmatprep.mubr.f32.mxu0 0.0
        %3299 = vmatmul.mubr.f32.gmra.mrb[0].mxu0 %v3205
        %v3300 = vpop.f32.mrb[0].mxu0
        %v3301 = vadd.f32 0.0, %v3300
        %v3302 = vpop.f32.mrb[0].mxu0
        %3303 = vmatprep.mubr.f32.mxu0 0.0
        %3304 = vmatmul.mubr.f32.gmra.mrb[0].mxu0 %v3208
        %v3305 = vpop.f32.mrb[0].mxu0
        %v3306 = vadd.f32 0.0, %v3305
        %v3307 = vpop.f32.mrb[0].mxu0
        %3308 = vmatprep.mubr.f32.mxu0 0.0
        %3309 = vmatmul.mubr.f32.gmra.mrb[0].mxu0 %v3211
        %v3310 = vpop.f32.mrb[0].mxu0
        %v3311 = vadd.f32 0.0, %v3310
        %v3312 = vpop.f32.mrb[0].mxu0
        %3313 = vmatprep.mubr.f32.mxu0 0.0
        %3314 = vmatmul.mubr.f32.gmra.mrb[0].mxu0 %v3214
        %v3315 = vpop.f32.mrb[0].mxu0
        %v3316 = vadd.f32 0.0, %v3315
        %v3317 = vpop.f32.mrb[0].mxu0
        %3318 = vmatprep.mubr.f32.mxu0 0.0
        %3319 = vmatmul.mubr.f32.gmra.mrb[0].mxu0 %v3217
        %v3320 = vpop.f32.mrb[0].mxu0
        %v3321 = vadd.f32 0.0, %v3320
        %v3322 = vpop.f32.mrb[0].mxu0
        %3323 = vdwg.mxu0
        %v3325 = vsel %vm374, %v3174, 0
        %v3328 = vsel %vm374, %v3175, 0
        %v3331 = vsel %vm374, %v3176, 0
        %v3334 = vsel %vm374, %v3177, 0
        %v3337 = vsel %vm374, %v3178, 0
        %v3340 = vsel %vm374, %v3179, 0
        %v3343 = vsel %vm374, %v3180, 0
        %v3346 = vsel %vm374, %v3181, 0
        %3348 = vmatprep.subr.mxu0 0.0
        %3349 = vmatpush1.msra.mxu0 %v3190
        %3350 = vmatprep.subr.mxu0 0.0
        %3351 = vmatpush1.msra.mxu0 %v3191
        %3352 = vmatprep.subr.mxu0 0.0
        %3353 = vmatpush1.msra.mxu0 0.0
        %3354 = vmatprep.subr.mxu0 0.0
        %3355 = vmatpush1.msra.mxu0 0.0
        %3356 = vmatprep.subr.mxu0 0.0
        %3357 = vmatpush1.msra.mxu0 0.0
        %3358 = vmatprep.subr.mxu0 0.0
        %3359 = vmatpush1.msra.mxu0 0.0
        %3360 = vmatprep.subr.mxu0 0.0
        %3361 = vmatpush1.msra.mxu0 0.0
        %3362 = vmatprep.subr.mxu0 0.0
        %3363 = vmatpush1.msra.mxu0 0.0
        %3364 = vmatprep.subr.mxu0 0.0
        %3365 = vmatpush1.msra.mxu0 0.0
        %3366 = vmatprep.subr.mxu0 0.0
        %3367 = vmatpush1.msra.mxu0 0.0
        %3368 = vmatprep.subr.mxu0 0.0
        %3369 = vmatpush1.msra.mxu0 0.0
        %3370 = vmatprep.subr.mxu0 0.0
        %3371 = vmatpush1.msra.mxu0 0.0
        %3372 = vmatprep.subr.mxu0 0.0
        %3373 = vmatpush1.msra.mxu0 0.0
        %3374 = vmatprep.subr.mxu0 0.0
        %3375 = vmatpush1.msra.mxu0 0.0
        %3376 = vmatprep.subr.mxu0 0.0
        %3377 = vmatpush1.msra.mxu0 0.0
        %3378 = vmatprep.subr.mxu0 0.0
        %3379 = vmatpush1.msra.mxu0 0.0
        %3380 = vmatprep.subr.mxu0 0.0
        %3381 = vmatpush1.msra.mxu0 0.0
        %3382 = vmatprep.subr.mxu0 0.0
        %3383 = vmatpush1.msra.mxu0 0.0
        %3384 = vmatprep.subr.mxu0 0.0
        %3385 = vmatpush1.msra.mxu0 0.0
        %3386 = vmatprep.subr.mxu0 0.0
        %3387 = vmatpush1.msra.mxu0 0.0
        %3388 = vmatprep.subr.mxu0 0.0
        %3389 = vmatpush1.msra.mxu0 0.0
        %3390 = vmatprep.subr.mxu0 0.0
        %3391 = vmatpush1.msra.mxu0 0.0
        %3392 = vmatprep.subr.mxu0 0.0
        %3393 = vmatpush1.msra.mxu0 0.0
        %3394 = vmatprep.subr.mxu0 0.0
        %3395 = vmatpush1.msra.mxu0 0.0
        %3396 = vmatprep.subr.mxu0 0.0
        %3397 = vmatpush1.msra.mxu0 0.0
        %3398 = vmatprep.subr.mxu0 0.0
        %3399 = vmatpush1.msra.mxu0 0.0
        %3400 = vmatprep.subr.mxu0 0.0
        %3401 = vmatpush1.msra.mxu0 0.0
        %3402 = vmatprep.subr.mxu0 0.0
        %3403 = vmatpush1.msra.mxu0 0.0
        %3404 = vmatprep.subr.mxu0 0.0
        %3405 = vmatpush1.msra.mxu0 0.0
        %3406 = vmatprep.subr.mxu0 0.0
        %3407 = vmatpush1.msra.mxu0 0.0
        %3408 = vmatprep.subr.mxu0 0.0
        %3409 = vmatpush1.msra.mxu0 0.0
        %3410 = vmatprep.subr.mxu0 0.0
        %3411 = vmatpush1.msra.mxu0 0.0
        %3412 = vmatprep.mubr.f32.mxu0 0.0
        %3413 = vmatmul.mubr.f32.gmra.mrb[0].mxu0 %v3325
        %v3414 = vpop.f32.mrb[0].mxu0
        %v3415 = vadd.f32 %v3286, %v3414
        %v3416 = vpop.f32.mrb[0].mxu0
        %3417 = vmatprep.mubr.f32.mxu0 0.0
        %3418 = vmatmul.mubr.f32.gmra.mrb[0].mxu0 %v3328
        %v3419 = vpop.f32.mrb[0].mxu0
        %v3420 = vadd.f32 %v3291, %v3419
        %v3421 = vpop.f32.mrb[0].mxu0
        %3422 = vmatprep.mubr.f32.mxu0 0.0
        %3423 = vmatmul.mubr.f32.gmra.mrb[0].mxu0 %v3331
        %v3424 = vpop.f32.mrb[0].mxu0
        %v3425 = vadd.f32 %v3296, %v3424
        %v3426 = vpop.f32.mrb[0].mxu0
        %3427 = vmatprep.mubr.f32.mxu0 0.0
        %3428 = vmatmul.mubr.f32.gmra.mrb[0].mxu0 %v3334
        %v3429 = vpop.f32.mrb[0].mxu0
        %v3430 = vadd.f32 %v3301, %v3429
        %v3431 = vpop.f32.mrb[0].mxu0
        %3432 = vmatprep.mubr.f32.mxu0 0.0
        %3433 = vmatmul.mubr.f32.gmra.mrb[0].mxu0 %v3337
        %v3434 = vpop.f32.mrb[0].mxu0
        %v3435 = vadd.f32 %v3306, %v3434
        %v3436 = vpop.f32.mrb[0].mxu0
        %3437 = vmatprep.mubr.f32.mxu0 0.0
        %3438 = vmatmul.mubr.f32.gmra.mrb[0].mxu0 %v3340
        %v3439 = vpop.f32.mrb[0].mxu0
        %v3440 = vadd.f32 %v3311, %v3439
        %v3441 = vpop.f32.mrb[0].mxu0
        %3442 = vmatprep.mubr.f32.mxu0 0.0
        %3443 = vmatmul.mubr.f32.gmra.mrb[0].mxu0 %v3343
        %v3444 = vpop.f32.mrb[0].mxu0
        %v3445 = vadd.f32 %v3316, %v3444
        %v3446 = vpop.f32.mrb[0].mxu0
        %3447 = vmatprep.mubr.f32.mxu0 0.0
        %3448 = vmatmul.mubr.f32.gmra.mrb[0].mxu0 %v3346
        %v3449 = vpop.f32.mrb[0].mxu0
        %v3450 = vadd.f32 %v3321, %v3449
        %v3451 = vpop.f32.mrb[0].mxu0
        %3452 = vdwg.mxu0
        %s3453 = scalar_lea.vmem %s5, 32
        %v3454 = vld [vmem:[%s3453] sm:$0xff]
        %v3455 = vld [vmem:[%s3453 + $0x8] sm:$0xff]
        %v3457 = vsel %vm374, %v3182, 0
        %v3460 = vsel %vm374, %v3183, 0
        %v3463 = vsel %vm374, %v3184, 0
        %v3466 = vsel %vm374, %v3185, 0
        %v3469 = vsel %vm374, %v3186, 0
        %v3472 = vsel %vm374, %v3187, 0
        %v3475 = vsel %vm374, %v3188, 0
        %v3478 = vsel %vm374, %v3189, 0
        %3480 = vmatprep.subr.mxu0 0.0
        %3481 = vmatpush1.msra.mxu0 %v3454
        %3482 = vmatprep.subr.mxu0 0.0
        %3483 = vmatpush1.msra.mxu0 %v3455
        %3484 = vmatprep.subr.mxu0 0.0
        %3485 = vmatpush1.msra.mxu0 0.0
        %3486 = vmatprep.subr.mxu0 0.0
        %3487 = vmatpush1.msra.mxu0 0.0
        %3488 = vmatprep.subr.mxu0 0.0
        %3489 = vmatpush1.msra.mxu0 0.0
        %3490 = vmatprep.subr.mxu0 0.0
        %3491 = vmatpush1.msra.mxu0 0.0
        %3492 = vmatprep.subr.mxu0 0.0
        %3493 = vmatpush1.msra.mxu0 0.0
        %3494 = vmatprep.subr.mxu0 0.0
        %3495 = vmatpush1.msra.mxu0 0.0
        %3496 = vmatprep.subr.mxu0 0.0
        %3497 = vmatpush1.msra.mxu0 0.0
        %3498 = vmatprep.subr.mxu0 0.0
        %3499 = vmatpush1.msra.mxu0 0.0
        %3500 = vmatprep.subr.mxu0 0.0
        %3501 = vmatpush1.msra.mxu0 0.0
        %3502 = vmatprep.subr.mxu0 0.0
        %3503 = vmatpush1.msra.mxu0 0.0
        %3504 = vmatprep.subr.mxu0 0.0
        %3505 = vmatpush1.msra.mxu0 0.0
        %3506 = vmatprep.subr.mxu0 0.0
        %3507 = vmatpush1.msra.mxu0 0.0
        %3508 = vmatprep.subr.mxu0 0.0
        %3509 = vmatpush1.msra.mxu0 0.0
        %3510 = vmatprep.subr.mxu0 0.0
        %3511 = vmatpush1.msra.mxu0 0.0
        %3512 = vmatprep.subr.mxu0 0.0
        %3513 = vmatpush1.msra.mxu0 0.0
        %3514 = vmatprep.subr.mxu0 0.0
        %3515 = vmatpush1.msra.mxu0 0.0
        %3516 = vmatprep.subr.mxu0 0.0
        %3517 = vmatpush1.msra.mxu0 0.0
        %3518 = vmatprep.subr.mxu0 0.0
        %3519 = vmatpush1.msra.mxu0 0.0
        %3520 = vmatprep.subr.mxu0 0.0
        %3521 = vmatpush1.msra.mxu0 0.0
        %3522 = vmatprep.subr.mxu0 0.0
        %3523 = vmatpush1.msra.mxu0 0.0
        %3524 = vmatprep.subr.mxu0 0.0
        %3525 = vmatpush1.msra.mxu0 0.0
        %3526 = vmatprep.subr.mxu0 0.0
        %3527 = vmatpush1.msra.mxu0 0.0
        %3528 = vmatprep.subr.mxu0 0.0
        %3529 = vmatpush1.msra.mxu0 0.0
        %3530 = vmatprep.subr.mxu0 0.0
        %3531 = vmatpush1.msra.mxu0 0.0
        %3532 = vmatprep.subr.mxu0 0.0
        %3533 = vmatpush1.msra.mxu0 0.0
        %3534 = vmatprep.subr.mxu0 0.0
        %3535 = vmatpush1.msra.mxu0 0.0
        %3536 = vmatprep.subr.mxu0 0.0
        %3537 = vmatpush1.msra.mxu0 0.0
        %3538 = vmatprep.subr.mxu0 0.0
        %3539 = vmatpush1.msra.mxu0 0.0
        %3540 = vmatprep.subr.mxu0 0.0
        %3541 = vmatpush1.msra.mxu0 0.0
        %3542 = vmatprep.subr.mxu0 0.0
        %3543 = vmatpush1.msra.mxu0 0.0
        %3544 = vmatprep.mubr.f32.mxu0 0.0
        %3545 = vmatmul.mubr.f32.gmra.mrb[0].mxu0 %v3457
        %v3546 = vpop.f32.mrb[0].mxu0
        %v3547 = vadd.f32 0.0, %v3546
        %v3548 = vpop.f32.mrb[0].mxu0
        %3549 = vmatprep.mubr.f32.mxu0 0.0
        %3550 = vmatmul.mubr.f32.gmra.mrb[0].mxu0 %v3460
        %v3551 = vpop.f32.mrb[0].mxu0
        %v3552 = vadd.f32 0.0, %v3551
        %v3553 = vpop.f32.mrb[0].mxu0
        %3554 = vmatprep.mubr.f32.mxu0 0.0
        %3555 = vmatmul.mubr.f32.gmra.mrb[0].mxu0 %v3463
        %v3556 = vpop.f32.mrb[0].mxu0
        %v3557 = vadd.f32 0.0, %v3556
        %v3558 = vpop.f32.mrb[0].mxu0
        %3559 = vmatprep.mubr.f32.mxu0 0.0
        %3560 = vmatmul.mubr.f32.gmra.mrb[0].mxu0 %v3466
        %v3561 = vpop.f32.mrb[0].mxu0
        %v3562 = vadd.f32 0.0, %v3561
        %v3563 = vpop.f32.mrb[0].mxu0
        %3564 = vmatprep.mubr.f32.mxu0 0.0
        %3565 = vmatmul.mubr.f32.gmra.mrb[0].mxu0 %v3469
        %v3566 = vpop.f32.mrb[0].mxu0
        %v3567 = vadd.f32 0.0, %v3566
        %v3568 = vpop.f32.mrb[0].mxu0
        %3569 = vmatprep.mubr.f32.mxu0 0.0
        %3570 = vmatmul.mubr.f32.gmra.mrb[0].mxu0 %v3472
        %v3571 = vpop.f32.mrb[0].mxu0
        %v3572 = vadd.f32 0.0, %v3571
        %v3573 = vpop.f32.mrb[0].mxu0
        %3574 = vmatprep.mubr.f32.mxu0 0.0
        %3575 = vmatmul.mubr.f32.gmra.mrb[0].mxu0 %v3475
        %v3576 = vpop.f32.mrb[0].mxu0
        %v3577 = vadd.f32 0.0, %v3576
        %v3578 = vpop.f32.mrb[0].mxu0
        %3579 = vmatprep.mubr.f32.mxu0 0.0
        %3580 = vmatmul.mubr.f32.gmra.mrb[0].mxu0 %v3478
        %v3581 = vpop.f32.mrb[0].mxu0
        %v3582 = vadd.f32 0.0, %v3581
        %v3583 = vpop.f32.mrb[0].mxu0
        %3584 = vdwg.mxu0
        %v3585 = vadd.f32 %v3415, %v3547
        %v3586 = vadd.f32 %v3420, %v3552
        %v3587 = vadd.f32 %v3425, %v3557
        %v3588 = vadd.f32 %v3430, %v3562
        %v3589 = vadd.f32 %v3435, %v3567
        %v3590 = vadd.f32 %v3440, %v3572
        %v3591 = vadd.f32 %v3445, %v3577
        %v3592 = vadd.f32 %v3450, %v3582
        %3593 = vst.msk [vmem:[%s347] sm:$0xff] %vm374, %v3585
        %3594 = vst.msk [vmem:[%s347 + $0x8] sm:$0xff] %vm374, %v3586
        %3595 = vst.msk [vmem:[%s347 + $0x10] sm:$0xff] %vm374, %v3587
        %3596 = vst.msk [vmem:[%s347 + $0x18] sm:$0xff] %vm374, %v3588
        %3597 = vst.msk [vmem:[%s347 + $0x20] sm:$0xff] %vm374, %v3589
        %3598 = vst.msk [vmem:[%s347 + $0x28] sm:$0xff] %vm374, %v3590
        %3599 = vst.msk [vmem:[%s347 + $0x30] sm:$0xff] %vm374, %v3591
        %3600 = vst.msk [vmem:[%s347 + $0x38] sm:$0xff] %vm374, %v3592
        %s3601 = sand.u32 %s175, 1
        %s3602 = scalar_lea.sflag [#allocation5], %s3601
        %s3603 = sand.u32 %s175, 1
        %s3604 = smul.addr %s3603, 64
        %s3605 = scalar_lea.vmem [#allocation8], %s3604
        %s3606 = sand.u32 %s201, 1
        %s3607 = scalar_lea.sflag [#allocation10], %s3606
        %s3608 = sand.u32 %s201, 1
        %s3609 = smul.addr %s3608, 64
        %s3610 = scalar_lea.vmem [#allocation9], %s3609
        // Predicated region
        $region53: #{tpu_custom_call.1} parent=43 // pred_check
          %p3611 = pneg %p185
        $region54: #{tpu_custom_call.1} parent=43 // pred_check_branch
          %3613 = sbr.rel (%p3611) target = $region56
        $region55: #{tpu_custom_call.1} parent=43 // pred_region
          %s3615 = ssub.s32 1024, 1024
          %3616 = vsyncadd %s3602, %s3615
          %s3617 = smul.addr %s31, 8
          %s3618 = smul.addr %s3617, 128
          %s3619 = scalar_lea.hbm %s6, %s3618
          %s3620 = sshll.u32 %s3605, 4
          %s3621 = int_to_ptr.vmem [resolvable:$true] %s3620
          %3626 = dma.vmem_to_hbm [thread:$0]  %s3621, 1024, %s3619, %s3602, 128, 128, 8
        $region56: #{tpu_custom_call.1} parent=43 // pred_fallthru
          _
        // Predicated region
        $region57: #{tpu_custom_call.1} parent=43 // pred_check
          %p3627 = pneg %p211
        $region58: #{tpu_custom_call.1} parent=43 // pred_check_branch
          %3629 = sbr.rel (%p3627) target = $region60
        $region59: #{tpu_custom_call.1} parent=43 // pred_region
          %s3631 = ssub.s32 1024, 1024
          %3632 = vsyncadd %s3607, %s3631
          %s3633 = smul.addr %s31, 8
          %s3634 = smul.addr %s3633, 128
          %s3635 = scalar_lea.hbm %s7, %s3634
          %s3636 = sshll.u32 %s3610, 4
          %s3637 = int_to_ptr.vmem [resolvable:$true] %s3636
          %3642 = dma.vmem_to_hbm [thread:$0]  %s3637, 1024, %s3635, %s3607, 128, 128, 8
        $region60: #{tpu_custom_call.1} parent=43 // pred_fallthru
          _
      $region44: #{tpu_custom_call.1} parent=5 // pred_fallthru
        _
      %p3643 = scmp.le.s32.totalorder 2, %s26
      // Predicated region
      $region61: #{tpu_custom_call.1} parent=5 // pred_check
        %p3644 = pneg %p3643
      $region62: #{tpu_custom_call.1} parent=5 // pred_check_branch
        %3646 = sbr.rel (%p3644) target = $region64
      $region63: #{tpu_custom_call.1} parent=5 // pred_region
        %s3647 = ssub.s32 %s26, 2
        // Predicated region
        $region65: #{tpu_custom_call.1} parent=63 // pred_check
          %p3648 = pneg %p191
        $region66: #{tpu_custom_call.1} parent=63 // pred_check_branch
          %3650 = sbr.rel (%p3648) target = $region68
        $region67: #{tpu_custom_call.1} parent=63 // pred_region
          %s3651 = sand.u32 %s176, 1
          %s3652 = scalar_lea.sflag [#allocation5], %s3651
          %s3653 = sand.u32 %s176, 1
          %s3654 = smul.addr %s3653, 64
          %s3655 = scalar_lea.vmem [#allocation8], %s3654
          %3656 = dma.done %s3652, 1024
        $region68: #{tpu_custom_call.1} parent=63 // pred_fallthru
          _
        // Predicated region
        $region69: #{tpu_custom_call.1} parent=63 // pred_check
          %p3657 = pneg %p217
        $region70: #{tpu_custom_call.1} parent=63 // pred_check_branch
          %3659 = sbr.rel (%p3657) target = $region72
        $region71: #{tpu_custom_call.1} parent=63 // pred_region
          %s3660 = sand.u32 %s202, 1
          %s3661 = scalar_lea.sflag [#allocation10], %s3660
          %s3662 = sand.u32 %s202, 1
          %s3663 = smul.addr %s3662, 64
          %s3664 = scalar_lea.vmem [#allocation9], %s3663
          %3665 = dma.done %s3661, 1024
        $region72: #{tpu_custom_call.1} parent=63 // pred_fallthru
          _
      $region64: #{tpu_custom_call.1} parent=5 // pred_fallthru
        _
    $region6: #{tpu_custom_call.1} parent=1 // loop_footer
      %s30 = sadd.s32 1, %s26
    $region7: #{tpu_custom_call.1} parent=1 // loop_footer_branch
      %25 = sbr.rel target = $region3
    $region8: #{tpu_custom_call.1} parent=1 // loop_exit
      _
    %3666 = vsyncpa [#allocation4], 1
    %s3667 = scalar_lea.sflag [#allocation4], 1
    %3668 = vsyncpa %s3667, 1
    %3669 = vsyncpa [#allocation7], 1
    %s3670 = scalar_lea.sflag [#allocation7], 1
    %3671 = vsyncpa %s3670, 1
    %3672 = vsyncpa [#allocation5], 1
    %s3673 = scalar_lea.sflag [#allocation5], 1
    %3674 = vsyncpa %s3673, 1
    %3675 = vsyncpa [#allocation10], 1
    %s3676 = scalar_lea.sflag [#allocation10], 1
    %3677 = vsyncpa %s3676, 1

</llo_original>
